<compile_context>
chip_gen: v7x
topology: tpu7x:2x2x1
jax: 0.10.0
libtpu: 0.0.40
codegen_flags: <defaults>
</compile_context>

<pallas_src>
import functools

import jax
import jax.numpy as jnp
from jax.experimental import pallas as pl
from jax.experimental.pallas import tpu as pltpu

# Explicit scoped-VMEM cap: > 32 MiB default, < v7x 64 MiB physical, << v5e/v6e 128 MiB.
VMEM_LIMIT = 48 * 1024 * 1024


# ----------------------------------------------------------------------------------
# tiling helpers (alignment-aware; pad M up instead of searching divisors)
# ----------------------------------------------------------------------------------
def _round_up(x, m):
    return ((x + m - 1) // m) * m


def _row_tile(m, target=512, align=128):
    """MXU-row-aligned (multiple of 128) tile and padded row count."""
    if m <= target:
        t = _round_up(m, align)
        return t, t
    t = max(align, (target // align) * align)
    return t, _round_up(m, t)


def _divisor_tile(n, target=1024, mult=8):
    """Largest divisor of n <= target that is sublane-aligned (GAP path: no row padding)."""
    for t in range(min(n, target), 0, -1):
        if n % t == 0 and (t % mult == 0 or t == n):
            return t
    return n
    # TODO(synk): masked GAP accumulation for HW values without an 8-aligned divisor.


# ----------------------------------------------------------------------------------
# Pallas kernels
# ----------------------------------------------------------------------------------
def _mm_bn_act_kernel(x_ref, w_ref, scale_ref, bias_ref, o_ref, *, act):
    """Tiled matmul (stem conv-as-matmul / expand 1x1) + folded-BN affine + activation."""
    y = jnp.dot(x_ref[...], w_ref[...], preferred_element_type=jnp.float32)
    y = y * scale_ref[...] + bias_ref[...]
    if act == "swish":
        y = y * jax.nn.sigmoid(y)
    elif act == "relu":
        y = jnp.maximum(y, 0.0)
    o_ref[...] = y.astype(o_ref.dtype)


def _dw_bn_swish_gap_kernel(xp_ref, w_ref, scale_ref, bias_ref, o_ref, sum_ref, *, oh, ow):
    """Depthwise 3x3 on the resident (zero-padded) plane: 9 shifted slices, no im2col.

    Also emits the SE global-average-pool SUM as a second output (one HBM pass saved).
    """
    xp = xp_ref[0].astype(jnp.float32)                     # (oh+2, ow+2, C)
    c = xp.shape[-1]
    acc = jnp.zeros((oh, ow, c), jnp.float32)
    for t in range(9):                                     # unrolled taps on resident tile
        di, dj = t // 3, t % 3
        acc = acc + xp[di:di + oh, dj:dj + ow, :] * w_ref[t]
    y = acc * scale_ref[...] + bias_ref[...]
    y = y * jax.nn.sigmoid(y)                              # swish
    o_ref[...] = y[None].astype(o_ref.dtype)               # (1, oh, ow, C) bf16
    sum_ref[...] = jnp.sum(y, axis=(0, 1), keepdims=True)  # (1, 1, C) f32 GAP sum


def _se_proj_head_fc_kernel(x_ref, dwsum_ref, sw1_ref, sb1_ref, sw2_ref, sb2_ref,
                            wph_ref, bph_ref, f1w_ref, f1b_ref, f2w_ref, f2b_ref,
                            o_ref, gate_ref, acc_ref, *, inv_hw):
    """Fused: SE MLP -> bf16 channel gate -> (proj+head folded) matmul + swish -> GAP -> FC head.

    grid = (N, HW_tiles); the full (HW, C) activation is read once and nothing but the
    final (1, padded_classes) logits row is written back to HBM.
    """
    j = pl.program_id(1)

    @pl.when(j == 0)
    def _():
        pooled = dwsum_ref[0] * inv_hw                                   # (1, C) GAP mean
        s = jnp.dot(pooled, sw1_ref[...], preferred_element_type=jnp.float32) + sb1_ref[...]
        s = s * jax.nn.sigmoid(s)                                        # SE reduce swish
        s = jnp.dot(s, sw2_ref[...], preferred_element_type=jnp.float32) + sb2_ref[...]
        gate_ref[...] = jax.nn.sigmoid(s)                                # (1, C) channel gate
        acc_ref[...] = jnp.zeros_like(acc_ref)

    x = x_ref[0] * gate_ref[...].astype(jnp.bfloat16)                    # bf16 gating (no f32 tile)
    z = jnp.dot(x, wph_ref[...], preferred_element_type=jnp.float32) + bph_ref[...]
    z = z * jax.nn.sigmoid(z)                                            # head swish
    acc_ref[...] += jnp.sum(z, axis=0, keepdims=True)                    # GAP accumulation

    @pl.when(j == pl.num_programs(1) - 1)
    def _():
        pooled = (acc_ref[...] * inv_hw).astype(jnp.bfloat16)            # (1, feat_c)
        h = jnp.dot(pooled, f1w_ref[...],
                    preferred_element_type=jnp.float32) + f1b_ref[...]
        h = jnp.maximum(h, 0.0)                                          # ReLU
        # TODO(synk): nn.Dropout(p=0.35) is identity at inference; training RNG masking omitted.
        y = jnp.dot(h.astype(jnp.bfloat16), f2w_ref[...],
                    preferred_element_type=jnp.float32) + f2b_ref[...]
        o_ref[...] = y[None]                                             # (1, 1, padded_classes)


# ----------------------------------------------------------------------------------
# pallas_call wrappers
# ----------------------------------------------------------------------------------
def matmul_bn_act(x, w, scale, bias, act, out_dtype=jnp.bfloat16, target=512):
    """x: (M, K) bf16; w: (K, Nout) bf16; folded-BN affine + activation; rows padded to tile."""
    assert act in ("swish", "relu", "none")
    M, K = x.shape
    Nout = w.shape[1]
    tile_m, m_pad = _row_tile(M, target)
    if m_pad != M:
        x = jnp.pad(x, ((0, m_pad - M), (0, 0)))
    cost = pl.CostEstimate(
        flops=2 * m_pad * K * Nout,
        transcendentals=m_pad * Nout if act == "swish" else 0,
        bytes_accessed=int(m_pad * K * 2 + K * Nout * 2 + m_pad * Nout * 2))
    out = pl.pallas_call(
        functools.partial(_mm_bn_act_kernel, act=act),
        out_shape=jax.ShapeDtypeStruct((m_pad, Nout), out_dtype),
        grid=(m_pad // tile_m,),
        in_specs=[pl.BlockSpec((tile_m, K), lambda i: (i, 0)),
                  pl.BlockSpec((K, Nout), lambda i: (0, 0)),
                  pl.BlockSpec((1, Nout), lambda i: (0, 0)),
                  pl.BlockSpec((1, Nout), lambda i: (0, 0))],
        out_specs=pl.BlockSpec((tile_m, Nout), lambda i: (i, 0)),
        compiler_params=pltpu.CompilerParams(
            dimension_semantics=("parallel",), vmem_limit_bytes=VMEM_LIMIT),
        cost_estimate=cost,
    )(x, w, scale.reshape(1, Nout), bias.reshape(1, Nout))
    return out[:M] if m_pad != M else out


def dwconv_bn_swish_gap(h_nhwc, w, scale, bias):
    """h_nhwc: (N, oh, ow, C) bf16.  Returns (N, oh, ow, C) bf16 and (N, 1, C) f32 GAP sum."""
    N, oh, ow, C = h_nhwc.shape
    hp = jnp.pad(h_nhwc, ((0, 0), (1, 1), (1, 1), (0, 0)))     # halo pad (zero-pad conv)
    # TODO(synk): for large spatial planes, switch to row-band halo tiles via manual
    # make_async_copy instead of keeping the whole padded plane resident per sample.
    return pl.pallas_call(
        functools.partial(_dw_bn_swish_gap_kernel, oh=oh, ow=ow),
        out_shape=(jax.ShapeDtypeStruct((N, oh, ow, C), jnp.bfloat16),
                   jax.ShapeDtypeStruct((N, 1, C), jnp.float32)),
        grid=(N,),
        in_specs=[pl.BlockSpec((1, oh + 2, ow + 2, C), lambda n: (n, 0, 0, 0)),
                  pl.BlockSpec((9, 1, C), lambda n: (0, 0, 0)),
                  pl.BlockSpec((1, C), lambda n: (0, 0)),
                  pl.BlockSpec((1, C), lambda n: (0, 0))],
        out_specs=(pl.BlockSpec((1, oh, ow, C), lambda n: (n, 0, 0, 0)),
                   pl.BlockSpec((1, 1, C), lambda n: (n, 0, 0))),
        compiler_params=pltpu.CompilerParams(
            dimension_semantics=("parallel",), vmem_limit_bytes=VMEM_LIMIT),
    )(hp, w.reshape(9, 1, C), scale.reshape(1, C), bias.reshape(1, C))


def se_proj_head_fc(x, gap_sum, sw1, sb1, sw2, sb2, w_ph, b_ph, f1w, f1b, f2w, f2b):
    """x: (N, HW, C) bf16; gap_sum: (N, 1, C) f32 -> logits (N, 1, padded_classes) f32."""
    N, HW, C = x.shape
    Cse = sw1.shape[1]
    Fc = w_ph.shape[1]
    H = f1w.shape[1]
    NCp = f2w.shape[1]
    tile_hw = _divisor_tile(HW)
    cost = pl.CostEstimate(
        flops=2 * N * HW * C * Fc + 2 * N * (C * Cse + Cse * C + Fc * H + H * NCp),
        transcendentals=N * HW * Fc,
        bytes_accessed=int(x.size * 2 + (C * Fc + Fc * H + H * NCp) * 2 + N * NCp * 4))
    return pl.pallas_call(
        functools.partial(_se_proj_head_fc_kernel, inv_hw=1.0 / HW),
        out_shape=jax.ShapeDtypeStruct((N, 1, NCp), jnp.float32),
        grid=(N, HW // tile_hw),
        in_specs=[pl.BlockSpec((1, tile_hw, C), lambda n, j: (n, j, 0)),
                  pl.BlockSpec((1, 1, C), lambda n, j: (n, 0, 0)),
                  pl.BlockSpec((C, Cse), lambda n, j: (0, 0)),
                  pl.BlockSpec((1, Cse), lambda n, j: (0, 0)),
                  pl.BlockSpec((Cse, C), lambda n, j: (0, 0)),
                  pl.BlockSpec((1, C), lambda n, j: (0, 0)),
                  pl.BlockSpec((C, Fc), lambda n, j: (0, 0)),
                  pl.BlockSpec((1, Fc), lambda n, j: (0, 0)),
                  pl.BlockSpec((Fc, H), lambda n, j: (0, 0)),
                  pl.BlockSpec((1, H), lambda n, j: (0, 0)),
                  pl.BlockSpec((H, NCp), lambda n, j: (0, 0)),
                  pl.BlockSpec((1, NCp), lambda n, j: (0, 0))],
        out_specs=pl.BlockSpec((1, 1, NCp), lambda n, j: (n, 0, 0)),
        scratch_shapes=[pltpu.VMEM((1, C), jnp.float32),      # SE gate (persists over j)
                        pltpu.VMEM((1, Fc), jnp.float32)],    # GAP accumulator
        compiler_params=pltpu.CompilerParams(
            dimension_semantics=("parallel", "arbitrary"), vmem_limit_bytes=VMEM_LIMIT),
        cost_estimate=cost,
    )(x, gap_sum, sw1, sb1.reshape(1, Cse), sw2, sb2.reshape(1, C),
      w_ph, b_ph.reshape(1, Fc), f1w, f1b.reshape(1, H), f2w, f2b.reshape(1, NCp))


# ----------------------------------------------------------------------------------
# Glue: channel-concat im2col for the stem only (K becomes the contraction dim)
# ----------------------------------------------------------------------------------
def im2col_concat(x, k, stride, pad):
    xp = jnp.pad(x, ((0, 0), (pad, pad), (pad, pad), (0, 0)))
    _, H, W, _ = xp.shape
    oh = (H - k) // stride + 1
    ow = (W - k) // stride + 1
    cols = [xp[:, i:i + stride * oh:stride, j:j + stride * ow:stride, :]
            for i in range(k) for j in range(k)]
    return jnp.concatenate(cols, axis=-1), oh, ow          # (N, oh, ow, k*k*C)


# ----------------------------------------------------------------------------------
# Deterministic parameter construction (synthetic; BN folded into scale/bias).
# Channel dims are lane-dense (multiples of 128); classifier output padded to 128 lanes.
# ----------------------------------------------------------------------------------
def init_params(key, cin=3, stem_c=128, expand_c=128, se_c=8, proj_c=128,
                feat_c=128, hidden=512, num_classes=8, nc_pad=128):
    ks = jax.random.split(key, 16)
    bf = jnp.bfloat16

    def w(k, shape, scale=0.1, dtype=jnp.float32):
        return (scale * jax.random.normal(k, shape, jnp.float32)).astype(dtype)

    fc2_core = w(ks[15], (hidden, num_classes))
    fc2_w = jnp.zeros((hidden, nc_pad), jnp.float32).at[:, :num_classes].set(fc2_core)

    return dict(
        stem_w=w(ks[0], (9, cin, stem_c), dtype=bf),
        stem_scale=jnp.ones((stem_c,), jnp.float32),
        stem_bias=w(ks[1], (stem_c,), 0.01),
        exp_w=w(ks[2], (stem_c, expand_c), dtype=bf),
        exp_scale=jnp.ones((expand_c,), jnp.float32),
        exp_bias=w(ks[3], (expand_c,), 0.01),
        dw_w=w(ks[4], (9, expand_c)),                       # f32 depthwise taps (VPU math)
        dw_scale=jnp.ones((expand_c,), jnp.float32),
        dw_bias=w(ks[5], (expand_c,), 0.01),
        se_w1=w(ks[6], (expand_c, se_c)),
        se_b1=w(ks[7], (se_c,), 0.01),
        se_w2=w(ks[8], (se_c, expand_c)),
        se_b2=w(ks[9], (expand_c,), 0.01),
        proj_w=w(ks[10], (expand_c, proj_c)),               # f32: folded with head conv below
        proj_scale=jnp.ones((proj_c,), jnp.float32),
        proj_bias=w(ks[11], (proj_c,), 0.01),
        headconv_w=w(ks[12], (proj_c, feat_c)),
        headconv_scale=jnp.ones((feat_c,), jnp.float32),
        headconv_bias=w(ks[13], (feat_c,), 0.01),
        fc1_w=w(ks[14], (feat_c, hidden), dtype=bf),
        fc1_b=jnp.zeros((hidden,), jnp.float32),
        fc2_w=fc2_w.astype(bf),
        fc2_b=jnp.zeros((nc_pad,), jnp.float32),
    )


# ----------------------------------------------------------------------------------
# Forward pass
# ----------------------------------------------------------------------------------
def efficientnet_forward(x_nchw, p, num_classes):
    # NCHW (PyTorch) -> NHWC (kernel layout), bf16 activations
    x = jnp.transpose(x_nchw, (0, 2, 3, 1)).astype(jnp.bfloat16)
    N = x.shape[0]

    # Stem: conv 3x3 stride 2 pad 1 + BN + swish as ONE dense matmul (K = 9*cin, padded).
    patches, oh, ow = im2col_concat(x, 3, 2, 1)             # (N, oh, ow, 9*cin)
    M = N * oh * ow
    K = patches.shape[-1]
    Kp = _round_up(K, 32)                                   # dense contraction dim
    xs = jnp.pad(patches.reshape(M, K), ((0, 0), (0, Kp - K)))
    stem_w = jnp.pad(p["stem_w"].reshape(K, -1), ((0, Kp - K), (0, 0)))
    h = matmul_bn_act(xs, stem_w, p["stem_scale"], p["stem_bias"], "swish")

    # MBConv: expand 1x1 + BN + swish
    h = matmul_bn_act(h, p["exp_w"], p["exp_scale"], p["exp_bias"], "swish")
    C = h.shape[-1]

    # Depthwise 3x3 stride 1 pad 1 + BN + swish, fused with the SE global-avg-pool sum
    # (no 9x im2col; padded plane is resident and taps are shifted slices).
    h_dw, gap_sum = dwconv_bn_swish_gap(h.reshape(N, oh, ow, C),
                                        p["dw_w"], p["dw_scale"], p["dw_bias"])

    # Fold project-1x1(+BN) and head-1x1(+BN) into one matmul (no nonlinearity/residual
    # between them in this block):
    #   z = ((x @ pw) * ps + pb) @ hcw * hs + hb  ==  x @ W_ph + b_ph
    w_ph = ((p["proj_w"] * p["proj_scale"][None, :]) @ p["headconv_w"]) \
        * p["headconv_scale"][None, :]
    b_ph = (p["proj_bias"] @ p["headconv_w"]) * p["headconv_scale"] + p["headconv_bias"]

    # Fused: SE MLP (from GAP sum) -> bf16 gate -> folded proj+head matmul + swish -> GAP ->
    # Linear(F,512) + ReLU + Dropout(eval) + Linear(512, padded classes).
    logits = se_proj_head_fc(h_dw.reshape(N, oh * ow, C), gap_sum,
                             p["se_w1"], p["se_b1"], p["se_w2"], p["se_b2"],
                             w_ph.astype(jnp.bfloat16), b_ph,
                             p["fc1_w"], p["fc1_b"], p["fc2_w"], p["fc2_b"])
    return logits[:, 0, :num_classes]


# ----------------------------------------------------------------------------------
if __name__ == "__main__":
    key = jax.random.PRNGKey(0)
    k_x, k_p = jax.random.split(key)

    num_classes = 8
    x = jax.random.normal(k_x, (2, 3, 16, 16), jnp.float32)   # NCHW like PyTorch
    params = init_params(k_p, num_classes=num_classes)

    fwd = jax.jit(lambda xx, pp: efficientnet_forward(xx, pp, num_classes))
    logits = fwd(x, params)
    logits = jax.block_until_ready(logits)

    assert logits.shape == (2, num_classes), logits.shape
    assert bool(jnp.all(jnp.isfinite(logits)))
    print("KERNEL_OK")
</pallas_src>

<mosaic_0001>
module attributes {stable_mosaic.version = 11 : i64} {
  func.func @_mm_bn_act_kernel(%arg0: i32, %arg1: memref<128x128xbf16, #tpu.memory_space<vmem>>, %arg2: memref<128x128xbf16, #tpu.memory_space<vmem>>, %arg3: memref<1x128xf32, #tpu.memory_space<vmem>>, %arg4: memref<1x128xf32, #tpu.memory_space<vmem>>, %arg5: memref<128x128xbf16, #tpu.memory_space<vmem>>) attributes {dimension_semantics = [#tpu.dimension_semantics<parallel>], iteration_bounds = array<i64: 1>, scalar_prefetch = 0 : i64, scratch_operands = 0 : i64, tpu.core_type = #tpu.core_type<tc>, window_params = [{transform_indices = @transform_0, window_bounds = array<i64: 128, 128>}, {pipeline_mode = #tpu.pipeline_mode<synchronous>, transform_indices = @transform_1, window_bounds = array<i64: 128, 128>}, {pipeline_mode = #tpu.pipeline_mode<synchronous>, transform_indices = @transform_2, window_bounds = array<i64: 1, 128>}, {pipeline_mode = #tpu.pipeline_mode<synchronous>, transform_indices = @transform_3, window_bounds = array<i64: 1, 128>}, {transform_indices = @transform_4, window_bounds = array<i64: 128, 128>}]} {
    %c0 = arith.constant 0 : index
    %c0_0 = arith.constant 0 : index
    %0 = vector.load %arg1[%c0, %c0_0] : memref<128x128xbf16, #tpu.memory_space<vmem>>, vector<128x128xbf16>
    %c0_1 = arith.constant 0 : index
    %c0_2 = arith.constant 0 : index
    %1 = vector.load %arg2[%c0_1, %c0_2] : memref<128x128xbf16, #tpu.memory_space<vmem>>, vector<128x128xbf16>
    %cst = arith.constant dense<0.000000e+00> : vector<128x128xf32>
    %2 = tpu.matmul %0, %1, %cst {dimension_numbers = #tpu.dot_dimension_numbers<[1], [0], [0], [1], [0, 0, 1, 1], [], []>} : vector<128x128xbf16>, vector<128x128xbf16>, vector<128x128xf32> -> vector<128x128xf32>
    %c0_3 = arith.constant 0 : index
    %c0_4 = arith.constant 0 : index
    %3 = vector.load %arg3[%c0_3, %c0_4] : memref<1x128xf32, #tpu.memory_space<vmem>>, vector<1x128xf32>
    %4 = vector.broadcast %3 : vector<1x128xf32> to vector<128x128xf32>
    %5 = arith.mulf %2, %4 : vector<128x128xf32>
    %c0_5 = arith.constant 0 : index
    %c0_6 = arith.constant 0 : index
    %6 = vector.load %arg4[%c0_5, %c0_6] : memref<1x128xf32, #tpu.memory_space<vmem>>, vector<1x128xf32>
    %7 = vector.broadcast %6 : vector<1x128xf32> to vector<128x128xf32>
    %8 = arith.addf %5, %7 : vector<128x128xf32>
    %9 = arith.negf %8 : vector<128x128xf32>
    %10 = math.exp %9 : vector<128x128xf32>
    %cst_7 = arith.constant 1.000000e+00 : f32
    %11 = vector.broadcast %cst_7 : f32 to vector<128x128xf32>
    %12 = arith.addf %11, %10 : vector<128x128xf32>
    %13 = arith.divf %11, %12 : vector<128x128xf32>
    %14 = arith.mulf %8, %13 : vector<128x128xf32>
    %15 = arith.truncf %14 : vector<128x128xf32> to vector<128x128xbf16>
    %c0_8 = arith.constant 0 : index
    %c0_9 = arith.constant 0 : index
    %16 = vector.load %arg5[%c0_8, %c0_9] : memref<128x128xbf16, #tpu.memory_space<vmem>>, vector<128x128xbf16>
    tpu.vector_store %arg5[%c0_8, %c0_9], %15 {strides = array<i32>} : memref<128x128xbf16, #tpu.memory_space<vmem>>, vector<128x128xbf16>,
    return
  }
  func.func @transform_0(%arg0: i32) -> (i32, i32) {
    %c0_i32 = arith.constant 0 : i32
    %c0_i32_0 = arith.constant 0 : i32
    return %arg0, %c0_i32 : i32, i32
  }
  func.func @transform_1(%arg0: i32) -> (i32, i32) {
    %c0_i32 = arith.constant 0 : i32
    %c0_i32_0 = arith.constant 0 : i32
    %c0_i32_1 = arith.constant 0 : i32
    return %c0_i32, %c0_i32_0 : i32, i32
  }
  func.func @transform_2(%arg0: i32) -> (i32, i32) {
    %c0_i32 = arith.constant 0 : i32
    %c0_i32_0 = arith.constant 0 : i32
    %c0_i32_1 = arith.constant 0 : i32
    return %c0_i32, %c0_i32_0 : i32, i32
  }
  func.func @transform_3(%arg0: i32) -> (i32, i32) {
    %c0_i32 = arith.constant 0 : i32
    %c0_i32_0 = arith.constant 0 : i32
    %c0_i32_1 = arith.constant 0 : i32
    return %c0_i32, %c0_i32_0 : i32, i32
  }
  func.func @transform_4(%arg0: i32) -> (i32, i32) {
    %c0_i32 = arith.constant 0 : i32
    %c0_i32_0 = arith.constant 0 : i32
    return %arg0, %c0_i32 : i32, i32
  }
}

module attributes {stable_mosaic.version = 11 : i64} {
  func.func @_mm_bn_act_kernel(%arg0: i32, %arg1: memref<128x32xbf16, #tpu.memory_space<vmem>>, %arg2: memref<32x128xbf16, #tpu.memory_space<vmem>>, %arg3: memref<1x128xf32, #tpu.memory_space<vmem>>, %arg4: memref<1x128xf32, #tpu.memory_space<vmem>>, %arg5: memref<128x128xbf16, #tpu.memory_space<vmem>>) attributes {dimension_semantics = [#tpu.dimension_semantics<parallel>], iteration_bounds = array<i64: 1>, scalar_prefetch = 0 : i64, scratch_operands = 0 : i64, tpu.core_type = #tpu.core_type<tc>, window_params = [{transform_indices = @transform_0, window_bounds = array<i64: 128, 32>}, {pipeline_mode = #tpu.pipeline_mode<synchronous>, transform_indices = @transform_1, window_bounds = array<i64: 32, 128>}, {pipeline_mode = #tpu.pipeline_mode<synchronous>, transform_indices = @transform_2, window_bounds = array<i64: 1, 128>}, {pipeline_mode = #tpu.pipeline_mode<synchronous>, transform_indices = @transform_3, window_bounds = array<i64: 1, 128>}, {transform_indices = @transform_4, window_bounds = array<i64: 128, 128>}]} {
    %c0 = arith.constant 0 : index
    %c0_0 = arith.constant 0 : index
    %0 = vector.load %arg1[%c0, %c0_0] : memref<128x32xbf16, #tpu.memory_space<vmem>>, vector<128x32xbf16>
    %c0_1 = arith.constant 0 : index
    %c0_2 = arith.constant 0 : index
    %1 = vector.load %arg2[%c0_1, %c0_2] : memref<32x128xbf16, #tpu.memory_space<vmem>>, vector<32x128xbf16>
    %cst = arith.constant dense<0.000000e+00> : vector<128x128xf32>
    %2 = tpu.matmul %0, %1, %cst {dimension_numbers = #tpu.dot_dimension_numbers<[1], [0], [0], [1], [0, 0, 1, 1], [], []>} : vector<128x32xbf16>, vector<32x128xbf16>, vector<128x128xf32> -> vector<128x128xf32>
    %c0_3 = arith.constant 0 : index
    %c0_4 = arith.constant 0 : index
    %3 = vector.load %arg3[%c0_3, %c0_4] : memref<1x128xf32, #tpu.memory_space<vmem>>, vector<1x128xf32>
    %4 = vector.broadcast %3 : vector<1x128xf32> to vector<128x128xf32>
    %5 = arith.mulf %2, %4 : vector<128x128xf32>
    %c0_5 = arith.constant 0 : index
    %c0_6 = arith.constant 0 : index
    %6 = vector.load %arg4[%c0_5, %c0_6] : memref<1x128xf32, #tpu.memory_space<vmem>>, vector<1x128xf32>
    %7 = vector.broadcast %6 : vector<1x128xf32> to vector<128x128xf32>
    %8 = arith.addf %5, %7 : vector<128x128xf32>
    %9 = arith.negf %8 : vector<128x128xf32>
    %10 = math.exp %9 : vector<128x128xf32>
    %cst_7 = arith.constant 1.000000e+00 : f32
    %11 = vector.broadcast %cst_7 : f32 to vector<128x128xf32>
    %12 = arith.addf %11, %10 : vector<128x128xf32>
    %13 = arith.divf %11, %12 : vector<128x128xf32>
    %14 = arith.mulf %8, %13 : vector<128x128xf32>
    %15 = arith.truncf %14 : vector<128x128xf32> to vector<128x128xbf16>
    %c0_8 = arith.constant 0 : index
    %c0_9 = arith.constant 0 : index
    %16 = vector.load %arg5[%c0_8, %c0_9] : memref<128x128xbf16, #tpu.memory_space<vmem>>, vector<128x128xbf16>
    tpu.vector_store %arg5[%c0_8, %c0_9], %15 {strides = array<i32>} : memref<128x128xbf16, #tpu.memory_space<vmem>>, vector<128x128xbf16>,
    return
  }
  func.func @transform_0(%arg0: i32) -> (i32, i32) {
    %c0_i32 = arith.constant 0 : i32
    %c0_i32_0 = arith.constant 0 : i32
    return %arg0, %c0_i32 : i32, i32
  }
  func.func @transform_1(%arg0: i32) -> (i32, i32) {
    %c0_i32 = arith.constant 0 : i32
    %c0_i32_0 = arith.constant 0 : i32
    %c0_i32_1 = arith.constant 0 : i32
    return %c0_i32, %c0_i32_0 : i32, i32
  }
  func.func @transform_2(%arg0: i32) -> (i32, i32) {
    %c0_i32 = arith.constant 0 : i32
    %c0_i32_0 = arith.constant 0 : i32
    %c0_i32_1 = arith.constant 0 : i32
    return %c0_i32, %c0_i32_0 : i32, i32
  }
  func.func @transform_3(%arg0: i32) -> (i32, i32) {
    %c0_i32 = arith.constant 0 : i32
    %c0_i32_0 = arith.constant 0 : i32
    %c0_i32_1 = arith.constant 0 : i32
    return %c0_i32, %c0_i32_0 : i32, i32
  }
  func.func @transform_4(%arg0: i32) -> (i32, i32) {
    %c0_i32 = arith.constant 0 : i32
    %c0_i32_0 = arith.constant 0 : i32
    return %arg0, %c0_i32 : i32, i32
  }
}

module attributes {stable_mosaic.version = 11 : i64} {
  func.func @_dw_bn_swish_gap_kernel(%arg0: i32, %arg1: memref<1x10x10x128xbf16, #tpu.memory_space<vmem>>, %arg2: memref<9x1x128xf32, #tpu.memory_space<vmem>>, %arg3: memref<1x128xf32, #tpu.memory_space<vmem>>, %arg4: memref<1x128xf32, #tpu.memory_space<vmem>>, %arg5: memref<1x8x8x128xbf16, #tpu.memory_space<vmem>>, %arg6: memref<1x1x128xf32, #tpu.memory_space<vmem>>) attributes {dimension_semantics = [#tpu.dimension_semantics<parallel>], iteration_bounds = array<i64: 2>, scalar_prefetch = 0 : i64, scratch_operands = 0 : i64, tpu.core_type = #tpu.core_type<tc>, window_params = [{transform_indices = @transform_0, window_bounds = array<i64: 1, 10, 10, 128>}, {pipeline_mode = #tpu.pipeline_mode<synchronous>, transform_indices = @transform_1, window_bounds = array<i64: 9, 1, 128>}, {pipeline_mode = #tpu.pipeline_mode<synchronous>, transform_indices = @transform_2, window_bounds = array<i64: 1, 128>}, {pipeline_mode = #tpu.pipeline_mode<synchronous>, transform_indices = @transform_3, window_bounds = array<i64: 1, 128>}, {transform_indices = @transform_4, window_bounds = array<i64: 1, 8, 8, 128>}, {transform_indices = @transform_5, window_bounds = array<i64: 1, 1, 128>}]} {
    %c0 = arith.constant 0 : index
    %c0_0 = arith.constant 0 : index
    %c0_1 = arith.constant 0 : index
    %c0_2 = arith.constant 0 : index
    %0 = vector.load %arg1[%c0, %c0_0, %c0_1, %c0_2] : memref<1x10x10x128xbf16, #tpu.memory_space<vmem>>, vector<1x10x10x128xbf16>
    %1 = vector.shape_cast %0 : vector<1x10x10x128xbf16> to vector<10x10x128xbf16>
    %2 = arith.extf %1 : vector<10x10x128xbf16> to vector<10x10x128xf32>
    %cst = arith.constant 0.000000e+00 : f32
    %3 = vector.broadcast %cst : f32 to vector<8x8x128xf32>
    %4 = vector.extract_strided_slice %2 {offsets = [0, 0, 0], sizes = [8, 8, 128], strides = [1, 1, 1]} : vector<10x10x128xf32> to vector<8x8x128xf32>
    %c0_3 = arith.constant 0 : index
    %c0_4 = arith.constant 0 : index
    %c0_5 = arith.constant 0 : index
    %5 = vector.load %arg2[%c0_3, %c0_4, %c0_5] : memref<9x1x128xf32, #tpu.memory_space<vmem>>, vector<1x1x128xf32>
    %6 = vector.shape_cast %5 : vector<1x1x128xf32> to vector<1x128xf32>
    %7 = vector.shape_cast %6 : vector<1x128xf32> to vector<1x1x128xf32>
    %8 = vector.broadcast %7 : vector<1x1x128xf32> to vector<8x8x128xf32>
    %9 = arith.mulf %4, %8 : vector<8x8x128xf32>
    %10 = arith.addf %3, %9 : vector<8x8x128xf32>
    %11 = vector.extract_strided_slice %2 {offsets = [0, 1, 0], sizes = [8, 8, 128], strides = [1, 1, 1]} : vector<10x10x128xf32> to vector<8x8x128xf32>
    %c1 = arith.constant 1 : index
    %c0_6 = arith.constant 0 : index
    %c0_7 = arith.constant 0 : index
    %12 = vector.load %arg2[%c1, %c0_6, %c0_7] : memref<9x1x128xf32, #tpu.memory_space<vmem>>, vector<1x1x128xf32>
    %13 = vector.shape_cast %12 : vector<1x1x128xf32> to vector<1x128xf32>
    %14 = vector.shape_cast %13 : vector<1x128xf32> to vector<1x1x128xf32>
    %15 = vector.broadcast %14 : vector<1x1x128xf32> to vector<8x8x128xf32>
    %16 = arith.mulf %11, %15 : vector<8x8x128xf32>
    %17 = arith.addf %10, %16 : vector<8x8x128xf32>
    %18 = vector.extract_strided_slice %2 {offsets = [0, 2, 0], sizes = [8, 8, 128], strides = [1, 1, 1]} : vector<10x10x128xf32> to vector<8x8x128xf32>
    %c2 = arith.constant 2 : index
    %c0_8 = arith.constant 0 : index
    %c0_9 = arith.constant 0 : index
    %19 = vector.load %arg2[%c2, %c0_8, %c0_9] : memref<9x1x128xf32, #tpu.memory_space<vmem>>, vector<1x1x128xf32>
    %20 = vector.shape_cast %19 : vector<1x1x128xf32> to vector<1x128xf32>
    %21 = vector.shape_cast %20 : vector<1x128xf32> to vector<1x1x128xf32>
    %22 = vector.broadcast %21 : vector<1x1x128xf32> to vector<8x8x128xf32>
    %23 = arith.mulf %18, %22 : vector<8x8x128xf32>
    %24 = arith.addf %17, %23 : vector<8x8x128xf32>
    %25 = vector.extract_strided_slice %2 {offsets = [1, 0, 0], sizes = [8, 8, 128], strides = [1, 1, 1]} : vector<10x10x128xf32> to vector<8x8x128xf32>
    %c3 = arith.constant 3 : index
    %c0_10 = arith.constant 0 : index
    %c0_11 = arith.constant 0 : index
    %26 = vector.load %arg2[%c3, %c0_10, %c0_11] : memref<9x1x128xf32, #tpu.memory_space<vmem>>, vector<1x1x128xf32>
    %27 = vector.shape_cast %26 : vector<1x1x128xf32> to vector<1x128xf32>
    %28 = vector.shape_cast %27 : vector<1x128xf32> to vector<1x1x128xf32>
    %29 = vector.broadcast %28 : vector<1x1x128xf32> to vector<8x8x128xf32>
    %30 = arith.mulf %25, %29 : vector<8x8x128xf32>
    %31 = arith.addf %24, %30 : vector<8x8x128xf32>
    %32 = vector.extract_strided_slice %2 {offsets = [1, 1, 0], sizes = [8, 8, 128], strides = [1, 1, 1]} : vector<10x10x128xf32> to vector<8x8x128xf32>
    %c4 = arith.constant 4 : index
    %c0_12 = arith.constant 0 : index
    %c0_13 = arith.constant 0 : index
    %33 = vector.load %arg2[%c4, %c0_12, %c0_13] : memref<9x1x128xf32, #tpu.memory_space<vmem>>, vector<1x1x128xf32>
    %34 = vector.shape_cast %33 : vector<1x1x128xf32> to vector<1x128xf32>
    %35 = vector.shape_cast %34 : vector<1x128xf32> to vector<1x1x128xf32>
    %36 = vector.broadcast %35 : vector<1x1x128xf32> to vector<8x8x128xf32>
    %37 = arith.mulf %32, %36 : vector<8x8x128xf32>
    %38 = arith.addf %31, %37 : vector<8x8x128xf32>
    %39 = vector.extract_strided_slice %2 {offsets = [1, 2, 0], sizes = [8, 8, 128], strides = [1, 1, 1]} : vector<10x10x128xf32> to vector<8x8x128xf32>
    %c5 = arith.constant 5 : index
    %c0_14 = arith.constant 0 : index
    %c0_15 = arith.constant 0 : index
    %40 = vector.load %arg2[%c5, %c0_14, %c0_15] : memref<9x1x128xf32, #tpu.memory_space<vmem>>, vector<1x1x128xf32>
    %41 = vector.shape_cast %40 : vector<1x1x128xf32> to vector<1x128xf32>
    %42 = vector.shape_cast %41 : vector<1x128xf32> to vector<1x1x128xf32>
    %43 = vector.broadcast %42 : vector<1x1x128xf32> to vector<8x8x128xf32>
    %44 = arith.mulf %39, %43 : vector<8x8x128xf32>
    %45 = arith.addf %38, %44 : vector<8x8x128xf32>
    %46 = vector.extract_strided_slice %2 {offsets = [2, 0, 0], sizes = [8, 8, 128], strides = [1, 1, 1]} : vector<10x10x128xf32> to vector<8x8x128xf32>
    %c6 = arith.constant 6 : index
    %c0_16 = arith.constant 0 : index
    %c0_17 = arith.constant 0 : index
    %47 = vector.load %arg2[%c6, %c0_16, %c0_17] : memref<9x1x128xf32, #tpu.memory_space<vmem>>, vector<1x1x128xf32>
    %48 = vector.shape_cast %47 : vector<1x1x128xf32> to vector<1x128xf32>
    %49 = vector.shape_cast %48 : vector<1x128xf32> to vector<1x1x128xf32>
    %50 = vector.broadcast %49 : vector<1x1x128xf32> to vector<8x8x128xf32>
    %51 = arith.mulf %46, %50 : vector<8x8x128xf32>
    %52 = arith.addf %45, %51 : vector<8x8x128xf32>
    %53 = vector.extract_strided_slice %2 {offsets = [2, 1, 0], sizes = [8, 8, 128], strides = [1, 1, 1]} : vector<10x10x128xf32> to vector<8x8x128xf32>
    %c7 = arith.constant 7 : index
    %c0_18 = arith.constant 0 : index
    %c0_19 = arith.constant 0 : index
    %54 = vector.load %arg2[%c7, %c0_18, %c0_19] : memref<9x1x128xf32, #tpu.memory_space<vmem>>, vector<1x1x128xf32>
    %55 = vector.shape_cast %54 : vector<1x1x128xf32> to vector<1x128xf32>
    %56 = vector.shape_cast %55 : vector<1x128xf32> to vector<1x1x128xf32>
    %57 = vector.broadcast %56 : vector<1x1x128xf32> to vector<8x8x128xf32>
    %58 = arith.mulf %53, %57 : vector<8x8x128xf32>
    %59 = arith.addf %52, %58 : vector<8x8x128xf32>
    %60 = vector.extract_strided_slice %2 {offsets = [2, 2, 0], sizes = [8, 8, 128], strides = [1, 1, 1]} : vector<10x10x128xf32> to vector<8x8x128xf32>
    %c8 = arith.constant 8 : index
    %c0_20 = arith.constant 0 : index
    %c0_21 = arith.constant 0 : index
    %61 = vector.load %arg2[%c8, %c0_20, %c0_21] : memref<9x1x128xf32, #tpu.memory_space<vmem>>, vector<1x1x128xf32>
    %62 = vector.shape_cast %61 : vector<1x1x128xf32> to vector<1x128xf32>
    %63 = vector.shape_cast %62 : vector<1x128xf32> to vector<1x1x128xf32>
    %64 = vector.broadcast %63 : vector<1x1x128xf32> to vector<8x8x128xf32>
    %65 = arith.mulf %60, %64 : vector<8x8x128xf32>
    %66 = arith.addf %59, %65 : vector<8x8x128xf32>
    %c0_22 = arith.constant 0 : index
    %c0_23 = arith.constant 0 : index
    %67 = vector.load %arg3[%c0_22, %c0_23] : memref<1x128xf32, #tpu.memory_space<vmem>>, vector<1x128xf32>
    %68 = vector.shape_cast %67 : vector<1x128xf32> to vector<1x1x128xf32>
    %69 = vector.broadcast %68 : vector<1x1x128xf32> to vector<8x8x128xf32>
    %70 = arith.mulf %66, %69 : vector<8x8x128xf32>
    %c0_24 = arith.constant 0 : index
    %c0_25 = arith.constant 0 : index
    %71 = vector.load %arg4[%c0_24, %c0_25] : memref<1x128xf32, #tpu.memory_space<vmem>>, vector<1x128xf32>
    %72 = vector.shape_cast %71 : vector<1x128xf32> to vector<1x1x128xf32>
    %73 = vector.broadcast %72 : vector<1x1x128xf32> to vector<8x8x128xf32>
    %74 = arith.addf %70, %73 : vector<8x8x128xf32>
    %75 = arith.negf %74 : vector<8x8x128xf32>
    %76 = math.exp %75 : vector<8x8x128xf32>
    %cst_26 = arith.constant 1.000000e+00 : f32
    %77 = vector.broadcast %cst_26 : f32 to vector<8x8x128xf32>
    %78 = arith.addf %77, %76 : vector<8x8x128xf32>
    %79 = arith.divf %77, %78 : vector<8x8x128xf32>
    %80 = arith.mulf %74, %79 : vector<8x8x128xf32>
    %81 = vector.shape_cast %80 : vector<8x8x128xf32> to vector<1x8x8x128xf32>
    %82 = arith.truncf %81 : vector<1x8x8x128xf32> to vector<1x8x8x128xbf16>
    %c0_27 = arith.constant 0 : index
    %c0_28 = arith.constant 0 : index
    %c0_29 = arith.constant 0 : index
    %c0_30 = arith.constant 0 : index
    %83 = vector.load %arg5[%c0_27, %c0_28, %c0_29, %c0_30] : memref<1x8x8x128xbf16, #tpu.memory_space<vmem>>, vector<1x8x8x128xbf16>
    tpu.vector_store %arg5[%c0_27, %c0_28, %c0_29, %c0_30], %82 {strides = array<i32>} : memref<1x8x8x128xbf16, #tpu.memory_space<vmem>>, vector<1x8x8x128xbf16>,
    %cst_31 = arith.constant dense<0.000000e+00> : vector<128xf32>
    %84 = vector.multi_reduction <add>, %80, %cst_31 [0, 1] : vector<8x8x128xf32> to vector<128xf32>
    %85 = vector.shape_cast %84 : vector<128xf32> to vector<1x1x128xf32>
    %c0_32 = arith.constant 0 : index
    %c0_33 = arith.constant 0 : index
    %c0_34 = arith.constant 0 : index
    %86 = vector.load %arg6[%c0_32, %c0_33, %c0_34] : memref<1x1x128xf32, #tpu.memory_space<vmem>>, vector<1x1x128xf32>
    tpu.vector_store %arg6[%c0_32, %c0_33, %c0_34], %85 {strides = array<i32>} : memref<1x1x128xf32, #tpu.memory_space<vmem>>, vector<1x1x128xf32>,
    return
  }
  func.func @transform_0(%arg0: i32) -> (i32, i32, i32, i32) {
    %c0_i32 = arith.constant 0 : i32
    %c0_i32_0 = arith.constant 0 : i32
    %c0_i32_1 = arith.constant 0 : i32
    %c0_i32_2 = arith.constant 0 : i32
    return %arg0, %c0_i32, %c0_i32_0, %c0_i32_1 : i32, i32, i32, i32
  }
  func.func @transform_1(%arg0: i32) -> (i32, i32, i32) {
    %c0_i32 = arith.constant 0 : i32
    %c0_i32_0 = arith.constant 0 : i32
    %c0_i32_1 = arith.constant 0 : i32
    %c0_i32_2 = arith.constant 0 : i32
    return %c0_i32, %c0_i32_0, %c0_i32_1 : i32, i32, i32
  }
  func.func @transform_2(%arg0: i32) -> (i32, i32) {
    %c0_i32 = arith.constant 0 : i32
    %c0_i32_0 = arith.constant 0 : i32
    %c0_i32_1 = arith.constant 0 : i32
    return %c0_i32, %c0_i32_0 : i32, i32
  }
  func.func @transform_3(%arg0: i32) -> (i32, i32) {
    %c0_i32 = arith.constant 0 : i32
    %c0_i32_0 = arith.constant 0 : i32
    %c0_i32_1 = arith.constant 0 : i32
    return %c0_i32, %c0_i32_0 : i32, i32
  }
  func.func @transform_4(%arg0: i32) -> (i32, i32, i32, i32) {
    %c0_i32 = arith.constant 0 : i32
    %c0_i32_0 = arith.constant 0 : i32
    %c0_i32_1 = arith.constant 0 : i32
    %c0_i32_2 = arith.constant 0 : i32
    return %arg0, %c0_i32, %c0_i32_0, %c0_i32_1 : i32, i32, i32, i32
  }
  func.func @transform_5(%arg0: i32) -> (i32, i32, i32) {
    %c0_i32 = arith.constant 0 : i32
    %c0_i32_0 = arith.constant 0 : i32
    %c0_i32_1 = arith.constant 0 : i32
    return %arg0, %c0_i32, %c0_i32_0 : i32, i32, i32
  }
}

module attributes {stable_mosaic.version = 11 : i64} {
  func.func @_se_proj_head_fc_kernel(%arg0: i32, %arg1: i32, %arg2: memref<1x64x128xbf16, #tpu.memory_space<vmem>>, %arg3: memref<1x1x128xf32, #tpu.memory_space<vmem>>, %arg4: memref<128x8xf32, #tpu.memory_space<vmem>>, %arg5: memref<1x8xf32, #tpu.memory_space<vmem>>, %arg6: memref<8x128xf32, #tpu.memory_space<vmem>>, %arg7: memref<1x128xf32, #tpu.memory_space<vmem>>, %arg8: memref<128x128xbf16, #tpu.memory_space<vmem>>, %arg9: memref<1x128xf32, #tpu.memory_space<vmem>>, %arg10: memref<128x512xbf16, #tpu.memory_space<vmem>>, %arg11: memref<1x512xf32, #tpu.memory_space<vmem>>, %arg12: memref<512x128xbf16, #tpu.memory_space<vmem>>, %arg13: memref<1x128xf32, #tpu.memory_space<vmem>>, %arg14: memref<1x1x128xf32, #tpu.memory_space<vmem>>, %arg15: memref<1x128xf32, #tpu.memory_space<vmem>>, %arg16: memref<1x128xf32, #tpu.memory_space<vmem>>) attributes {dimension_semantics = [#tpu.dimension_semantics<parallel>, #tpu.dimension_semantics<arbitrary>], iteration_bounds = array<i64: 2, 1>, scalar_prefetch = 0 : i64, scratch_operands = 2 : i64, tpu.core_type = #tpu.core_type<tc>, window_params = [{transform_indices = @transform_0, window_bounds = array<i64: 1, 64, 128>}, {transform_indices = @transform_1, window_bounds = array<i64: 1, 1, 128>}, {pipeline_mode = #tpu.pipeline_mode<synchronous>, transform_indices = @transform_2, window_bounds = array<i64: 128, 8>}, {pipeline_mode = #tpu.pipeline_mode<synchronous>, transform_indices = @transform_3, window_bounds = array<i64: 1, 8>}, {pipeline_mode = #tpu.pipeline_mode<synchronous>, transform_indices = @transform_4, window_bounds = array<i64: 8, 128>}, {pipeline_mode = #tpu.pipeline_mode<synchronous>, transform_indices = @transform_5, window_bounds = array<i64: 1, 128>}, {pipeline_mode = #tpu.pipeline_mode<synchronous>, transform_indices = @transform_6, window_bounds = array<i64: 128, 128>}, {pipeline_mode = #tpu.pipeline_mode<synchronous>, transform_indices = @transform_7, window_bounds = array<i64: 1, 128>}, {pipeline_mode = #tpu.pipeline_mode<synchronous>, transform_indices = @transform_8, window_bounds = array<i64: 128, 512>}, {pipeline_mode = #tpu.pipeline_mode<synchronous>, transform_indices = @transform_9, window_bounds = array<i64: 1, 512>}, {pipeline_mode = #tpu.pipeline_mode<synchronous>, transform_indices = @transform_10, window_bounds = array<i64: 512, 128>}, {pipeline_mode = #tpu.pipeline_mode<synchronous>, transform_indices = @transform_11, window_bounds = array<i64: 1, 128>}, {transform_indices = @transform_12, window_bounds = array<i64: 1, 1, 128>}]} {
    %c0_i32 = arith.constant 0 : i32
    %0 = arith.cmpi eq, %arg1, %c0_i32 : i32
    %1 = arith.extui %0 : i1 to i32
    %c0_i32_0 = arith.constant 0 : i32
    %2 = arith.cmpi ne, %1, %c0_i32_0 : i32
    scf.if %2 {
      %c0_17 = arith.constant 0 : index
      %c0_18 = arith.constant 0 : index
      %c0_19 = arith.constant 0 : index
      %28 = vector.load %arg3[%c0_17, %c0_18, %c0_19] : memref<1x1x128xf32, #tpu.memory_space<vmem>>, vector<1x1x128xf32>
      %29 = vector.shape_cast %28 : vector<1x1x128xf32> to vector<1x128xf32>
      %cst_20 = arith.constant 1.562500e-02 : f32
      %30 = vector.broadcast %cst_20 : f32 to vector<1x128xf32>
      %31 = arith.mulf %29, %30 : vector<1x128xf32>
      %c0_21 = arith.constant 0 : index
      %c0_22 = arith.constant 0 : index
      %32 = vector.load %arg4[%c0_21, %c0_22] : memref<128x8xf32, #tpu.memory_space<vmem>>, vector<128x8xf32>
      %cst_23 = arith.constant dense<0.000000e+00> : vector<1x8xf32>
      %33 = tpu.matmul %31, %32, %cst_23 {dimension_numbers = #tpu.dot_dimension_numbers<[1], [0], [0], [1], [0, 0, 1, 1], [], []>} : vector<1x128xf32>, vector<128x8xf32>, vector<1x8xf32> -> vector<1x8xf32>
      %c0_24 = arith.constant 0 : index
      %c0_25 = arith.constant 0 : index
      %34 = vector.load %arg5[%c0_24, %c0_25] : memref<1x8xf32, #tpu.memory_space<vmem>>, vector<1x8xf32>
      %35 = arith.addf %33, %34 : vector<1x8xf32>
      %36 = arith.negf %35 : vector<1x8xf32>
      %37 = math.exp %36 : vector<1x8xf32>
      %cst_26 = arith.constant 1.000000e+00 : f32
      %38 = vector.broadcast %cst_26 : f32 to vector<1x8xf32>
      %39 = arith.addf %38, %37 : vector<1x8xf32>
      %40 = arith.divf %38, %39 : vector<1x8xf32>
      %41 = arith.mulf %35, %40 : vector<1x8xf32>
      %c0_27 = arith.constant 0 : index
      %c0_28 = arith.constant 0 : index
      %42 = vector.load %arg6[%c0_27, %c0_28] : memref<8x128xf32, #tpu.memory_space<vmem>>, vector<8x128xf32>
      %cst_29 = arith.constant dense<0.000000e+00> : vector<1x128xf32>
      %43 = tpu.matmul %41, %42, %cst_29 {dimension_numbers = #tpu.dot_dimension_numbers<[1], [0], [0], [1], [0, 0, 1, 1], [], []>} : vector<1x8xf32>, vector<8x128xf32>, vector<1x128xf32> -> vector<1x128xf32>
      %c0_30 = arith.constant 0 : index
      %c0_31 = arith.constant 0 : index
      %44 = vector.load %arg7[%c0_30, %c0_31] : memref<1x128xf32, #tpu.memory_space<vmem>>, vector<1x128xf32>
      %45 = arith.addf %43, %44 : vector<1x128xf32>
      %46 = arith.negf %45 : vector<1x128xf32>
      %47 = math.exp %46 : vector<1x128xf32>
      %cst_32 = arith.constant 1.000000e+00 : f32
      %48 = vector.broadcast %cst_32 : f32 to vector<1x128xf32>
      %49 = arith.addf %48, %47 : vector<1x128xf32>
      %50 = arith.divf %48, %49 : vector<1x128xf32>
      %c0_33 = arith.constant 0 : index
      %c0_34 = arith.constant 0 : index
      %51 = vector.load %arg15[%c0_33, %c0_34] : memref<1x128xf32, #tpu.memory_space<vmem>>, vector<1x128xf32>
      tpu.vector_store %arg15[%c0_33, %c0_34], %50 {strides = array<i32>} : memref<1x128xf32, #tpu.memory_space<vmem>>, vector<1x128xf32>,
      %cst_35 = arith.constant 0.000000e+00 : f32
      %52 = vector.broadcast %cst_35 : f32 to vector<1x128xf32>
      %c0_36 = arith.constant 0 : index
      %c0_37 = arith.constant 0 : index
      %53 = vector.load %arg16[%c0_36, %c0_37] : memref<1x128xf32, #tpu.memory_space<vmem>>, vector<1x128xf32>
      tpu.vector_store %arg16[%c0_36, %c0_37], %52 {strides = array<i32>} : memref<1x128xf32, #tpu.memory_space<vmem>>, vector<1x128xf32>,
    } else {
    }
    %c0 = arith.constant 0 : index
    %c0_1 = arith.constant 0 : index
    %c0_2 = arith.constant 0 : index
    %3 = vector.load %arg2[%c0, %c0_1, %c0_2] : memref<1x64x128xbf16, #tpu.memory_space<vmem>>, vector<1x64x128xbf16>
    %4 = vector.shape_cast %3 : vector<1x64x128xbf16> to vector<64x128xbf16>
    %c0_3 = arith.constant 0 : index
    %c0_4 = arith.constant 0 : index
    %5 = vector.load %arg15[%c0_3, %c0_4] : memref<1x128xf32, #tpu.memory_space<vmem>>, vector<1x128xf32>
    %6 = arith.truncf %5 : vector<1x128xf32> to vector<1x128xbf16>
    %7 = vector.broadcast %6 : vector<1x128xbf16> to vector<64x128xbf16>
    %8 = arith.mulf %4, %7 : vector<64x128xbf16>
    %c0_5 = arith.constant 0 : index
    %c0_6 = arith.constant 0 : index
    %9 = vector.load %arg8[%c0_5, %c0_6] : memref<128x128xbf16, #tpu.memory_space<vmem>>, vector<128x128xbf16>
    %cst = arith.constant dense<0.000000e+00> : vector<64x128xf32>
    %10 = tpu.matmul %8, %9, %cst {dimension_numbers = #tpu.dot_dimension_numbers<[1], [0], [0], [1], [0, 0, 1, 1], [], []>} : vector<64x128xbf16>, vector<128x128xbf16>, vector<64x128xf32> -> vector<64x128xf32>
    %c0_7 = arith.constant 0 : index
    %c0_8 = arith.constant 0 : index
    %11 = vector.load %arg9[%c0_7, %c0_8] : memref<1x128xf32, #tpu.memory_space<vmem>>, vector<1x128xf32>
    %12 = vector.broadcast %11 : vector<1x128xf32> to vector<64x128xf32>
    %13 = arith.addf %10, %12 : vector<64x128xf32>
    %14 = arith.negf %13 : vector<64x128xf32>
    %15 = math.exp %14 : vector<64x128xf32>
    %cst_9 = arith.constant 1.000000e+00 : f32
    %16 = vector.broadcast %cst_9 : f32 to vector<64x128xf32>
    %17 = arith.addf %16, %15 : vector<64x128xf32>
    %18 = arith.divf %16, %17 : vector<64x128xf32>
    %19 = arith.mulf %13, %18 : vector<64x128xf32>
    %c0_10 = arith.constant 0 : index
    %c0_11 = arith.constant 0 : index
    %20 = vector.load %arg16[%c0_10, %c0_11] : memref<1x128xf32, #tpu.memory_space<vmem>>, vector<1x128xf32>
    %cst_12 = arith.constant dense<0.000000e+00> : vector<128xf32>
    %21 = vector.multi_reduction <add>, %19, %cst_12 [0] : vector<64x128xf32> to vector<128xf32>
    %22 = vector.shape_cast %21 : vector<128xf32> to vector<1x128xf32>
    %23 = arith.addf %20, %22 : vector<1x128xf32>
    %c0_13 = arith.constant 0 : index
    %c0_14 = arith.constant 0 : index
    %24 = vector.load %arg16[%c0_13, %c0_14] : memref<1x128xf32, #tpu.memory_space<vmem>>, vector<1x128xf32>
    tpu.vector_store %arg16[%c0_13, %c0_14], %23 {strides = array<i32>} : memref<1x128xf32, #tpu.memory_space<vmem>>, vector<1x128xf32>,
    %c0_i32_15 = arith.constant 0 : i32
    %25 = arith.cmpi eq, %arg1, %c0_i32_15 : i32
    %26 = arith.extui %25 : i1 to i32
    %c0_i32_16 = arith.constant 0 : i32
    %27 = arith.cmpi ne, %26, %c0_i32_16 : i32
    scf.if %27 {
      %c0_17 = arith.constant 0 : index
      %c0_18 = arith.constant 0 : index
      %28 = vector.load %arg16[%c0_17, %c0_18] : memref<1x128xf32, #tpu.memory_space<vmem>>, vector<1x128xf32>
      %cst_19 = arith.constant 1.562500e-02 : f32
      %29 = vector.broadcast %cst_19 : f32 to vector<1x128xf32>
      %30 = arith.mulf %28, %29 : vector<1x128xf32>
      %31 = arith.truncf %30 : vector<1x128xf32> to vector<1x128xbf16>
      %c0_20 = arith.constant 0 : index
      %c0_21 = arith.constant 0 : index
      %32 = vector.load %arg10[%c0_20, %c0_21] : memref<128x512xbf16, #tpu.memory_space<vmem>>, vector<128x512xbf16>
      %cst_22 = arith.constant dense<0.000000e+00> : vector<1x512xf32>
      %33 = tpu.matmul %31, %32, %cst_22 {dimension_numbers = #tpu.dot_dimension_numbers<[1], [0], [0], [1], [0, 0, 1, 1], [], []>} : vector<1x128xbf16>, vector<128x512xbf16>, vector<1x512xf32> -> vector<1x512xf32>
      %c0_23 = arith.constant 0 : index
      %c0_24 = arith.constant 0 : index
      %34 = vector.load %arg11[%c0_23, %c0_24] : memref<1x512xf32, #tpu.memory_space<vmem>>, vector<1x512xf32>
      %35 = arith.addf %33, %34 : vector<1x512xf32>
      %cst_25 = arith.constant 0.000000e+00 : f32
      %36 = vector.broadcast %cst_25 : f32 to vector<1x512xf32>
      %37 = arith.maximumf %35, %36 : vector<1x512xf32>
      %38 = arith.truncf %37 : vector<1x512xf32> to vector<1x512xbf16>
      %c0_26 = arith.constant 0 : index
      %c0_27 = arith.constant 0 : index
      %39 = vector.load %arg12[%c0_26, %c0_27] : memref<512x128xbf16, #tpu.memory_space<vmem>>, vector<512x128xbf16>
      %cst_28 = arith.constant dense<0.000000e+00> : vector<1x128xf32>
      %40 = tpu.matmul %38, %39, %cst_28 {dimension_numbers = #tpu.dot_dimension_numbers<[1], [0], [0], [1], [0, 0, 1, 1], [], []>} : vector<1x512xbf16>, vector<512x128xbf16>, vector<1x128xf32> -> vector<1x128xf32>
      %c0_29 = arith.constant 0 : index
      %c0_30 = arith.constant 0 : index
      %41 = vector.load %arg13[%c0_29, %c0_30] : memref<1x128xf32, #tpu.memory_space<vmem>>, vector<1x128xf32>
      %42 = arith.addf %40, %41 : vector<1x128xf32>
      %43 = vector.shape_cast %42 : vector<1x128xf32> to vector<1x1x128xf32>
      %c0_31 = arith.constant 0 : index
      %c0_32 = arith.constant 0 : index
      %c0_33 = arith.constant 0 : index
      %44 = vector.load %arg14[%c0_31, %c0_32, %c0_33] : memref<1x1x128xf32, #tpu.memory_space<vmem>>, vector<1x1x128xf32>
      tpu.vector_store %arg14[%c0_31, %c0_32, %c0_33], %43 {strides = array<i32>} : memref<1x1x128xf32, #tpu.memory_space<vmem>>, vector<1x1x128xf32>,
    } else {
    }
    return
  }
  func.func @transform_0(%arg0: i32, %arg1: i32) -> (i32, i32, i32) {
    %c0_i32 = arith.constant 0 : i32
    %c0_i32_0 = arith.constant 0 : i32
    return %arg0, %arg1, %c0_i32 : i32, i32, i32
  }
  func.func @transform_1(%arg0: i32, %arg1: i32) -> (i32, i32, i32) {
    %c0_i32 = arith.constant 0 : i32
    %c0_i32_0 = arith.constant 0 : i32
    %c0_i32_1 = arith.constant 0 : i32
    return %arg0, %c0_i32, %c0_i32_0 : i32, i32, i32
  }
  func.func @transform_2(%arg0: i32, %arg1: i32) -> (i32, i32) {
    %c0_i32 = arith.constant 0 : i32
    %c0_i32_0 = arith.constant 0 : i32
    %c0_i32_1 = arith.constant 0 : i32
    return %c0_i32, %c0_i32_0 : i32, i32
  }
  func.func @transform_3(%arg0: i32, %arg1: i32) -> (i32, i32) {
    %c0_i32 = arith.constant 0 : i32
    %c0_i32_0 = arith.constant 0 : i32
    %c0_i32_1 = arith.constant 0 : i32
    return %c0_i32, %c0_i32_0 : i32, i32
  }
  func.func @transform_4(%arg0: i32, %arg1: i32) -> (i32, i32) {
    %c0_i32 = arith.constant 0 : i32
    %c0_i32_0 = arith.constant 0 : i32
    %c0_i32_1 = arith.constant 0 : i32
    return %c0_i32, %c0_i32_0 : i32, i32
  }
  func.func @transform_5(%arg0: i32, %arg1: i32) -> (i32, i32) {
    %c0_i32 = arith.constant 0 : i32
    %c0_i32_0 = arith.constant 0 : i32
    %c0_i32_1 = arith.constant 0 : i32
    return %c0_i32, %c0_i32_0 : i32, i32
  }
  func.func @transform_6(%arg0: i32, %arg1: i32) -> (i32, i32) {
    %c0_i32 = arith.constant 0 : i32
    %c0_i32_0 = arith.constant 0 : i32
    %c0_i32_1 = arith.constant 0 : i32
    return %c0_i32, %c0_i32_0 : i32, i32
  }
  func.func @transform_7(%arg0: i32, %arg1: i32) -> (i32, i32) {
    %c0_i32 = arith.constant 0 : i32
    %c0_i32_0 = arith.constant 0 : i32
    %c0_i32_1 = arith.constant 0 : i32
    return %c0_i32, %c0_i32_0 : i32, i32
  }
  func.func @transform_8(%arg0: i32, %arg1: i32) -> (i32, i32) {
    %c0_i32 = arith.constant 0 : i32
    %c0_i32_0 = arith.constant 0 : i32
    %c0_i32_1 = arith.constant 0 : i32
    return %c0_i32, %c0_i32_0 : i32, i32
  }
  func.func @transform_9(%arg0: i32, %arg1: i32) -> (i32, i32) {
    %c0_i32 = arith.constant 0 : i32
    %c0_i32_0 = arith.constant 0 : i32
    %c0_i32_1 = arith.constant 0 : i32
    return %c0_i32, %c0_i32_0 : i32, i32
  }
  func.func @transform_10(%arg0: i32, %arg1: i32) -> (i32, i32) {
    %c0_i32 = arith.constant 0 : i32
    %c0_i32_0 = arith.constant 0 : i32
    %c0_i32_1 = arith.constant 0 : i32
    return %c0_i32, %c0_i32_0 : i32, i32
  }
  func.func @transform_11(%arg0: i32, %arg1: i32) -> (i32, i32) {
    %c0_i32 = arith.constant 0 : i32
    %c0_i32_0 = arith.constant 0 : i32
    %c0_i32_1 = arith.constant 0 : i32
    return %c0_i32, %c0_i32_0 : i32, i32
  }
  func.func @transform_12(%arg0: i32, %arg1: i32) -> (i32, i32, i32) {
    %c0_i32 = arith.constant 0 : i32
    %c0_i32_0 = arith.constant 0 : i32
    %c0_i32_1 = arith.constant 0 : i32
    return %arg0, %c0_i32, %c0_i32_0 : i32, i32, i32
  }
}

</mosaic_0001>

<llo_original>
// kernel: _lambda_.4
$region0: #{_lambda_.4}
  #allocation0 [shape = 'u32[]', space=smem, size = 0x4, offset = 0x4, fixed_abs, tag = 'smem constant byte address 0x4 - core index']
  #allocation1 [shape = 'u32[144,128]{1,0:T(1,128)}', space=vmem, size = 0x12000, scoped, tag = 'internal scratch']
  %s0 = inlined_call_operand.vmem [shape: bf16[128,32], index: 0, kind: input, shape index: {}]
  %s1 = inlined_call_operand.vmem [shape: bf16[32,128], index: 1, kind: input, shape index: {}]
  %s2 = inlined_call_operand.vmem [shape: f32[1,128], index: 2, kind: input, shape index: {}]
  %s3 = inlined_call_operand.vmem [shape: f32[1,128], index: 3, kind: input, shape index: {}]
  %s4 = inlined_call_operand.vmem [shape: bf16[128,128], index: 4, kind: output, shape index: {}]
  %s5 = sld [smem:[#allocation0]]
  $region26: #{_lambda_.4} parent=0
    _
  %s7 = ssub.s32 1, %s5
  %s8 = scalar_select 0, %s7, %s5
  // Predicated region
  $region2: #{_lambda_.4} parent=0 // pred_check
    _
  $region3: #{_lambda_.4} parent=0 // pred_check_branch
    %10 = sbr.rel (0) target = $region5
  $region4: #{_lambda_.4} parent=0 // pred_region
    _
  $region5: #{_lambda_.4} parent=0 // pred_fallthru
    _
  // Predicated region
  $region6: #{_lambda_.4} parent=0 // pred_check
    _
  $region7: #{_lambda_.4} parent=0 // pred_check_branch
    %12 = sbr.rel (0) target = $region9
  $region8: #{_lambda_.4} parent=0 // pred_region
    _
  $region9: #{_lambda_.4} parent=0 // pred_fallthru
    _
  // Predicated region
  $region10: #{_lambda_.4} parent=0 // pred_check
    _
  $region11: #{_lambda_.4} parent=0 // pred_check_branch
    %14 = sbr.rel (0) target = $region13
  $region12: #{_lambda_.4} parent=0 // pred_region
    _
  $region13: #{_lambda_.4} parent=0 // pred_fallthru
    _
  // Predicated region
  $region14: #{_lambda_.4} parent=0 // pred_check
    _
  $region15: #{_lambda_.4} parent=0 // pred_check_branch
    %16 = sbr.rel (0) target = $region17
  $region16: #{_lambda_.4} parent=0 // pred_region
    _
  $region17: #{_lambda_.4} parent=0 // pred_fallthru
    _
  %v18 = vld [vmem:[%s0] sm:$0xf]
  %v19 = vld [vmem:[%s0 + $0x4] sm:$0xf]
  %v20 = vld [vmem:[%s0 + $0x8] sm:$0xf]
  %v21 = vld [vmem:[%s0 + $0xc] sm:$0xf]
  %v22 = vld [vmem:[%s0 + $0x10] sm:$0xf]
  %v23 = vld [vmem:[%s0 + $0x14] sm:$0xf]
  %v24 = vld [vmem:[%s0 + $0x18] sm:$0xf]
  %v25 = vld [vmem:[%s0 + $0x1c] sm:$0xf]
  %v26 = vld [vmem:[%s0 + $0x20] sm:$0xf]
  %v27 = vld [vmem:[%s0 + $0x24] sm:$0xf]
  %v28 = vld [vmem:[%s0 + $0x28] sm:$0xf]
  %v29 = vld [vmem:[%s0 + $0x2c] sm:$0xf]
  %v30 = vld [vmem:[%s0 + $0x30] sm:$0xf]
  %v31 = vld [vmem:[%s0 + $0x34] sm:$0xf]
  %v32 = vld [vmem:[%s0 + $0x38] sm:$0xf]
  %v33 = vld [vmem:[%s0 + $0x3c] sm:$0xf]
  %v34 = vld [vmem:[%s1] sm:$0xf]
  %v35 = vld [vmem:[%s1 + $0x4] sm:$0xf]
  %v36 = vld [vmem:[%s1 + $0x8] sm:$0xf]
  %v37 = vld [vmem:[%s1 + $0xc] sm:$0xf]
  %v54 = vunpack.c.l.b16 %v18
  %v55 = vunpack.c.l.b16 %v19
  %v56 = vunpack.c.l.b16 %v20
  %v57 = vunpack.c.l.b16 %v21
  %v58 = vunpack.c.l.b16 %v22
  %v59 = vunpack.c.l.b16 %v23
  %v60 = vunpack.c.l.b16 %v24
  %v61 = vunpack.c.l.b16 %v25
  %v62 = vunpack.c.l.b16 %v26
  %v63 = vunpack.c.l.b16 %v27
  %v64 = vunpack.c.l.b16 %v28
  %v65 = vunpack.c.l.b16 %v29
  %v66 = vunpack.c.l.b16 %v30
  %v67 = vunpack.c.l.b16 %v31
  %v68 = vunpack.c.l.b16 %v32
  %v69 = vunpack.c.l.b16 %v33
  %v70 = vpack.c.b16 %v55, %v54
  %v71 = vpack.c.b16 %v57, %v56
  %v72 = vpack.c.b16 %v59, %v58
  %v73 = vpack.c.b16 %v61, %v60
  %v74 = vpack.c.b16 %v63, %v62
  %v75 = vpack.c.b16 %v65, %v64
  %v76 = vpack.c.b16 %v67, %v66
  %v77 = vpack.c.b16 %v69, %v68
  %v82 = vunpack.c.l.b16 %v34
  %v83 = vunpack.c.l.b16 %v35
  %v84 = vunpack.c.l.b16 %v36
  %v85 = vunpack.c.l.b16 %v37
  %v86 = vpack.c.b16 %v83, %v82
  %v87 = vpack.c.b16 %v85, %v84
  %vm90 = vcmask 261120
  %v92 = vsel %vm90, %v70, 0
  %v95 = vsel %vm90, %v71, 0
  %v98 = vsel %vm90, %v72, 0
  %v101 = vsel %vm90, %v73, 0
  %v104 = vsel %vm90, %v74, 0
  %v107 = vsel %vm90, %v75, 0
  %v110 = vsel %vm90, %v76, 0
  %v113 = vsel %vm90, %v77, 0
  %115 = vmatprep.subr.bf16.mxu0 0
  %116 = vmatpush1.bf16.msra.mxu0 %v86
  %117 = vmatprep.subr.bf16.mxu0 0
  %118 = vmatpush1.bf16.msra.mxu0 %v87
  %119 = vmatprep.subr.bf16.mxu0 0
  %120 = vmatpush1.bf16.msra.mxu0 0
  %121 = vmatprep.subr.bf16.mxu0 0
  %122 = vmatpush1.bf16.msra.mxu0 0
  %123 = vmatprep.subr.bf16.mxu0 0
  %124 = vmatpush1.bf16.msra.mxu0 0
  %125 = vmatprep.subr.bf16.mxu0 0
  %126 = vmatpush1.bf16.msra.mxu0 0
  %127 = vmatprep.subr.bf16.mxu0 0
  %128 = vmatpush1.bf16.msra.mxu0 0
  %129 = vmatprep.subr.bf16.mxu0 0
  %130 = vmatpush1.bf16.msra.mxu0 0
  %131 = vmatprep.subr.bf16.mxu0 0
  %132 = vmatpush1.bf16.msra.mxu0 0
  %133 = vmatprep.subr.bf16.mxu0 0
  %134 = vmatpush1.bf16.msra.mxu0 0
  %135 = vmatprep.subr.bf16.mxu0 0
  %136 = vmatpush1.bf16.msra.mxu0 0
  %137 = vmatprep.subr.bf16.mxu0 0
  %138 = vmatpush1.bf16.msra.mxu0 0
  %139 = vmatprep.subr.bf16.mxu0 0
  %140 = vmatpush1.bf16.msra.mxu0 0
  %141 = vmatprep.subr.bf16.mxu0 0
  %142 = vmatpush1.bf16.msra.mxu0 0
  %143 = vmatprep.subr.bf16.mxu0 0
  %144 = vmatpush1.bf16.msra.mxu0 0
  %145 = vmatprep.subr.bf16.mxu0 0
  %146 = vmatpush1.bf16.msra.mxu0 0
  %147 = vmatprep.mubr.bf16.mxu0 0
  %148 = vmatmul.mubr.bf16.gmra.mrb[0].mxu0 %v92
  %v149 = vpop.f32.mrb[0].mxu0
  %v150 = vadd.f32 0.0, %v149
  %v151 = vpop.f32.mrb[0].mxu0
  %v152 = vpop.f32.mrb[0].mxu0
  %v153 = vadd.f32 0.0, %v152
  %v154 = vpop.f32.mrb[0].mxu0
  %155 = vmatprep.mubr.bf16.mxu0 0
  %156 = vmatmul.mubr.bf16.gmra.mrb[0].mxu0 %v95
  %v157 = vpop.f32.mrb[0].mxu0
  %v158 = vadd.f32 0.0, %v157
  %v159 = vpop.f32.mrb[0].mxu0
  %v160 = vpop.f32.mrb[0].mxu0
  %v161 = vadd.f32 0.0, %v160
  %v162 = vpop.f32.mrb[0].mxu0
  %163 = vmatprep.mubr.bf16.mxu0 0
  %164 = vmatmul.mubr.bf16.gmra.mrb[0].mxu0 %v98
  %v165 = vpop.f32.mrb[0].mxu0
  %v166 = vadd.f32 0.0, %v165
  %v167 = vpop.f32.mrb[0].mxu0
  %v168 = vpop.f32.mrb[0].mxu0
  %v169 = vadd.f32 0.0, %v168
  %v170 = vpop.f32.mrb[0].mxu0
  %171 = vmatprep.mubr.bf16.mxu0 0
  %172 = vmatmul.mubr.bf16.gmra.mrb[0].mxu0 %v101
  %v173 = vpop.f32.mrb[0].mxu0
  %v174 = vadd.f32 0.0, %v173
  %v175 = vpop.f32.mrb[0].mxu0
  %v176 = vpop.f32.mrb[0].mxu0
  %v177 = vadd.f32 0.0, %v176
  %v178 = vpop.f32.mrb[0].mxu0
  %179 = vmatprep.mubr.bf16.mxu0 0
  %180 = vmatmul.mubr.bf16.gmra.mrb[0].mxu0 %v104
  %v181 = vpop.f32.mrb[0].mxu0
  %v182 = vadd.f32 0.0, %v181
  %v183 = vpop.f32.mrb[0].mxu0
  %v184 = vpop.f32.mrb[0].mxu0
  %v185 = vadd.f32 0.0, %v184
  %v186 = vpop.f32.mrb[0].mxu0
  %187 = vmatprep.mubr.bf16.mxu0 0
  %188 = vmatmul.mubr.bf16.gmra.mrb[0].mxu0 %v107
  %v189 = vpop.f32.mrb[0].mxu0
  %v190 = vadd.f32 0.0, %v189
  %v191 = vpop.f32.mrb[0].mxu0
  %v192 = vpop.f32.mrb[0].mxu0
  %v193 = vadd.f32 0.0, %v192
  %v194 = vpop.f32.mrb[0].mxu0
  %195 = vmatprep.mubr.bf16.mxu0 0
  %196 = vmatmul.mubr.bf16.gmra.mrb[0].mxu0 %v110
  %v197 = vpop.f32.mrb[0].mxu0
  %v198 = vadd.f32 0.0, %v197
  %v199 = vpop.f32.mrb[0].mxu0
  %v200 = vpop.f32.mrb[0].mxu0
  %v201 = vadd.f32 0.0, %v200
  %v202 = vpop.f32.mrb[0].mxu0
  %203 = vmatprep.mubr.bf16.mxu0 0
  %204 = vmatmul.mubr.bf16.gmra.mrb[0].mxu0 %v113
  %v205 = vpop.f32.mrb[0].mxu0
  %v206 = vadd.f32 0.0, %v205
  %v207 = vpop.f32.mrb[0].mxu0
  %v208 = vpop.f32.mrb[0].mxu0
  %v209 = vadd.f32 0.0, %v208
  %v210 = vpop.f32.mrb[0].mxu0
  %211 = vdwg.mxu0
  %v212 = vld [vmem:[%s2] sm:$0x1]
  %v214 = vlaneseq
  %v215 = vshrl.u32 %v214, 7
  %v216 = vsub.s32 0, %v215
  %v217 = vrot.slane %v212, %v216
  %v219 = vmul.f32 %v150, %v217
  %v220 = vmul.f32 %v153, %v217
  %v221 = vmul.f32 %v158, %v217
  %v222 = vmul.f32 %v161, %v217
  %v223 = vmul.f32 %v166, %v217
  %v224 = vmul.f32 %v169, %v217
  %v225 = vmul.f32 %v174, %v217
  %v226 = vmul.f32 %v177, %v217
  %v227 = vmul.f32 %v182, %v217
  %v228 = vmul.f32 %v185, %v217
  %v229 = vmul.f32 %v190, %v217
  %v230 = vmul.f32 %v193, %v217
  %v231 = vmul.f32 %v198, %v217
  %v232 = vmul.f32 %v201, %v217
  %v233 = vmul.f32 %v206, %v217
  %v234 = vmul.f32 %v209, %v217
  %v235 = vld [vmem:[%s3] sm:$0x1]
  %v237 = vlaneseq
  %v238 = vshrl.u32 %v237, 7
  %v239 = vsub.s32 0, %v238
  %v240 = vrot.slane %v235, %v239
  %v242 = vadd.f32 %v219, %v240
  %v243 = vadd.f32 %v220, %v240
  %v244 = vadd.f32 %v221, %v240
  %v245 = vadd.f32 %v222, %v240
  %v246 = vadd.f32 %v223, %v240
  %v247 = vadd.f32 %v224, %v240
  %v248 = vadd.f32 %v225, %v240
  %v249 = vadd.f32 %v226, %v240
  %v250 = vadd.f32 %v227, %v240
  %v251 = vadd.f32 %v228, %v240
  %v252 = vadd.f32 %v229, %v240
  %v253 = vadd.f32 %v230, %v240
  %v254 = vadd.f32 %v231, %v240
  %v255 = vadd.f32 %v232, %v240
  %v256 = vadd.f32 %v233, %v240
  %v257 = vadd.f32 %v234, %v240
  %v258 = vxor.u32 %v242, 2147483648
  %v259 = vxor.u32 %v243, 2147483648
  %v260 = vxor.u32 %v244, 2147483648
  %v261 = vxor.u32 %v245, 2147483648
  %v262 = vxor.u32 %v246, 2147483648
  %v263 = vxor.u32 %v247, 2147483648
  %v264 = vxor.u32 %v248, 2147483648
  %v265 = vxor.u32 %v249, 2147483648
  %v266 = vxor.u32 %v250, 2147483648
  %v267 = vxor.u32 %v251, 2147483648
  %v268 = vxor.u32 %v252, 2147483648
  %v269 = vxor.u32 %v253, 2147483648
  %v270 = vxor.u32 %v254, 2147483648
  %v271 = vxor.u32 %v255, 2147483648
  %v272 = vxor.u32 %v256, 2147483648
  %v273 = vxor.u32 %v257, 2147483648
  %v274 = vmul.f32 %v258, 1.442695
  %v275 = vpow.pop %v274
  %v276 = vmul.f32 %v259, 1.442695
  %v277 = vpow.pop %v276
  %v278 = vmul.f32 %v260, 1.442695
  %v279 = vpow.pop %v278
  %v280 = vmul.f32 %v261, 1.442695
  %v281 = vpow.pop %v280
  %v282 = vmul.f32 %v262, 1.442695
  %v283 = vpow.pop %v282
  %v284 = vmul.f32 %v263, 1.442695
  %v285 = vpow.pop %v284
  %v286 = vmul.f32 %v264, 1.442695
  %v287 = vpow.pop %v286
  %v288 = vmul.f32 %v265, 1.442695
  %v289 = vpow.pop %v288
  %v290 = vmul.f32 %v266, 1.442695
  %v291 = vpow.pop %v290
  %v292 = vmul.f32 %v267, 1.442695
  %v293 = vpow.pop %v292
  %v294 = vmul.f32 %v268, 1.442695
  %v295 = vpow.pop %v294
  %v296 = vmul.f32 %v269, 1.442695
  %v297 = vpow.pop %v296
  %v298 = vmul.f32 %v270, 1.442695
  %v299 = vpow.pop %v298
  %v300 = vmul.f32 %v271, 1.442695
  %v301 = vpow.pop %v300
  %v302 = vmul.f32 %v272, 1.442695
  %v303 = vpow.pop %v302
  %v304 = vmul.f32 %v273, 1.442695
  %v305 = vpow.pop %v304
  %v306 = vadd.f32 %v275, 1.0
  %v307 = vadd.f32 %v277, 1.0
  %v308 = vadd.f32 %v279, 1.0
  %v309 = vadd.f32 %v281, 1.0
  %v310 = vadd.f32 %v283, 1.0
  %v311 = vadd.f32 %v285, 1.0
  %v312 = vadd.f32 %v287, 1.0
  %v313 = vadd.f32 %v289, 1.0
  %v314 = vadd.f32 %v291, 1.0
  %v315 = vadd.f32 %v293, 1.0
  %v316 = vadd.f32 %v295, 1.0
  %v317 = vadd.f32 %v297, 1.0
  %v318 = vadd.f32 %v299, 1.0
  %v319 = vadd.f32 %v301, 1.0
  %v320 = vadd.f32 %v303, 1.0
  %v321 = vadd.f32 %v305, 1.0
  %v322 = vrcp.pop %v306
  %v323 = vmul.f32 1.0, %v322
  %v324 = vrcp.pop %v307
  %v325 = vmul.f32 1.0, %v324
  %v326 = vrcp.pop %v308
  %v327 = vmul.f32 1.0, %v326
  %v328 = vrcp.pop %v309
  %v329 = vmul.f32 1.0, %v328
  %v330 = vrcp.pop %v310
  %v331 = vmul.f32 1.0, %v330
  %v332 = vrcp.pop %v311
  %v333 = vmul.f32 1.0, %v332
  %v334 = vrcp.pop %v312
  %v335 = vmul.f32 1.0, %v334
  %v336 = vrcp.pop %v313
  %v337 = vmul.f32 1.0, %v336
  %v338 = vrcp.pop %v314
  %v339 = vmul.f32 1.0, %v338
  %v340 = vrcp.pop %v315
  %v341 = vmul.f32 1.0, %v340
  %v342 = vrcp.pop %v316
  %v343 = vmul.f32 1.0, %v342
  %v344 = vrcp.pop %v317
  %v345 = vmul.f32 1.0, %v344
  %v346 = vrcp.pop %v318
  %v347 = vmul.f32 1.0, %v346
  %v348 = vrcp.pop %v319
  %v349 = vmul.f32 1.0, %v348
  %v350 = vrcp.pop %v320
  %v351 = vmul.f32 1.0, %v350
  %v352 = vrcp.pop %v321
  %v353 = vmul.f32 1.0, %v352
  %v354 = vmul.f32 %v242, %v323
  %v355 = vmul.f32 %v243, %v325
  %v356 = vmul.f32 %v244, %v327
  %v357 = vmul.f32 %v245, %v329
  %v358 = vmul.f32 %v246, %v331
  %v359 = vmul.f32 %v247, %v333
  %v360 = vmul.f32 %v248, %v335
  %v361 = vmul.f32 %v249, %v337
  %v362 = vmul.f32 %v250, %v339
  %v363 = vmul.f32 %v251, %v341
  %v364 = vmul.f32 %v252, %v343
  %v365 = vmul.f32 %v253, %v345
  %v366 = vmul.f32 %v254, %v347
  %v367 = vmul.f32 %v255, %v349
  %v368 = vmul.f32 %v256, %v351
  %v369 = vmul.f32 %v257, %v353
  %v370 = vpack.c.bf16 %v355, %v354
  %v371 = vpack.c.bf16 %v357, %v356
  %v372 = vpack.c.bf16 %v359, %v358
  %v373 = vpack.c.bf16 %v361, %v360
  %v374 = vpack.c.bf16 %v363, %v362
  %v375 = vpack.c.bf16 %v365, %v364
  %v376 = vpack.c.bf16 %v367, %v366
  %v377 = vpack.c.bf16 %v369, %v368
  %v386 = vunpack.c.l.b16 %v370
  %v387 = vunpack.c.h.b16 %v370
  %v388 = vunpack.c.l.b16 %v371
  %v389 = vunpack.c.h.b16 %v371
  %v390 = vunpack.c.l.b16 %v372
  %v391 = vunpack.c.h.b16 %v372
  %v392 = vunpack.c.l.b16 %v373
  %v393 = vunpack.c.h.b16 %v373
  %v394 = vunpack.c.l.b16 %v374
  %v395 = vunpack.c.h.b16 %v374
  %v396 = vunpack.c.l.b16 %v375
  %v397 = vunpack.c.h.b16 %v375
  %v398 = vunpack.c.l.b16 %v376
  %v399 = vunpack.c.h.b16 %v376
  %v400 = vunpack.c.l.b16 %v377
  %v401 = vunpack.c.h.b16 %v377
  %v402 = vpack.c.b16 %v386, %v386
  %v403 = vpack.c.b16 %v387, %v387
  %v404 = vpack.c.b16 %v388, %v388
  %v405 = vpack.c.b16 %v389, %v389
  %v406 = vpack.c.b16 %v390, %v390
  %v407 = vpack.c.b16 %v391, %v391
  %v408 = vpack.c.b16 %v392, %v392
  %v409 = vpack.c.b16 %v393, %v393
  %v410 = vpack.c.b16 %v394, %v394
  %v411 = vpack.c.b16 %v395, %v395
  %v412 = vpack.c.b16 %v396, %v396
  %v413 = vpack.c.b16 %v397, %v397
  %v414 = vpack.c.b16 %v398, %v398
  %v415 = vpack.c.b16 %v399, %v399
  %v416 = vpack.c.b16 %v400, %v400
  %v417 = vpack.c.b16 %v401, %v401
  %434 = vst [vmem:[%s4] sm:$0xf] %v402
  %435 = vst [vmem:[%s4 + $0x4] sm:$0xf] %v403
  %436 = vst [vmem:[%s4 + $0x8] sm:$0xf] %v404
  %437 = vst [vmem:[%s4 + $0xc] sm:$0xf] %v405
  %438 = vst [vmem:[%s4 + $0x10] sm:$0xf] %v406
  %439 = vst [vmem:[%s4 + $0x14] sm:$0xf] %v407
  %440 = vst [vmem:[%s4 + $0x18] sm:$0xf] %v408
  %441 = vst [vmem:[%s4 + $0x1c] sm:$0xf] %v409
  %442 = vst [vmem:[%s4 + $0x20] sm:$0xf] %v410
  %443 = vst [vmem:[%s4 + $0x24] sm:$0xf] %v411
  %444 = vst [vmem:[%s4 + $0x28] sm:$0xf] %v412
  %445 = vst [vmem:[%s4 + $0x2c] sm:$0xf] %v413
  %446 = vst [vmem:[%s4 + $0x30] sm:$0xf] %v414
  %447 = vst [vmem:[%s4 + $0x34] sm:$0xf] %v415
  %448 = vst [vmem:[%s4 + $0x38] sm:$0xf] %v416
  %449 = vst [vmem:[%s4 + $0x3c] sm:$0xf] %v417
  // Predicated region
  $region18: #{_lambda_.4} parent=0 // pred_check
    _
  $region19: #{_lambda_.4} parent=0 // pred_check_branch
    %451 = sbr.rel (0) target = $region21
  $region20: #{_lambda_.4} parent=0 // pred_region
    _
  $region21: #{_lambda_.4} parent=0 // pred_fallthru
    _
  // Predicated region
  $region22: #{_lambda_.4} parent=0 // pred_check
    _
  $region23: #{_lambda_.4} parent=0 // pred_check_branch
    %453 = sbr.rel (0) target = $region25
  $region24: #{_lambda_.4} parent=0 // pred_region
    _
  $region25: #{_lambda_.4} parent=0 // pred_fallthru
    _

// kernel: _lambda_.5
$region0: #{_lambda_.5}
  #allocation0 [shape = 'u32[]', space=smem, size = 0x4, offset = 0x4, fixed_abs, tag = 'smem constant byte address 0x4 - core index']
  #allocation1 [shape = 'u32[144,128]{1,0:T(1,128)}', space=vmem, size = 0x12000, scoped, tag = 'internal scratch']
  %s0 = inlined_call_operand.vmem [shape: bf16[128,128], index: 0, kind: input, shape index: {}]
  %s1 = inlined_call_operand.vmem [shape: bf16[128,128], index: 1, kind: input, shape index: {}]
  %s2 = inlined_call_operand.vmem [shape: f32[1,128], index: 2, kind: input, shape index: {}]
  %s3 = inlined_call_operand.vmem [shape: f32[1,128], index: 3, kind: input, shape index: {}]
  %s4 = inlined_call_operand.vmem [shape: bf16[128,128], index: 4, kind: output, shape index: {}]
  %s5 = sld [smem:[#allocation0]]
  $region26: #{_lambda_.5} parent=0
    _
  %s7 = ssub.s32 1, %s5
  %s8 = scalar_select 0, %s7, %s5
  // Predicated region
  $region2: #{_lambda_.5} parent=0 // pred_check
    _
  $region3: #{_lambda_.5} parent=0 // pred_check_branch
    %10 = sbr.rel (0) target = $region5
  $region4: #{_lambda_.5} parent=0 // pred_region
    _
  $region5: #{_lambda_.5} parent=0 // pred_fallthru
    _
  // Predicated region
  $region6: #{_lambda_.5} parent=0 // pred_check
    _
  $region7: #{_lambda_.5} parent=0 // pred_check_branch
    %12 = sbr.rel (0) target = $region9
  $region8: #{_lambda_.5} parent=0 // pred_region
    _
  $region9: #{_lambda_.5} parent=0 // pred_fallthru
    _
  // Predicated region
  $region10: #{_lambda_.5} parent=0 // pred_check
    _
  $region11: #{_lambda_.5} parent=0 // pred_check_branch
    %14 = sbr.rel (0) target = $region13
  $region12: #{_lambda_.5} parent=0 // pred_region
    _
  $region13: #{_lambda_.5} parent=0 // pred_fallthru
    _
  // Predicated region
  $region14: #{_lambda_.5} parent=0 // pred_check
    _
  $region15: #{_lambda_.5} parent=0 // pred_check_branch
    %16 = sbr.rel (0) target = $region17
  $region16: #{_lambda_.5} parent=0 // pred_region
    _
  $region17: #{_lambda_.5} parent=0 // pred_fallthru
    _
  %v18 = vld [vmem:[%s0] sm:$0xf]
  %v19 = vld [vmem:[%s0 + $0x4] sm:$0xf]
  %v20 = vld [vmem:[%s0 + $0x8] sm:$0xf]
  %v21 = vld [vmem:[%s0 + $0xc] sm:$0xf]
  %v22 = vld [vmem:[%s0 + $0x10] sm:$0xf]
  %v23 = vld [vmem:[%s0 + $0x14] sm:$0xf]
  %v24 = vld [vmem:[%s0 + $0x18] sm:$0xf]
  %v25 = vld [vmem:[%s0 + $0x1c] sm:$0xf]
  %v26 = vld [vmem:[%s0 + $0x20] sm:$0xf]
  %v27 = vld [vmem:[%s0 + $0x24] sm:$0xf]
  %v28 = vld [vmem:[%s0 + $0x28] sm:$0xf]
  %v29 = vld [vmem:[%s0 + $0x2c] sm:$0xf]
  %v30 = vld [vmem:[%s0 + $0x30] sm:$0xf]
  %v31 = vld [vmem:[%s0 + $0x34] sm:$0xf]
  %v32 = vld [vmem:[%s0 + $0x38] sm:$0xf]
  %v33 = vld [vmem:[%s0 + $0x3c] sm:$0xf]
  %v34 = vld [vmem:[%s1] sm:$0xf]
  %v35 = vld [vmem:[%s1 + $0x4] sm:$0xf]
  %v36 = vld [vmem:[%s1 + $0x8] sm:$0xf]
  %v37 = vld [vmem:[%s1 + $0xc] sm:$0xf]
  %v38 = vld [vmem:[%s1 + $0x10] sm:$0xf]
  %v39 = vld [vmem:[%s1 + $0x14] sm:$0xf]
  %v40 = vld [vmem:[%s1 + $0x18] sm:$0xf]
  %v41 = vld [vmem:[%s1 + $0x1c] sm:$0xf]
  %v42 = vld [vmem:[%s1 + $0x20] sm:$0xf]
  %v43 = vld [vmem:[%s1 + $0x24] sm:$0xf]
  %v44 = vld [vmem:[%s1 + $0x28] sm:$0xf]
  %v45 = vld [vmem:[%s1 + $0x2c] sm:$0xf]
  %v46 = vld [vmem:[%s1 + $0x30] sm:$0xf]
  %v47 = vld [vmem:[%s1 + $0x34] sm:$0xf]
  %v48 = vld [vmem:[%s1 + $0x38] sm:$0xf]
  %v49 = vld [vmem:[%s1 + $0x3c] sm:$0xf]
  %v66 = vunpack.c.l.b16 %v18
  %v67 = vunpack.c.l.b16 %v19
  %v68 = vunpack.c.l.b16 %v20
  %v69 = vunpack.c.l.b16 %v21
  %v70 = vunpack.c.l.b16 %v22
  %v71 = vunpack.c.l.b16 %v23
  %v72 = vunpack.c.l.b16 %v24
  %v73 = vunpack.c.l.b16 %v25
  %v74 = vunpack.c.l.b16 %v26
  %v75 = vunpack.c.l.b16 %v27
  %v76 = vunpack.c.l.b16 %v28
  %v77 = vunpack.c.l.b16 %v29
  %v78 = vunpack.c.l.b16 %v30
  %v79 = vunpack.c.l.b16 %v31
  %v80 = vunpack.c.l.b16 %v32
  %v81 = vunpack.c.l.b16 %v33
  %v82 = vpack.c.b16 %v67, %v66
  %v83 = vpack.c.b16 %v69, %v68
  %v84 = vpack.c.b16 %v71, %v70
  %v85 = vpack.c.b16 %v73, %v72
  %v86 = vpack.c.b16 %v75, %v74
  %v87 = vpack.c.b16 %v77, %v76
  %v88 = vpack.c.b16 %v79, %v78
  %v89 = vpack.c.b16 %v81, %v80
  %v114 = vunpack.c.l.b16 %v34
  %v115 = vunpack.c.l.b16 %v35
  %v116 = vunpack.c.l.b16 %v36
  %v117 = vunpack.c.l.b16 %v37
  %v118 = vunpack.c.l.b16 %v38
  %v119 = vunpack.c.l.b16 %v39
  %v120 = vunpack.c.l.b16 %v40
  %v121 = vunpack.c.l.b16 %v41
  %v122 = vunpack.c.l.b16 %v42
  %v123 = vunpack.c.l.b16 %v43
  %v124 = vunpack.c.l.b16 %v44
  %v125 = vunpack.c.l.b16 %v45
  %v126 = vunpack.c.l.b16 %v46
  %v127 = vunpack.c.l.b16 %v47
  %v128 = vunpack.c.l.b16 %v48
  %v129 = vunpack.c.l.b16 %v49
  %v130 = vpack.c.b16 %v115, %v114
  %v131 = vpack.c.b16 %v117, %v116
  %v132 = vpack.c.b16 %v119, %v118
  %v133 = vpack.c.b16 %v121, %v120
  %v134 = vpack.c.b16 %v123, %v122
  %v135 = vpack.c.b16 %v125, %v124
  %v136 = vpack.c.b16 %v127, %v126
  %v137 = vpack.c.b16 %v129, %v128
  %146 = vmatprep.subr.bf16.mxu0 0
  %147 = vmatpush1.bf16.msra.mxu0 %v130
  %148 = vmatprep.subr.bf16.mxu0 0
  %149 = vmatpush1.bf16.msra.mxu0 %v131
  %150 = vmatprep.subr.bf16.mxu0 0
  %151 = vmatpush1.bf16.msra.mxu0 %v132
  %152 = vmatprep.subr.bf16.mxu0 0
  %153 = vmatpush1.bf16.msra.mxu0 %v133
  %154 = vmatprep.subr.bf16.mxu0 0
  %155 = vmatpush1.bf16.msra.mxu0 %v134
  %156 = vmatprep.subr.bf16.mxu0 0
  %157 = vmatpush1.bf16.msra.mxu0 %v135
  %158 = vmatprep.subr.bf16.mxu0 0
  %159 = vmatpush1.bf16.msra.mxu0 %v136
  %160 = vmatprep.subr.bf16.mxu0 0
  %161 = vmatpush1.bf16.msra.mxu0 %v137
  %162 = vmatprep.subr.bf16.mxu0 0
  %163 = vmatpush1.bf16.msra.mxu0 0
  %164 = vmatprep.subr.bf16.mxu0 0
  %165 = vmatpush1.bf16.msra.mxu0 0
  %166 = vmatprep.subr.bf16.mxu0 0
  %167 = vmatpush1.bf16.msra.mxu0 0
  %168 = vmatprep.subr.bf16.mxu0 0
  %169 = vmatpush1.bf16.msra.mxu0 0
  %170 = vmatprep.subr.bf16.mxu0 0
  %171 = vmatpush1.bf16.msra.mxu0 0
  %172 = vmatprep.subr.bf16.mxu0 0
  %173 = vmatpush1.bf16.msra.mxu0 0
  %174 = vmatprep.subr.bf16.mxu0 0
  %175 = vmatpush1.bf16.msra.mxu0 0
  %176 = vmatprep.subr.bf16.mxu0 0
  %177 = vmatpush1.bf16.msra.mxu0 0
  %178 = vmatprep.mubr.bf16.mxu0 0
  %179 = vmatmul.mubr.bf16.gmra.mrb[0].mxu0 %v82
  %v180 = vpop.f32.mrb[0].mxu0
  %v181 = vadd.f32 0.0, %v180
  %v182 = vpop.f32.mrb[0].mxu0
  %v183 = vpop.f32.mrb[0].mxu0
  %v184 = vadd.f32 0.0, %v183
  %v185 = vpop.f32.mrb[0].mxu0
  %186 = vmatprep.mubr.bf16.mxu0 0
  %187 = vmatmul.mubr.bf16.gmra.mrb[0].mxu0 %v83
  %v188 = vpop.f32.mrb[0].mxu0
  %v189 = vadd.f32 0.0, %v188
  %v190 = vpop.f32.mrb[0].mxu0
  %v191 = vpop.f32.mrb[0].mxu0
  %v192 = vadd.f32 0.0, %v191
  %v193 = vpop.f32.mrb[0].mxu0
  %194 = vmatprep.mubr.bf16.mxu0 0
  %195 = vmatmul.mubr.bf16.gmra.mrb[0].mxu0 %v84
  %v196 = vpop.f32.mrb[0].mxu0
  %v197 = vadd.f32 0.0, %v196
  %v198 = vpop.f32.mrb[0].mxu0
  %v199 = vpop.f32.mrb[0].mxu0
  %v200 = vadd.f32 0.0, %v199
  %v201 = vpop.f32.mrb[0].mxu0
  %202 = vmatprep.mubr.bf16.mxu0 0
  %203 = vmatmul.mubr.bf16.gmra.mrb[0].mxu0 %v85
  %v204 = vpop.f32.mrb[0].mxu0
  %v205 = vadd.f32 0.0, %v204
  %v206 = vpop.f32.mrb[0].mxu0
  %v207 = vpop.f32.mrb[0].mxu0
  %v208 = vadd.f32 0.0, %v207
  %v209 = vpop.f32.mrb[0].mxu0
  %210 = vmatprep.mubr.bf16.mxu0 0
  %211 = vmatmul.mubr.bf16.gmra.mrb[0].mxu0 %v86
  %v212 = vpop.f32.mrb[0].mxu0
  %v213 = vadd.f32 0.0, %v212
  %v214 = vpop.f32.mrb[0].mxu0
  %v215 = vpop.f32.mrb[0].mxu0
  %v216 = vadd.f32 0.0, %v215
  %v217 = vpop.f32.mrb[0].mxu0
  %218 = vmatprep.mubr.bf16.mxu0 0
  %219 = vmatmul.mubr.bf16.gmra.mrb[0].mxu0 %v87
  %v220 = vpop.f32.mrb[0].mxu0
  %v221 = vadd.f32 0.0, %v220
  %v222 = vpop.f32.mrb[0].mxu0
  %v223 = vpop.f32.mrb[0].mxu0
  %v224 = vadd.f32 0.0, %v223
  %v225 = vpop.f32.mrb[0].mxu0
  %226 = vmatprep.mubr.bf16.mxu0 0
  %227 = vmatmul.mubr.bf16.gmra.mrb[0].mxu0 %v88
  %v228 = vpop.f32.mrb[0].mxu0
  %v229 = vadd.f32 0.0, %v228
  %v230 = vpop.f32.mrb[0].mxu0
  %v231 = vpop.f32.mrb[0].mxu0
  %v232 = vadd.f32 0.0, %v231
  %v233 = vpop.f32.mrb[0].mxu0
  %234 = vmatprep.mubr.bf16.mxu0 0
  %235 = vmatmul.mubr.bf16.gmra.mrb[0].mxu0 %v89
  %v236 = vpop.f32.mrb[0].mxu0
  %v237 = vadd.f32 0.0, %v236
  %v238 = vpop.f32.mrb[0].mxu0
  %v239 = vpop.f32.mrb[0].mxu0
  %v240 = vadd.f32 0.0, %v239
  %v241 = vpop.f32.mrb[0].mxu0
  %242 = vdwg.mxu0
  %v243 = vld [vmem:[%s2] sm:$0x1]
  %v245 = vlaneseq
  %v246 = vshrl.u32 %v245, 7
  %v247 = vsub.s32 0, %v246
  %v248 = vrot.slane %v243, %v247
  %v250 = vmul.f32 %v181, %v248
  %v251 = vmul.f32 %v184, %v248
  %v252 = vmul.f32 %v189, %v248
  %v253 = vmul.f32 %v192, %v248
  %v254 = vmul.f32 %v197, %v248
  %v255 = vmul.f32 %v200, %v248
  %v256 = vmul.f32 %v205, %v248
  %v257 = vmul.f32 %v208, %v248
  %v258 = vmul.f32 %v213, %v248
  %v259 = vmul.f32 %v216, %v248
  %v260 = vmul.f32 %v221, %v248
  %v261 = vmul.f32 %v224, %v248
  %v262 = vmul.f32 %v229, %v248
  %v263 = vmul.f32 %v232, %v248
  %v264 = vmul.f32 %v237, %v248
  %v265 = vmul.f32 %v240, %v248
  %v266 = vld [vmem:[%s3] sm:$0x1]
  %v268 = vlaneseq
  %v269 = vshrl.u32 %v268, 7
  %v270 = vsub.s32 0, %v269
  %v271 = vrot.slane %v266, %v270
  %v273 = vadd.f32 %v250, %v271
  %v274 = vadd.f32 %v251, %v271
  %v275 = vadd.f32 %v252, %v271
  %v276 = vadd.f32 %v253, %v271
  %v277 = vadd.f32 %v254, %v271
  %v278 = vadd.f32 %v255, %v271
  %v279 = vadd.f32 %v256, %v271
  %v280 = vadd.f32 %v257, %v271
  %v281 = vadd.f32 %v258, %v271
  %v282 = vadd.f32 %v259, %v271
  %v283 = vadd.f32 %v260, %v271
  %v284 = vadd.f32 %v261, %v271
  %v285 = vadd.f32 %v262, %v271
  %v286 = vadd.f32 %v263, %v271
  %v287 = vadd.f32 %v264, %v271
  %v288 = vadd.f32 %v265, %v271
  %v289 = vxor.u32 %v273, 2147483648
  %v290 = vxor.u32 %v274, 2147483648
  %v291 = vxor.u32 %v275, 2147483648
  %v292 = vxor.u32 %v276, 2147483648
  %v293 = vxor.u32 %v277, 2147483648
  %v294 = vxor.u32 %v278, 2147483648
  %v295 = vxor.u32 %v279, 2147483648
  %v296 = vxor.u32 %v280, 2147483648
  %v297 = vxor.u32 %v281, 2147483648
  %v298 = vxor.u32 %v282, 2147483648
  %v299 = vxor.u32 %v283, 2147483648
  %v300 = vxor.u32 %v284, 2147483648
  %v301 = vxor.u32 %v285, 2147483648
  %v302 = vxor.u32 %v286, 2147483648
  %v303 = vxor.u32 %v287, 2147483648
  %v304 = vxor.u32 %v288, 2147483648
  %v305 = vmul.f32 %v289, 1.442695
  %v306 = vpow.pop %v305
  %v307 = vmul.f32 %v290, 1.442695
  %v308 = vpow.pop %v307
  %v309 = vmul.f32 %v291, 1.442695
  %v310 = vpow.pop %v309
  %v311 = vmul.f32 %v292, 1.442695
  %v312 = vpow.pop %v311
  %v313 = vmul.f32 %v293, 1.442695
  %v314 = vpow.pop %v313
  %v315 = vmul.f32 %v294, 1.442695
  %v316 = vpow.pop %v315
  %v317 = vmul.f32 %v295, 1.442695
  %v318 = vpow.pop %v317
  %v319 = vmul.f32 %v296, 1.442695
  %v320 = vpow.pop %v319
  %v321 = vmul.f32 %v297, 1.442695
  %v322 = vpow.pop %v321
  %v323 = vmul.f32 %v298, 1.442695
  %v324 = vpow.pop %v323
  %v325 = vmul.f32 %v299, 1.442695
  %v326 = vpow.pop %v325
  %v327 = vmul.f32 %v300, 1.442695
  %v328 = vpow.pop %v327
  %v329 = vmul.f32 %v301, 1.442695
  %v330 = vpow.pop %v329
  %v331 = vmul.f32 %v302, 1.442695
  %v332 = vpow.pop %v331
  %v333 = vmul.f32 %v303, 1.442695
  %v334 = vpow.pop %v333
  %v335 = vmul.f32 %v304, 1.442695
  %v336 = vpow.pop %v335
  %v337 = vadd.f32 %v306, 1.0
  %v338 = vadd.f32 %v308, 1.0
  %v339 = vadd.f32 %v310, 1.0
  %v340 = vadd.f32 %v312, 1.0
  %v341 = vadd.f32 %v314, 1.0
  %v342 = vadd.f32 %v316, 1.0
  %v343 = vadd.f32 %v318, 1.0
  %v344 = vadd.f32 %v320, 1.0
  %v345 = vadd.f32 %v322, 1.0
  %v346 = vadd.f32 %v324, 1.0
  %v347 = vadd.f32 %v326, 1.0
  %v348 = vadd.f32 %v328, 1.0
  %v349 = vadd.f32 %v330, 1.0
  %v350 = vadd.f32 %v332, 1.0
  %v351 = vadd.f32 %v334, 1.0
  %v352 = vadd.f32 %v336, 1.0
  %v353 = vrcp.pop %v337
  %v354 = vmul.f32 1.0, %v353
  %v355 = vrcp.pop %v338
  %v356 = vmul.f32 1.0, %v355
  %v357 = vrcp.pop %v339
  %v358 = vmul.f32 1.0, %v357
  %v359 = vrcp.pop %v340
  %v360 = vmul.f32 1.0, %v359
  %v361 = vrcp.pop %v341
  %v362 = vmul.f32 1.0, %v361
  %v363 = vrcp.pop %v342
  %v364 = vmul.f32 1.0, %v363
  %v365 = vrcp.pop %v343
  %v366 = vmul.f32 1.0, %v365
  %v367 = vrcp.pop %v344
  %v368 = vmul.f32 1.0, %v367
  %v369 = vrcp.pop %v345
  %v370 = vmul.f32 1.0, %v369
  %v371 = vrcp.pop %v346
  %v372 = vmul.f32 1.0, %v371
  %v373 = vrcp.pop %v347
  %v374 = vmul.f32 1.0, %v373
  %v375 = vrcp.pop %v348
  %v376 = vmul.f32 1.0, %v375
  %v377 = vrcp.pop %v349
  %v378 = vmul.f32 1.0, %v377
  %v379 = vrcp.pop %v350
  %v380 = vmul.f32 1.0, %v379
  %v381 = vrcp.pop %v351
  %v382 = vmul.f32 1.0, %v381
  %v383 = vrcp.pop %v352
  %v384 = vmul.f32 1.0, %v383
  %v385 = vmul.f32 %v273, %v354
  %v386 = vmul.f32 %v274, %v356
  %v387 = vmul.f32 %v275, %v358
  %v388 = vmul.f32 %v276, %v360
  %v389 = vmul.f32 %v277, %v362
  %v390 = vmul.f32 %v278, %v364
  %v391 = vmul.f32 %v279, %v366
  %v392 = vmul.f32 %v280, %v368
  %v393 = vmul.f32 %v281, %v370
  %v394 = vmul.f32 %v282, %v372
  %v395 = vmul.f32 %v283, %v374
  %v396 = vmul.f32 %v284, %v376
  %v397 = vmul.f32 %v285, %v378
  %v398 = vmul.f32 %v286, %v380
  %v399 = vmul.f32 %v287, %v382
  %v400 = vmul.f32 %v288, %v384
  %v401 = vpack.c.bf16 %v386, %v385
  %v402 = vpack.c.bf16 %v388, %v387
  %v403 = vpack.c.bf16 %v390, %v389
  %v404 = vpack.c.bf16 %v392, %v391
  %v405 = vpack.c.bf16 %v394, %v393
  %v406 = vpack.c.bf16 %v396, %v395
  %v407 = vpack.c.bf16 %v398, %v397
  %v408 = vpack.c.bf16 %v400, %v399
  %v417 = vunpack.c.l.b16 %v401
  %v418 = vunpack.c.h.b16 %v401
  %v419 = vunpack.c.l.b16 %v402
  %v420 = vunpack.c.h.b16 %v402
  %v421 = vunpack.c.l.b16 %v403
  %v422 = vunpack.c.h.b16 %v403
  %v423 = vunpack.c.l.b16 %v404
  %v424 = vunpack.c.h.b16 %v404
  %v425 = vunpack.c.l.b16 %v405
  %v426 = vunpack.c.h.b16 %v405
  %v427 = vunpack.c.l.b16 %v406
  %v428 = vunpack.c.h.b16 %v406
  %v429 = vunpack.c.l.b16 %v407
  %v430 = vunpack.c.h.b16 %v407
  %v431 = vunpack.c.l.b16 %v408
  %v432 = vunpack.c.h.b16 %v408
  %v433 = vpack.c.b16 %v417, %v417
  %v434 = vpack.c.b16 %v418, %v418
  %v435 = vpack.c.b16 %v419, %v419
  %v436 = vpack.c.b16 %v420, %v420
  %v437 = vpack.c.b16 %v421, %v421
  %v438 = vpack.c.b16 %v422, %v422
  %v439 = vpack.c.b16 %v423, %v423
  %v440 = vpack.c.b16 %v424, %v424
  %v441 = vpack.c.b16 %v425, %v425
  %v442 = vpack.c.b16 %v426, %v426
  %v443 = vpack.c.b16 %v427, %v427
  %v444 = vpack.c.b16 %v428, %v428
  %v445 = vpack.c.b16 %v429, %v429
  %v446 = vpack.c.b16 %v430, %v430
  %v447 = vpack.c.b16 %v431, %v431
  %v448 = vpack.c.b16 %v432, %v432
  %465 = vst [vmem:[%s4] sm:$0xf] %v433
  %466 = vst [vmem:[%s4 + $0x4] sm:$0xf] %v434
  %467 = vst [vmem:[%s4 + $0x8] sm:$0xf] %v435
  %468 = vst [vmem:[%s4 + $0xc] sm:$0xf] %v436
  %469 = vst [vmem:[%s4 + $0x10] sm:$0xf] %v437
  %470 = vst [vmem:[%s4 + $0x14] sm:$0xf] %v438
  %471 = vst [vmem:[%s4 + $0x18] sm:$0xf] %v439
  %472 = vst [vmem:[%s4 + $0x1c] sm:$0xf] %v440
  %473 = vst [vmem:[%s4 + $0x20] sm:$0xf] %v441
  %474 = vst [vmem:[%s4 + $0x24] sm:$0xf] %v442
  %475 = vst [vmem:[%s4 + $0x28] sm:$0xf] %v443
  %476 = vst [vmem:[%s4 + $0x2c] sm:$0xf] %v444
  %477 = vst [vmem:[%s4 + $0x30] sm:$0xf] %v445
  %478 = vst [vmem:[%s4 + $0x34] sm:$0xf] %v446
  %479 = vst [vmem:[%s4 + $0x38] sm:$0xf] %v447
  %480 = vst [vmem:[%s4 + $0x3c] sm:$0xf] %v448
  // Predicated region
  $region18: #{_lambda_.5} parent=0 // pred_check
    _
  $region19: #{_lambda_.5} parent=0 // pred_check_branch
    %482 = sbr.rel (0) target = $region21
  $region20: #{_lambda_.5} parent=0 // pred_region
    _
  $region21: #{_lambda_.5} parent=0 // pred_fallthru
    _
  // Predicated region
  $region22: #{_lambda_.5} parent=0 // pred_check
    _
  $region23: #{_lambda_.5} parent=0 // pred_check_branch
    %484 = sbr.rel (0) target = $region25
  $region24: #{_lambda_.5} parent=0 // pred_region
    _
  $region25: #{_lambda_.5} parent=0 // pred_fallthru
    _

// kernel: _lambda_.6
$region0: #{_lambda_.6}
  #allocation0 [shape = 'u32[]', space=smem, size = 0x4, offset = 0x4, fixed_abs, tag = 'smem constant byte address 0x4 - core index']
  #allocation1 [shape = 'u32[144,128]{1,0:T(1,128)}', space=vmem, size = 0x12000, scoped, tag = 'internal scratch']
  %s0 = inlined_call_operand.vmem [shape: bf16[2,10,10,128], index: 0, kind: input, shape index: {}]
  %s1 = inlined_call_operand.vmem [shape: f32[9,1,128], index: 1, kind: input, shape index: {}]
  %s2 = inlined_call_operand.vmem [shape: f32[1,128], index: 2, kind: input, shape index: {}]
  %s3 = inlined_call_operand.vmem [shape: f32[1,128], index: 3, kind: input, shape index: {}]
  %s4 = inlined_call_operand.vmem [shape: bf16[2,8,8,128], index: 4, kind: output, shape index: {0}]
  %s5 = inlined_call_operand.vmem [shape: f32[2,1,128], index: 5, kind: output, shape index: {1}]
  %6 = xla_tuple %s4, %s5
  %s7 = sld [smem:[#allocation0]]
  $region57: #{_lambda_.6} parent=0
    _
  %s9 = ssub.s32 1, %s7
  %s10 = scalar_select 0, %s9, %s7
  loop: start=0, step=1, limit=4
  $region2: #{_lambda_.6} parent=0 // loop_pre_header
    _
  $region3: #{_lambda_.6} parent=0 // loop_header
    %s12 = sphi 0, %s16
    %p13 = scmp.ge.s32.totalorder %s12, 4
    %s22 = sphi 0, %s24
    %s25 = sphi 0, %s22
    %s26 = sphi 0, %s25
    %s42 = sphi 0, %s26
    %s46 = sphi 0, %s46
    %s48 = sphi 0, %s46
    %s49 = sphi 0, %s48
    %s63 = sphi 0, %s49
    %s67 = sphi 0, %s67
    %s69 = sphi 0, %s67
    %s70 = sphi 0, %s69
    %s84 = sphi 0, %s70
    %s88 = sphi 0, %s88
    %s90 = sphi 0, %s88
    %s91 = sphi 0, %s90
    %s105 = sphi 0, %s91
    %s111 = sphi 0, %s113
    %s114 = sphi 0, %s111
    %s115 = sphi 0, %s114
    %s131 = sphi 0, %s115
    %s137 = sphi 0, %s139
    %s140 = sphi 0, %s137
    %s141 = sphi 0, %s140
    %s157 = sphi 0, %s141
  $region4: #{_lambda_.6} parent=0 // loop_header_branch
    %15 = sbr.rel (%p13) target = $region8
  $region5: #{_lambda_.6} parent=0 // loop_body
    %s17 = ssub.s32 %s12, 1
    %s18 = ssub.s32 %s12, 2
    %s19 = sadd.s32 %s12, 1
    %s20 = ssub.s32 %s12, %s19
    %p21 = scmp.eq.s32.totalorder %s20, 0
    %s23 = sadd.s32 %s22, 1
    %s24 = scalar_select %p21, %s22, %s23
    %p27 = pneg %p21
    %p28 = scmp.eq.s32.totalorder %s12, 1
    %p29 = por %p27, %p28
    %p30 = scmp.ne.s32.totalorder %s22, %s25
    %p31 = scmp.eq.s32.totalorder %s12, 0
    %p32 = por %p30, %p31
    %p33 = scmp.ne.s32.totalorder %s22, %s25
    %p34 = scmp.eq.s32.totalorder %s17, 1
    %p35 = por %p33, %p34
    %p36 = scmp.ne.s32.totalorder %s25, %s26
    %p37 = scmp.eq.s32.totalorder %s17, 0
    %p38 = por %p36, %p37
    %p39 = scmp.ne.s32.totalorder %s25, %s26
    %p40 = scmp.eq.s32.totalorder %s18, 1
    %p41 = por %p39, %p40
    %p43 = scmp.ne.s32.totalorder %s26, %s42
    %p44 = scmp.eq.s32.totalorder %s18, 0
    %p45 = por %p43, %p44
    %s47 = sadd.s32 %s46, 1
    %p50 = scmp.eq.s32.totalorder %s12, 1
    %p51 = scmp.ne.s32.totalorder %s46, %s48
    %p52 = scmp.eq.s32.totalorder %s12, 0
    %p53 = por %p51, %p52
    %p54 = scmp.ne.s32.totalorder %s46, %s48
    %p55 = scmp.eq.s32.totalorder %s17, 1
    %p56 = por %p54, %p55
    %p57 = scmp.ne.s32.totalorder %s48, %s49
    %p58 = scmp.eq.s32.totalorder %s17, 0
    %p59 = por %p57, %p58
    %p60 = scmp.ne.s32.totalorder %s48, %s49
    %p61 = scmp.eq.s32.totalorder %s18, 1
    %p62 = por %p60, %p61
    %p64 = scmp.ne.s32.totalorder %s49, %s63
    %p65 = scmp.eq.s32.totalorder %s18, 0
    %p66 = por %p64, %p65
    %s68 = sadd.s32 %s67, 1
    %p71 = scmp.eq.s32.totalorder %s12, 1
    %p72 = scmp.ne.s32.totalorder %s67, %s69
    %p73 = scmp.eq.s32.totalorder %s12, 0
    %p74 = por %p72, %p73
    %p75 = scmp.ne.s32.totalorder %s67, %s69
    %p76 = scmp.eq.s32.totalorder %s17, 1
    %p77 = por %p75, %p76
    %p78 = scmp.ne.s32.totalorder %s69, %s70
    %p79 = scmp.eq.s32.totalorder %s17, 0
    %p80 = por %p78, %p79
    %p81 = scmp.ne.s32.totalorder %s69, %s70
    %p82 = scmp.eq.s32.totalorder %s18, 1
    %p83 = por %p81, %p82
    %p85 = scmp.ne.s32.totalorder %s70, %s84
    %p86 = scmp.eq.s32.totalorder %s18, 0
    %p87 = por %p85, %p86
    %s89 = sadd.s32 %s88, 1
    %p92 = scmp.eq.s32.totalorder %s12, 1
    %p93 = scmp.ne.s32.totalorder %s88, %s90
    %p94 = scmp.eq.s32.totalorder %s12, 0
    %p95 = por %p93, %p94
    %p96 = scmp.ne.s32.totalorder %s88, %s90
    %p97 = scmp.eq.s32.totalorder %s17, 1
    %p98 = por %p96, %p97
    %p99 = scmp.ne.s32.totalorder %s90, %s91
    %p100 = scmp.eq.s32.totalorder %s17, 0
    %p101 = por %p99, %p100
    %p102 = scmp.ne.s32.totalorder %s90, %s91
    %p103 = scmp.eq.s32.totalorder %s18, 1
    %p104 = por %p102, %p103
    %p106 = scmp.ne.s32.totalorder %s91, %s105
    %p107 = scmp.eq.s32.totalorder %s18, 0
    %p108 = por %p106, %p107
    %s109 = ssub.s32 %s12, %s19
    %p110 = scmp.eq.s32.totalorder %s109, 0
    %s112 = sadd.s32 %s111, 1
    %s113 = scalar_select %p110, %s111, %s112
    %p116 = pneg %p110
    %p117 = scmp.eq.s32.totalorder %s12, 1
    %p118 = por %p116, %p117
    %p119 = scmp.ne.s32.totalorder %s111, %s114
    %p120 = scmp.eq.s32.totalorder %s12, 0
    %p121 = por %p119, %p120
    %p122 = scmp.ne.s32.totalorder %s111, %s114
    %p123 = scmp.eq.s32.totalorder %s17, 1
    %p124 = por %p122, %p123
    %p125 = scmp.ne.s32.totalorder %s114, %s115
    %p126 = scmp.eq.s32.totalorder %s17, 0
    %p127 = por %p125, %p126
    %p128 = scmp.ne.s32.totalorder %s114, %s115
    %p129 = scmp.eq.s32.totalorder %s18, 1
    %p130 = por %p128, %p129
    %p132 = scmp.ne.s32.totalorder %s115, %s131
    %p133 = scmp.eq.s32.totalorder %s18, 0
    %p134 = por %p132, %p133
    %s135 = ssub.s32 %s12, %s19
    %p136 = scmp.eq.s32.totalorder %s135, 0
    %s138 = sadd.s32 %s137, 1
    %s139 = scalar_select %p136, %s137, %s138
    %p142 = pneg %p136
    %p143 = scmp.eq.s32.totalorder %s12, 1
    %p144 = por %p142, %p143
    %p145 = scmp.ne.s32.totalorder %s137, %s140
    %p146 = scmp.eq.s32.totalorder %s12, 0
    %p147 = por %p145, %p146
    %p148 = scmp.ne.s32.totalorder %s137, %s140
    %p149 = scmp.eq.s32.totalorder %s17, 1
    %p150 = por %p148, %p149
    %p151 = scmp.ne.s32.totalorder %s140, %s141
    %p152 = scmp.eq.s32.totalorder %s17, 0
    %p153 = por %p151, %p152
    %p154 = scmp.ne.s32.totalorder %s140, %s141
    %p155 = scmp.eq.s32.totalorder %s18, 1
    %p156 = por %p154, %p155
    %p158 = scmp.ne.s32.totalorder %s141, %s157
    %p159 = scmp.eq.s32.totalorder %s18, 0
    %p160 = por %p158, %p159
    %p161 = scmp.le.s32.totalorder 1, %s12
    %p162 = scmp.lt.s32.totalorder %s12, 3
    %p163 = pnand %p161, %p162
    %p164 = pneg %p163
    // Predicated region
    $region9: #{_lambda_.6} parent=5 // pred_check
      _
    $region10: #{_lambda_.6} parent=5 // pred_check_branch
      %166 = sbr.rel (%p163) target = $region12
    $region11: #{_lambda_.6} parent=5 // pred_region
      %s167 = ssub.s32 %s12, 1
      // Predicated region
      $region13: #{_lambda_.6} parent=11 // pred_check
        %p168 = pneg %p59
      $region14: #{_lambda_.6} parent=11 // pred_check_branch
        %170 = sbr.rel (%p168) target = $region16
      $region15: #{_lambda_.6} parent=11 // pred_region
        _
      $region16: #{_lambda_.6} parent=11 // pred_fallthru
        _
      // Predicated region
      $region17: #{_lambda_.6} parent=11 // pred_check
        %p171 = pneg %p80
      $region18: #{_lambda_.6} parent=11 // pred_check_branch
        %173 = sbr.rel (%p171) target = $region20
      $region19: #{_lambda_.6} parent=11 // pred_region
        _
      $region20: #{_lambda_.6} parent=11 // pred_fallthru
        _
      // Predicated region
      $region21: #{_lambda_.6} parent=11 // pred_check
        %p174 = pneg %p101
      $region22: #{_lambda_.6} parent=11 // pred_check_branch
        %176 = sbr.rel (%p174) target = $region24
      $region23: #{_lambda_.6} parent=11 // pred_region
        _
      $region24: #{_lambda_.6} parent=11 // pred_fallthru
        _
    $region12: #{_lambda_.6} parent=5 // pred_fallthru
      _
    %p177 = scmp.lt.s32.totalorder %s12, 2
    // Predicated region
    $region25: #{_lambda_.6} parent=5 // pred_check
      %p178 = pneg %p177
    $region26: #{_lambda_.6} parent=5 // pred_check_branch
      %180 = sbr.rel (%p178) target = $region28
    $region27: #{_lambda_.6} parent=5 // pred_region
      // Predicated region
      $region29: #{_lambda_.6} parent=27 // pred_check
        %p181 = pneg %p32
      $region30: #{_lambda_.6} parent=27 // pred_check_branch
        %183 = sbr.rel (%p181) target = $region32
      $region31: #{_lambda_.6} parent=27 // pred_region
        %p184 = scmp.lt.s32.totalorder %s12, 1
        %s185 = scalar_select %p184, %s12, 1
        %s186 = smul.addr %s185, 20
        %s187 = smul.addr %s186, 4
        %s188 = scalar_lea.vmem %s0, %s187
      $region32: #{_lambda_.6} parent=27 // pred_fallthru
        _
    $region28: #{_lambda_.6} parent=5 // pred_fallthru
      _
    %p189 = scmp.le.s32.totalorder 1, %s12
    %p190 = scmp.lt.s32.totalorder %s12, 3
    %p191 = pnand %p189, %p190
    %p192 = pneg %p191
    // Predicated region
    $region33: #{_lambda_.6} parent=5 // pred_check
      _
    $region34: #{_lambda_.6} parent=5 // pred_check_branch
      %194 = sbr.rel (%p191) target = $region36
    $region35: #{_lambda_.6} parent=5 // pred_region
      %s195 = ssub.s32 %s12, 1
      %p196 = scmp.lt.s32.totalorder %s17, 1
      %s197 = scalar_select %p196, %s17, 1
      %s198 = smul.addr %s197, 20
      %s199 = smul.addr %s198, 4
      %s200 = scalar_lea.vmem %s0, %s199
      %p201 = pneg %p38
      %p202 = pneg %p35
      %p203 = pneg %p59
      %p204 = pneg %p56
      %p205 = pneg %p80
      %p206 = pneg %p77
      %p207 = pneg %p101
      %p208 = pneg %p98
      %p209 = pneg %p127
      %p210 = pneg %p124
      %p211 = scmp.lt.s32.totalorder %s17, 1
      %s212 = scalar_select %p211, %s17, 1
      %s213 = smul.addr %s212, 8
      %s214 = smul.addr %s213, 4
      %s215 = scalar_lea.vmem %s4, %s214
      %p216 = pneg %p153
      %p217 = pneg %p150
      %p218 = scmp.lt.s32.totalorder %s17, 1
      %s219 = scalar_select %p218, %s17, 1
      %s220 = scalar_lea.vmem %s5, %s219
      %p221 = scmp.lt.s32.totalorder %s17, 1
      %s222 = scalar_select %p221, %s17, 1
      %s223 = smul.addr %s222, 20
      %s224 = smul.addr %s223, 4
      %s225 = scalar_lea.vmem %s0, %s224
      %p226 = scmp.lt.s32.totalorder %s17, 1
      %s227 = scalar_select %p226, %s17, 1
      %s228 = smul.addr %s227, 8
      %s229 = smul.addr %s228, 4
      %s230 = scalar_lea.vmem %s4, %s229
      %p231 = scmp.lt.s32.totalorder %s17, 1
      %s232 = scalar_select %p231, %s17, 1
      %s233 = scalar_lea.vmem %s5, %s232
      %v234 = vld [vmem:[%s225] sm:$0xf]
      %v235 = vld [vmem:[%s225 + $0x4] sm:$0x1]
      %v236 = vld [vmem:[%s225 + $0x8] sm:$0xf]
      %v237 = vld [vmem:[%s225 + $0xc] sm:$0x1]
      %v238 = vld [vmem:[%s225 + $0x10] sm:$0xf]
      %v239 = vld [vmem:[%s225 + $0x14] sm:$0x1]
      %v240 = vld [vmem:[%s225 + $0x18] sm:$0xf]
      %v241 = vld [vmem:[%s225 + $0x1c] sm:$0x1]
      %v242 = vld [vmem:[%s225 + $0x20] sm:$0xf]
      %v243 = vld [vmem:[%s225 + $0x24] sm:$0x1]
      %v244 = vld [vmem:[%s225 + $0x28] sm:$0xf]
      %v245 = vld [vmem:[%s225 + $0x2c] sm:$0x1]
      %v246 = vld [vmem:[%s225 + $0x30] sm:$0xf]
      %v247 = vld [vmem:[%s225 + $0x34] sm:$0x1]
      %v248 = vld [vmem:[%s225 + $0x38] sm:$0xf]
      %v249 = vld [vmem:[%s225 + $0x3c] sm:$0x1]
      %v250 = vld [vmem:[%s225 + $0x40] sm:$0xf]
      %v251 = vld [vmem:[%s225 + $0x44] sm:$0x1]
      %v252 = vld [vmem:[%s225 + $0x48] sm:$0xf]
      %v253 = vld [vmem:[%s225 + $0x4c] sm:$0x1]
      %v254 = vunpack.c.l.bf16 %v234
      %v255 = vunpack.c.l.bf16 %v235
      %v256 = vunpack.c.l.bf16 %v236
      %v257 = vunpack.c.l.bf16 %v237
      %v258 = vunpack.c.l.bf16 %v238
      %v259 = vunpack.c.l.bf16 %v239
      %v260 = vunpack.c.l.bf16 %v240
      %v261 = vunpack.c.l.bf16 %v241
      %v262 = vunpack.c.l.bf16 %v242
      %v263 = vunpack.c.l.bf16 %v243
      %v264 = vunpack.c.l.bf16 %v244
      %v265 = vunpack.c.l.bf16 %v245
      %v266 = vunpack.c.l.bf16 %v246
      %v267 = vunpack.c.l.bf16 %v247
      %v268 = vunpack.c.l.bf16 %v248
      %v269 = vunpack.c.l.bf16 %v249
      %v270 = vunpack.c.l.bf16 %v250
      %v271 = vunpack.c.l.bf16 %v251
      %v272 = vunpack.c.l.bf16 %v252
      %v273 = vunpack.c.l.bf16 %v253
      %v274 = vld [vmem:[%s1] sm:$0x1]
      %v276 = vlaneseq
      %v277 = vshrl.u32 %v276, 7
      %v278 = vsub.s32 0, %v277
      %v279 = vrot.slane %v274, %v278
      %v281 = vmul.f32 %v254, %v279
      %v282 = vmul.f32 %v256, %v279
      %v283 = vmul.f32 %v258, %v279
      %v284 = vmul.f32 %v260, %v279
      %v285 = vmul.f32 %v262, %v279
      %v286 = vmul.f32 %v264, %v279
      %v287 = vmul.f32 %v266, %v279
      %v288 = vmul.f32 %v268, %v279
      %v289 = vadd.f32 %v281, 0.0
      %v290 = vadd.f32 %v282, 0.0
      %v291 = vadd.f32 %v283, 0.0
      %v292 = vadd.f32 %v284, 0.0
      %v293 = vadd.f32 %v285, 0.0
      %v294 = vadd.f32 %v286, 0.0
      %v295 = vadd.f32 %v287, 0.0
      %v296 = vadd.f32 %v288, 0.0
      %s297 = scalar_lea.vmem %s1, 1
      %v298 = vld [vmem:[%s297] sm:$0x1]
      %v300 = vlaneseq
      %v301 = vshrl.u32 %v300, 7
      %v302 = vsub.s32 0, %v301
      %v303 = vrot.slane %v298, %v302
      %v305 = vmul.f32 %v254, %v303
      %v306 = vmul.f32 %v255, %v303
      %v307 = vmul.f32 %v256, %v303
      %v308 = vmul.f32 %v257, %v303
      %v309 = vmul.f32 %v258, %v303
      %v310 = vmul.f32 %v259, %v303
      %v311 = vmul.f32 %v260, %v303
      %v312 = vmul.f32 %v261, %v303
      %v313 = vmul.f32 %v262, %v303
      %v314 = vmul.f32 %v263, %v303
      %v315 = vmul.f32 %v264, %v303
      %v316 = vmul.f32 %v265, %v303
      %v317 = vmul.f32 %v266, %v303
      %v318 = vmul.f32 %v267, %v303
      %v319 = vmul.f32 %v268, %v303
      %v320 = vmul.f32 %v269, %v303
      %vm337 = vcmask 1046528
      %v338 = vrot.slane %v305, 1
      %v339 = vrot.slane %v306, 1
      %v340 = vsel %vm337, %v338, %v339
      %v341 = vrot.slane %v307, 1
      %v342 = vrot.slane %v308, 1
      %v343 = vsel %vm337, %v341, %v342
      %v344 = vrot.slane %v309, 1
      %v345 = vrot.slane %v310, 1
      %v346 = vsel %vm337, %v344, %v345
      %v347 = vrot.slane %v311, 1
      %v348 = vrot.slane %v312, 1
      %v349 = vsel %vm337, %v347, %v348
      %v350 = vrot.slane %v313, 1
      %v351 = vrot.slane %v314, 1
      %v352 = vsel %vm337, %v350, %v351
      %v353 = vrot.slane %v315, 1
      %v354 = vrot.slane %v316, 1
      %v355 = vsel %vm337, %v353, %v354
      %v356 = vrot.slane %v317, 1
      %v357 = vrot.slane %v318, 1
      %v358 = vsel %vm337, %v356, %v357
      %v359 = vrot.slane %v319, 1
      %v360 = vrot.slane %v320, 1
      %v361 = vsel %vm337, %v359, %v360
      %v370 = vadd.f32 %v289, %v340
      %v371 = vadd.f32 %v290, %v343
      %v372 = vadd.f32 %v291, %v346
      %v373 = vadd.f32 %v292, %v349
      %v374 = vadd.f32 %v293, %v352
      %v375 = vadd.f32 %v294, %v355
      %v376 = vadd.f32 %v295, %v358
      %v377 = vadd.f32 %v296, %v361
      %s378 = scalar_lea.vmem %s1, 2
      %v379 = vld [vmem:[%s378] sm:$0x1]
      %v381 = vlaneseq
      %v382 = vshrl.u32 %v381, 7
      %v383 = vsub.s32 0, %v382
      %v384 = vrot.slane %v379, %v383
      %v386 = vmul.f32 %v254, %v384
      %v387 = vmul.f32 %v255, %v384
      %v388 = vmul.f32 %v256, %v384
      %v389 = vmul.f32 %v257, %v384
      %v390 = vmul.f32 %v258, %v384
      %v391 = vmul.f32 %v259, %v384
      %v392 = vmul.f32 %v260, %v384
      %v393 = vmul.f32 %v261, %v384
      %v394 = vmul.f32 %v262, %v384
      %v395 = vmul.f32 %v263, %v384
      %v396 = vmul.f32 %v264, %v384
      %v397 = vmul.f32 %v265, %v384
      %v398 = vmul.f32 %v266, %v384
      %v399 = vmul.f32 %v267, %v384
      %v400 = vmul.f32 %v268, %v384
      %v401 = vmul.f32 %v269, %v384
      %vm418 = vcmask 1045504
      %v419 = vrot.slane %v386, 2
      %v420 = vrot.slane %v387, 2
      %v421 = vsel %vm418, %v419, %v420
      %v422 = vrot.slane %v388, 2
      %v423 = vrot.slane %v389, 2
      %v424 = vsel %vm418, %v422, %v423
      %v425 = vrot.slane %v390, 2
      %v426 = vrot.slane %v391, 2
      %v427 = vsel %vm418, %v425, %v426
      %v428 = vrot.slane %v392, 2
      %v429 = vrot.slane %v393, 2
      %v430 = vsel %vm418, %v428, %v429
      %v431 = vrot.slane %v394, 2
      %v432 = vrot.slane %v395, 2
      %v433 = vsel %vm418, %v431, %v432
      %v434 = vrot.slane %v396, 2
      %v435 = vrot.slane %v397, 2
      %v436 = vsel %vm418, %v434, %v435
      %v437 = vrot.slane %v398, 2
      %v438 = vrot.slane %v399, 2
      %v439 = vsel %vm418, %v437, %v438
      %v440 = vrot.slane %v400, 2
      %v441 = vrot.slane %v401, 2
      %v442 = vsel %vm418, %v440, %v441
      %v451 = vadd.f32 %v370, %v421
      %v452 = vadd.f32 %v371, %v424
      %v453 = vadd.f32 %v372, %v427
      %v454 = vadd.f32 %v373, %v430
      %v455 = vadd.f32 %v374, %v433
      %v456 = vadd.f32 %v375, %v436
      %v457 = vadd.f32 %v376, %v439
      %v458 = vadd.f32 %v377, %v442
      %s459 = scalar_lea.vmem %s1, 3
      %v460 = vld [vmem:[%s459] sm:$0x1]
      %v462 = vlaneseq
      %v463 = vshrl.u32 %v462, 7
      %v464 = vsub.s32 0, %v463
      %v465 = vrot.slane %v460, %v464
      %v467 = vmul.f32 %v256, %v465
      %v468 = vmul.f32 %v258, %v465
      %v469 = vmul.f32 %v260, %v465
      %v470 = vmul.f32 %v262, %v465
      %v471 = vmul.f32 %v264, %v465
      %v472 = vmul.f32 %v266, %v465
      %v473 = vmul.f32 %v268, %v465
      %v474 = vmul.f32 %v270, %v465
      %v475 = vadd.f32 %v451, %v467
      %v476 = vadd.f32 %v452, %v468
      %v477 = vadd.f32 %v453, %v469
      %v478 = vadd.f32 %v454, %v470
      %v479 = vadd.f32 %v455, %v471
      %v480 = vadd.f32 %v456, %v472
      %v481 = vadd.f32 %v457, %v473
      %v482 = vadd.f32 %v458, %v474
      %s483 = scalar_lea.vmem %s1, 4
      %v484 = vld [vmem:[%s483] sm:$0x1]
      %v486 = vlaneseq
      %v487 = vshrl.u32 %v486, 7
      %v488 = vsub.s32 0, %v487
      %v489 = vrot.slane %v484, %v488
      %v491 = vmul.f32 %v256, %v489
      %v492 = vmul.f32 %v257, %v489
      %v493 = vmul.f32 %v258, %v489
      %v494 = vmul.f32 %v259, %v489
      %v495 = vmul.f32 %v260, %v489
      %v496 = vmul.f32 %v261, %v489
      %v497 = vmul.f32 %v262, %v489
      %v498 = vmul.f32 %v263, %v489
      %v499 = vmul.f32 %v264, %v489
      %v500 = vmul.f32 %v265, %v489
      %v501 = vmul.f32 %v266, %v489
      %v502 = vmul.f32 %v267, %v489
      %v503 = vmul.f32 %v268, %v489
      %v504 = vmul.f32 %v269, %v489
      %v505 = vmul.f32 %v270, %v489
      %v506 = vmul.f32 %v271, %v489
      %v523 = vrot.slane %v491, 1
      %v524 = vrot.slane %v492, 1
      %v525 = vsel %vm337, %v523, %v524
      %v526 = vrot.slane %v493, 1
      %v527 = vrot.slane %v494, 1
      %v528 = vsel %vm337, %v526, %v527
      %v529 = vrot.slane %v495, 1
      %v530 = vrot.slane %v496, 1
      %v531 = vsel %vm337, %v529, %v530
      %v532 = vrot.slane %v497, 1
      %v533 = vrot.slane %v498, 1
      %v534 = vsel %vm337, %v532, %v533
      %v535 = vrot.slane %v499, 1
      %v536 = vrot.slane %v500, 1
      %v537 = vsel %vm337, %v535, %v536
      %v538 = vrot.slane %v501, 1
      %v539 = vrot.slane %v502, 1
      %v540 = vsel %vm337, %v538, %v539
      %v541 = vrot.slane %v503, 1
      %v542 = vrot.slane %v504, 1
      %v543 = vsel %vm337, %v541, %v542
      %v544 = vrot.slane %v505, 1
      %v545 = vrot.slane %v506, 1
      %v546 = vsel %vm337, %v544, %v545
      %v555 = vadd.f32 %v475, %v525
      %v556 = vadd.f32 %v476, %v528
      %v557 = vadd.f32 %v477, %v531
      %v558 = vadd.f32 %v478, %v534
      %v559 = vadd.f32 %v479, %v537
      %v560 = vadd.f32 %v480, %v540
      %v561 = vadd.f32 %v481, %v543
      %v562 = vadd.f32 %v482, %v546
      %s563 = scalar_lea.vmem %s1, 5
      %v564 = vld [vmem:[%s563] sm:$0x1]
      %v566 = vlaneseq
      %v567 = vshrl.u32 %v566, 7
      %v568 = vsub.s32 0, %v567
      %v569 = vrot.slane %v564, %v568
      %v571 = vmul.f32 %v256, %v569
      %v572 = vmul.f32 %v257, %v569
      %v573 = vmul.f32 %v258, %v569
      %v574 = vmul.f32 %v259, %v569
      %v575 = vmul.f32 %v260, %v569
      %v576 = vmul.f32 %v261, %v569
      %v577 = vmul.f32 %v262, %v569
      %v578 = vmul.f32 %v263, %v569
      %v579 = vmul.f32 %v264, %v569
      %v580 = vmul.f32 %v265, %v569
      %v581 = vmul.f32 %v266, %v569
      %v582 = vmul.f32 %v267, %v569
      %v583 = vmul.f32 %v268, %v569
      %v584 = vmul.f32 %v269, %v569
      %v585 = vmul.f32 %v270, %v569
      %v586 = vmul.f32 %v271, %v569
      %v603 = vrot.slane %v571, 2
      %v604 = vrot.slane %v572, 2
      %v605 = vsel %vm418, %v603, %v604
      %v606 = vrot.slane %v573, 2
      %v607 = vrot.slane %v574, 2
      %v608 = vsel %vm418, %v606, %v607
      %v609 = vrot.slane %v575, 2
      %v610 = vrot.slane %v576, 2
      %v611 = vsel %vm418, %v609, %v610
      %v612 = vrot.slane %v577, 2
      %v613 = vrot.slane %v578, 2
      %v614 = vsel %vm418, %v612, %v613
      %v615 = vrot.slane %v579, 2
      %v616 = vrot.slane %v580, 2
      %v617 = vsel %vm418, %v615, %v616
      %v618 = vrot.slane %v581, 2
      %v619 = vrot.slane %v582, 2
      %v620 = vsel %vm418, %v618, %v619
      %v621 = vrot.slane %v583, 2
      %v622 = vrot.slane %v584, 2
      %v623 = vsel %vm418, %v621, %v622
      %v624 = vrot.slane %v585, 2
      %v625 = vrot.slane %v586, 2
      %v626 = vsel %vm418, %v624, %v625
      %v635 = vadd.f32 %v555, %v605
      %v636 = vadd.f32 %v556, %v608
      %v637 = vadd.f32 %v557, %v611
      %v638 = vadd.f32 %v558, %v614
      %v639 = vadd.f32 %v559, %v617
      %v640 = vadd.f32 %v560, %v620
      %v641 = vadd.f32 %v561, %v623
      %v642 = vadd.f32 %v562, %v626
      %s643 = scalar_lea.vmem %s1, 6
      %v644 = vld [vmem:[%s643] sm:$0x1]
      %v646 = vlaneseq
      %v647 = vshrl.u32 %v646, 7
      %v648 = vsub.s32 0, %v647
      %v649 = vrot.slane %v644, %v648
      %v651 = vmul.f32 %v258, %v649
      %v652 = vmul.f32 %v260, %v649
      %v653 = vmul.f32 %v262, %v649
      %v654 = vmul.f32 %v264, %v649
      %v655 = vmul.f32 %v266, %v649
      %v656 = vmul.f32 %v268, %v649
      %v657 = vmul.f32 %v270, %v649
      %v658 = vmul.f32 %v272, %v649
      %v659 = vadd.f32 %v635, %v651
      %v660 = vadd.f32 %v636, %v652
      %v661 = vadd.f32 %v637, %v653
      %v662 = vadd.f32 %v638, %v654
      %v663 = vadd.f32 %v639, %v655
      %v664 = vadd.f32 %v640, %v656
      %v665 = vadd.f32 %v641, %v657
      %v666 = vadd.f32 %v642, %v658
      %s667 = scalar_lea.vmem %s1, 7
      %v668 = vld [vmem:[%s667] sm:$0x1]
      %v670 = vlaneseq
      %v671 = vshrl.u32 %v670, 7
      %v672 = vsub.s32 0, %v671
      %v673 = vrot.slane %v668, %v672
      %v675 = vmul.f32 %v258, %v673
      %v676 = vmul.f32 %v259, %v673
      %v677 = vmul.f32 %v260, %v673
      %v678 = vmul.f32 %v261, %v673
      %v679 = vmul.f32 %v262, %v673
      %v680 = vmul.f32 %v263, %v673
      %v681 = vmul.f32 %v264, %v673
      %v682 = vmul.f32 %v265, %v673
      %v683 = vmul.f32 %v266, %v673
      %v684 = vmul.f32 %v267, %v673
      %v685 = vmul.f32 %v268, %v673
      %v686 = vmul.f32 %v269, %v673
      %v687 = vmul.f32 %v270, %v673
      %v688 = vmul.f32 %v271, %v673
      %v689 = vmul.f32 %v272, %v673
      %v690 = vmul.f32 %v273, %v673
      %v707 = vrot.slane %v675, 1
      %v708 = vrot.slane %v676, 1
      %v709 = vsel %vm337, %v707, %v708
      %v710 = vrot.slane %v677, 1
      %v711 = vrot.slane %v678, 1
      %v712 = vsel %vm337, %v710, %v711
      %v713 = vrot.slane %v679, 1
      %v714 = vrot.slane %v680, 1
      %v715 = vsel %vm337, %v713, %v714
      %v716 = vrot.slane %v681, 1
      %v717 = vrot.slane %v682, 1
      %v718 = vsel %vm337, %v716, %v717
      %v719 = vrot.slane %v683, 1
      %v720 = vrot.slane %v684, 1
      %v721 = vsel %vm337, %v719, %v720
      %v722 = vrot.slane %v685, 1
      %v723 = vrot.slane %v686, 1
      %v724 = vsel %vm337, %v722, %v723
      %v725 = vrot.slane %v687, 1
      %v726 = vrot.slane %v688, 1
      %v727 = vsel %vm337, %v725, %v726
      %v728 = vrot.slane %v689, 1
      %v729 = vrot.slane %v690, 1
      %v730 = vsel %vm337, %v728, %v729
      %v739 = vadd.f32 %v659, %v709
      %v740 = vadd.f32 %v660, %v712
      %v741 = vadd.f32 %v661, %v715
      %v742 = vadd.f32 %v662, %v718
      %v743 = vadd.f32 %v663, %v721
      %v744 = vadd.f32 %v664, %v724
      %v745 = vadd.f32 %v665, %v727
      %v746 = vadd.f32 %v666, %v730
      %s747 = scalar_lea.vmem %s1, 8
      %v748 = vld [vmem:[%s747] sm:$0x1]
      %v750 = vlaneseq
      %v751 = vshrl.u32 %v750, 7
      %v752 = vsub.s32 0, %v751
      %v753 = vrot.slane %v748, %v752
      %v755 = vmul.f32 %v258, %v753
      %v756 = vmul.f32 %v259, %v753
      %v757 = vmul.f32 %v260, %v753
      %v758 = vmul.f32 %v261, %v753
      %v759 = vmul.f32 %v262, %v753
      %v760 = vmul.f32 %v263, %v753
      %v761 = vmul.f32 %v264, %v753
      %v762 = vmul.f32 %v265, %v753
      %v763 = vmul.f32 %v266, %v753
      %v764 = vmul.f32 %v267, %v753
      %v765 = vmul.f32 %v268, %v753
      %v766 = vmul.f32 %v269, %v753
      %v767 = vmul.f32 %v270, %v753
      %v768 = vmul.f32 %v271, %v753
      %v769 = vmul.f32 %v272, %v753
      %v770 = vmul.f32 %v273, %v753
      %v787 = vrot.slane %v755, 2
      %v788 = vrot.slane %v756, 2
      %v789 = vsel %vm418, %v787, %v788
      %v790 = vrot.slane %v757, 2
      %v791 = vrot.slane %v758, 2
      %v792 = vsel %vm418, %v790, %v791
      %v793 = vrot.slane %v759, 2
      %v794 = vrot.slane %v760, 2
      %v795 = vsel %vm418, %v793, %v794
      %v796 = vrot.slane %v761, 2
      %v797 = vrot.slane %v762, 2
      %v798 = vsel %vm418, %v796, %v797
      %v799 = vrot.slane %v763, 2
      %v800 = vrot.slane %v764, 2
      %v801 = vsel %vm418, %v799, %v800
      %v802 = vrot.slane %v765, 2
      %v803 = vrot.slane %v766, 2
      %v804 = vsel %vm418, %v802, %v803
      %v805 = vrot.slane %v767, 2
      %v806 = vrot.slane %v768, 2
      %v807 = vsel %vm418, %v805, %v806
      %v808 = vrot.slane %v769, 2
      %v809 = vrot.slane %v770, 2
      %v810 = vsel %vm418, %v808, %v809
      %v819 = vadd.f32 %v739, %v789
      %v820 = vadd.f32 %v740, %v792
      %v821 = vadd.f32 %v741, %v795
      %v822 = vadd.f32 %v742, %v798
      %v823 = vadd.f32 %v743, %v801
      %v824 = vadd.f32 %v744, %v804
      %v825 = vadd.f32 %v745, %v807
      %v826 = vadd.f32 %v746, %v810
      %v827 = vld [vmem:[%s2] sm:$0x1]
      %v829 = vlaneseq
      %v830 = vshrl.u32 %v829, 7
      %v831 = vsub.s32 0, %v830
      %v832 = vrot.slane %v827, %v831
      %v834 = vmul.f32 %v819, %v832
      %v835 = vmul.f32 %v820, %v832
      %v836 = vmul.f32 %v821, %v832
      %v837 = vmul.f32 %v822, %v832
      %v838 = vmul.f32 %v823, %v832
      %v839 = vmul.f32 %v824, %v832
      %v840 = vmul.f32 %v825, %v832
      %v841 = vmul.f32 %v826, %v832
      %v842 = vld [vmem:[%s3] sm:$0x1]
      %v844 = vlaneseq
      %v845 = vshrl.u32 %v844, 7
      %v846 = vsub.s32 0, %v845
      %v847 = vrot.slane %v842, %v846
      %v849 = vadd.f32 %v834, %v847
      %v850 = vadd.f32 %v835, %v847
      %v851 = vadd.f32 %v836, %v847
      %v852 = vadd.f32 %v837, %v847
      %v853 = vadd.f32 %v838, %v847
      %v854 = vadd.f32 %v839, %v847
      %v855 = vadd.f32 %v840, %v847
      %v856 = vadd.f32 %v841, %v847
      %v857 = vxor.u32 %v849, 2147483648
      %v858 = vxor.u32 %v850, 2147483648
      %v859 = vxor.u32 %v851, 2147483648
      %v860 = vxor.u32 %v852, 2147483648
      %v861 = vxor.u32 %v853, 2147483648
      %v862 = vxor.u32 %v854, 2147483648
      %v863 = vxor.u32 %v855, 2147483648
      %v864 = vxor.u32 %v856, 2147483648
      %v865 = vmul.f32 %v857, 1.442695
      %v866 = vpow.pop %v865
      %v867 = vmul.f32 %v858, 1.442695
      %v868 = vpow.pop %v867
      %v869 = vmul.f32 %v859, 1.442695
      %v870 = vpow.pop %v869
      %v871 = vmul.f32 %v860, 1.442695
      %v872 = vpow.pop %v871
      %v873 = vmul.f32 %v861, 1.442695
      %v874 = vpow.pop %v873
      %v875 = vmul.f32 %v862, 1.442695
      %v876 = vpow.pop %v875
      %v877 = vmul.f32 %v863, 1.442695
      %v878 = vpow.pop %v877
      %v879 = vmul.f32 %v864, 1.442695
      %v880 = vpow.pop %v879
      %v881 = vadd.f32 %v866, 1.0
      %v882 = vadd.f32 %v868, 1.0
      %v883 = vadd.f32 %v870, 1.0
      %v884 = vadd.f32 %v872, 1.0
      %v885 = vadd.f32 %v874, 1.0
      %v886 = vadd.f32 %v876, 1.0
      %v887 = vadd.f32 %v878, 1.0
      %v888 = vadd.f32 %v880, 1.0
      %v889 = vrcp.pop %v881
      %v890 = vmul.f32 1.0, %v889
      %v891 = vrcp.pop %v882
      %v892 = vmul.f32 1.0, %v891
      %v893 = vrcp.pop %v883
      %v894 = vmul.f32 1.0, %v893
      %v895 = vrcp.pop %v884
      %v896 = vmul.f32 1.0, %v895
      %v897 = vrcp.pop %v885
      %v898 = vmul.f32 1.0, %v897
      %v899 = vrcp.pop %v886
      %v900 = vmul.f32 1.0, %v899
      %v901 = vrcp.pop %v887
      %v902 = vmul.f32 1.0, %v901
      %v903 = vrcp.pop %v888
      %v904 = vmul.f32 1.0, %v903
      %v905 = vmul.f32 %v849, %v890
      %v906 = vmul.f32 %v850, %v892
      %v907 = vmul.f32 %v851, %v894
      %v908 = vmul.f32 %v852, %v896
      %v909 = vmul.f32 %v853, %v898
      %v910 = vmul.f32 %v854, %v900
      %v911 = vmul.f32 %v855, %v902
      %v912 = vmul.f32 %v856, %v904
      %v913 = vpack.c.bf16 %v905, %v905
      %v914 = vpack.c.bf16 %v906, %v906
      %v915 = vpack.c.bf16 %v907, %v907
      %v916 = vpack.c.bf16 %v908, %v908
      %v917 = vpack.c.bf16 %v909, %v909
      %v918 = vpack.c.bf16 %v910, %v910
      %v919 = vpack.c.bf16 %v911, %v911
      %v920 = vpack.c.bf16 %v912, %v912
      %921 = vst [vmem:[%s230] sm:$0xf] %v913
      %922 = vst [vmem:[%s230 + $0x4] sm:$0xf] %v914
      %923 = vst [vmem:[%s230 + $0x8] sm:$0xf] %v915
      %924 = vst [vmem:[%s230 + $0xc] sm:$0xf] %v916
      %925 = vst [vmem:[%s230 + $0x10] sm:$0xf] %v917
      %926 = vst [vmem:[%s230 + $0x14] sm:$0xf] %v918
      %927 = vst [vmem:[%s230 + $0x18] sm:$0xf] %v919
      %928 = vst [vmem:[%s230 + $0x1c] sm:$0xf] %v920
      %v929 = vadd.f32 %v905, %v906
      %v930 = vadd.f32 %v929, %v907
      %v931 = vadd.f32 %v930, %v908
      %v932 = vadd.f32 %v931, %v909
      %v933 = vadd.f32 %v932, %v910
      %v934 = vadd.f32 %v933, %v911
      %v935 = vadd.f32 %v934, %v912
      %v936 = vrot.slane %v935, 4
      %v937 = vadd.f32 %v935, %v936
      %v938 = vrot.slane %v937, 2
      %v939 = vadd.f32 %v937, %v938
      %v940 = vrot.slane %v939, 1
      %v941 = vadd.f32 %v939, %v940
      %942 = vst [vmem:[%s233] sm:$0x1] %v941
      %p943 = scmp.lt.s32.totalorder %s17, 1
      %s944 = scalar_select %p943, %s17, 1
      %s945 = smul.addr %s944, 8
      %s946 = smul.addr %s945, 4
      %s947 = scalar_lea.vmem %s4, %s946
      %p948 = scmp.lt.s32.totalorder %s17, 1
      %s949 = scalar_select %p948, %s17, 1
      %s950 = scalar_lea.vmem %s5, %s949
      // Predicated region
      $region37: #{_lambda_.6} parent=35 // pred_check
        %p951 = pneg %p124
      $region38: #{_lambda_.6} parent=35 // pred_check_branch
        %953 = sbr.rel (%p951) target = $region40
      $region39: #{_lambda_.6} parent=35 // pred_region
        _
      $region40: #{_lambda_.6} parent=35 // pred_fallthru
        _
      // Predicated region
      $region41: #{_lambda_.6} parent=35 // pred_check
        %p954 = pneg %p150
      $region42: #{_lambda_.6} parent=35 // pred_check_branch
        %956 = sbr.rel (%p954) target = $region44
      $region43: #{_lambda_.6} parent=35 // pred_region
        _
      $region44: #{_lambda_.6} parent=35 // pred_fallthru
        _
    $region36: #{_lambda_.6} parent=5 // pred_fallthru
      _
    %p957 = scmp.le.s32.totalorder 2, %s12
    // Predicated region
    $region45: #{_lambda_.6} parent=5 // pred_check
      %p958 = pneg %p957
    $region46: #{_lambda_.6} parent=5 // pred_check_branch
      %960 = sbr.rel (%p958) target = $region48
    $region47: #{_lambda_.6} parent=5 // pred_region
      %s961 = ssub.s32 %s12, 2
      // Predicated region
      $region49: #{_lambda_.6} parent=47 // pred_check
        %p962 = pneg %p130
      $region50: #{_lambda_.6} parent=47 // pred_check_branch
        %964 = sbr.rel (%p962) target = $region52
      $region51: #{_lambda_.6} parent=47 // pred_region
        %p965 = scmp.lt.s32.totalorder %s18, 1
        %s966 = scalar_select %p965, %s18, 1
        %s967 = smul.addr %s966, 8
        %s968 = smul.addr %s967, 4
        %s969 = scalar_lea.vmem %s4, %s968
      $region52: #{_lambda_.6} parent=47 // pred_fallthru
        _
      // Predicated region
      $region53: #{_lambda_.6} parent=47 // pred_check
        %p970 = pneg %p156
      $region54: #{_lambda_.6} parent=47 // pred_check_branch
        %972 = sbr.rel (%p970) target = $region56
      $region55: #{_lambda_.6} parent=47 // pred_region
        %p973 = scmp.lt.s32.totalorder %s18, 1
        %s974 = scalar_select %p973, %s18, 1
        %s975 = scalar_lea.vmem %s5, %s974
      $region56: #{_lambda_.6} parent=47 // pred_fallthru
        _
    $region48: #{_lambda_.6} parent=5 // pred_fallthru
      _
  $region6: #{_lambda_.6} parent=0 // loop_footer
    %s16 = sadd.s32 1, %s12
  $region7: #{_lambda_.6} parent=0 // loop_footer_branch
    %11 = sbr.rel target = $region3
  $region8: #{_lambda_.6} parent=0 // loop_exit
    _

// kernel: _lambda_.7
$region0: #{_lambda_.7}
  #allocation0 [shape = 'u32[]', space=smem, size = 0x4, offset = 0x4, fixed_abs, tag = 'smem constant byte address 0x4 - core index']
  #allocation1 [shape = 'u32[144,128]{1,0:T(1,128)}', space=vmem, size = 0x12000, scoped, tag = 'internal scratch']
  #allocation2 [shape = 'f32[1,128]{1,0:T(1,128)}', space=vmem, size = 0x200, scoped, tag = 'scratch operand']
  #allocation3 [shape = 'f32[1,128]{1,0:T(1,128)}', space=vmem, size = 0x200, scoped, tag = 'scratch operand']
  %s0 = inlined_call_operand.vmem [shape: bf16[2,64,128], index: 0, kind: input, shape index: {}]
  %s1 = inlined_call_operand.vmem [shape: f32[2,1,128], index: 1, kind: input, shape index: {}]
  %s2 = inlined_call_operand.vmem [shape: f32[128,8], index: 2, kind: input, shape index: {}]
  %s3 = inlined_call_operand.vmem [shape: f32[1,8], index: 3, kind: input, shape index: {}]
  %s4 = inlined_call_operand.vmem [shape: f32[8,128], index: 4, kind: input, shape index: {}]
  %s5 = inlined_call_operand.vmem [shape: f32[1,128], index: 5, kind: input, shape index: {}]
  %s6 = inlined_call_operand.vmem [shape: bf16[128,128], index: 6, kind: input, shape index: {}]
  %s7 = inlined_call_operand.vmem [shape: f32[1,128], index: 7, kind: input, shape index: {}]
  %s8 = inlined_call_operand.vmem [shape: bf16[128,512], index: 8, kind: input, shape index: {}]
  %s9 = inlined_call_operand.vmem [shape: f32[1,512], index: 9, kind: input, shape index: {}]
  %s10 = inlined_call_operand.vmem [shape: bf16[512,128], index: 10, kind: input, shape index: {}]
  %s11 = inlined_call_operand.vmem [shape: f32[1,128], index: 11, kind: input, shape index: {}]
  %s12 = inlined_call_operand.hbm [shape: f32[2,1,128], index: 12, kind: output, shape index: {}]
  %s13 = sld [smem:[#allocation0]]
  $region89: #{_lambda_.7} parent=0
    _
  %s15 = ssub.s32 1, %s13
  %s16 = scalar_select 0, %s15, %s13
  $region1: #{_lambda_.7} parent=0
    #allocation4 [shape = 'u8[1024]{0}', space=vmem, size = 0x400, scoped, tag = 'output window, operand 0']
    #allocation5 [shape = 's32[2]{0}', space=sflag, size = 0x8, scoped, tag = 'scoped memory for _lambda_.7']
    %17 = vsyncpa [#allocation5], 0
    %s18 = scalar_lea.sflag [#allocation5], 1
    %19 = vsyncpa %s18, 0
    loop: start=0, step=1, limit=4
    $region2: #{_lambda_.7} parent=1 // loop_pre_header
      _
    $region3: #{_lambda_.7} parent=1 // loop_header
      %s21 = sphi 0, %s25
      %p22 = scmp.ge.s32.totalorder %s21, 4
      %s28 = sphi 0, %s40
      %s29 = sphi 0, %s36
      %s30 = sphi 0, %s28
      %s31 = sphi 0, %s29
      %s32 = sphi 0, %s30
      %s33 = sphi 0, %s31
      %s45 = sphi 0, %s47
      %s48 = sphi 0, %s45
      %s49 = sphi 0, %s48
      %s65 = sphi 0, %s49
      %s71 = sphi 0, %s73
      %s74 = sphi 0, %s71
      %s75 = sphi 0, %s74
      %s91 = sphi 0, %s75
      %s95 = sphi 0, %s95
      %s97 = sphi 0, %s95
      %s98 = sphi 0, %s97
      %s112 = sphi 0, %s98
      %s116 = sphi 0, %s116
      %s118 = sphi 0, %s116
      %s119 = sphi 0, %s118
      %s133 = sphi 0, %s119
      %s137 = sphi 0, %s137
      %s139 = sphi 0, %s137
      %s140 = sphi 0, %s139
      %s154 = sphi 0, %s140
      %s158 = sphi 0, %s158
      %s160 = sphi 0, %s158
      %s161 = sphi 0, %s160
      %s175 = sphi 0, %s161
      %s179 = sphi 0, %s179
      %s181 = sphi 0, %s179
      %s182 = sphi 0, %s181
      %s196 = sphi 0, %s182
      %s200 = sphi 0, %s200
      %s202 = sphi 0, %s200
      %s203 = sphi 0, %s202
      %s217 = sphi 0, %s203
      %s221 = sphi 0, %s221
      %s223 = sphi 0, %s221
      %s224 = sphi 0, %s223
      %s238 = sphi 0, %s224
      %s242 = sphi 0, %s242
      %s244 = sphi 0, %s242
      %s245 = sphi 0, %s244
      %s259 = sphi 0, %s245
      %s263 = sphi 0, %s263
      %s265 = sphi 0, %s263
      %s266 = sphi 0, %s265
      %s280 = sphi 0, %s266
      %s284 = sphi 0, %s284
      %s286 = sphi 0, %s284
      %s287 = sphi 0, %s286
      %s301 = sphi 0, %s287
      %s307 = sphi 0, %s309
      %s310 = sphi 0, %s307
      %s311 = sphi 0, %s310
      %s327 = sphi 0, %s311
    $region4: #{_lambda_.7} parent=1 // loop_header_branch
      %24 = sbr.rel (%p22) target = $region8
    $region5: #{_lambda_.7} parent=1 // loop_body
      %s26 = ssub.s32 %s21, 1
      %s27 = ssub.s32 %s21, 2
      %s34 = sadd.s32 1, %s29
      %p35 = scmp.ge.s32.totalorder %s34, 1
      %s36 = scalar_select %p35, 0, %s34
      %s37 = sadd.s32 1, %s28
      %s38 = scalar_select %p35, %s37, %s28
      %p39 = scmp.ge.s32.totalorder %s38, 2
      %s40 = scalar_select %p39, 0, %s38
      %s41 = ssub.s32 %s28, %s40
      %s42 = ssub.s32 %s29, %s36
      %s43 = sor.u32 %s41, %s42
      %p44 = scmp.eq.s32.totalorder %s43, 0
      %s46 = sadd.s32 %s45, 1
      %s47 = scalar_select %p44, %s45, %s46
      %p50 = pneg %p44
      %p51 = scmp.eq.s32.totalorder %s21, 1
      %p52 = por %p50, %p51
      %p53 = scmp.ne.s32.totalorder %s45, %s48
      %p54 = scmp.eq.s32.totalorder %s21, 0
      %p55 = por %p53, %p54
      %p56 = scmp.ne.s32.totalorder %s45, %s48
      %p57 = scmp.eq.s32.totalorder %s26, 1
      %p58 = por %p56, %p57
      %p59 = scmp.ne.s32.totalorder %s48, %s49
      %p60 = scmp.eq.s32.totalorder %s26, 0
      %p61 = por %p59, %p60
      %p62 = scmp.ne.s32.totalorder %s48, %s49
      %p63 = scmp.eq.s32.totalorder %s27, 1
      %p64 = por %p62, %p63
      %p66 = scmp.ne.s32.totalorder %s49, %s65
      %p67 = scmp.eq.s32.totalorder %s27, 0
      %p68 = por %p66, %p67
      %s69 = ssub.s32 %s28, %s40
      %p70 = scmp.eq.s32.totalorder %s69, 0
      %s72 = sadd.s32 %s71, 1
      %s73 = scalar_select %p70, %s71, %s72
      %p76 = pneg %p70
      %p77 = scmp.eq.s32.totalorder %s21, 1
      %p78 = por %p76, %p77
      %p79 = scmp.ne.s32.totalorder %s71, %s74
      %p80 = scmp.eq.s32.totalorder %s21, 0
      %p81 = por %p79, %p80
      %p82 = scmp.ne.s32.totalorder %s71, %s74
      %p83 = scmp.eq.s32.totalorder %s26, 1
      %p84 = por %p82, %p83
      %p85 = scmp.ne.s32.totalorder %s74, %s75
      %p86 = scmp.eq.s32.totalorder %s26, 0
      %p87 = por %p85, %p86
      %p88 = scmp.ne.s32.totalorder %s74, %s75
      %p89 = scmp.eq.s32.totalorder %s27, 1
      %p90 = por %p88, %p89
      %p92 = scmp.ne.s32.totalorder %s75, %s91
      %p93 = scmp.eq.s32.totalorder %s27, 0
      %p94 = por %p92, %p93
      %s96 = sadd.s32 %s95, 1
      %p99 = scmp.eq.s32.totalorder %s21, 1
      %p100 = scmp.ne.s32.totalorder %s95, %s97
      %p101 = scmp.eq.s32.totalorder %s21, 0
      %p102 = por %p100, %p101
      %p103 = scmp.ne.s32.totalorder %s95, %s97
      %p104 = scmp.eq.s32.totalorder %s26, 1
      %p105 = por %p103, %p104
      %p106 = scmp.ne.s32.totalorder %s97, %s98
      %p107 = scmp.eq.s32.totalorder %s26, 0
      %p108 = por %p106, %p107
      %p109 = scmp.ne.s32.totalorder %s97, %s98
      %p110 = scmp.eq.s32.totalorder %s27, 1
      %p111 = por %p109, %p110
      %p113 = scmp.ne.s32.totalorder %s98, %s112
      %p114 = scmp.eq.s32.totalorder %s27, 0
      %p115 = por %p113, %p114
      %s117 = sadd.s32 %s116, 1
      %p120 = scmp.eq.s32.totalorder %s21, 1
      %p121 = scmp.ne.s32.totalorder %s116, %s118
      %p122 = scmp.eq.s32.totalorder %s21, 0
      %p123 = por %p121, %p122
      %p124 = scmp.ne.s32.totalorder %s116, %s118
      %p125 = scmp.eq.s32.totalorder %s26, 1
      %p126 = por %p124, %p125
      %p127 = scmp.ne.s32.totalorder %s118, %s119
      %p128 = scmp.eq.s32.totalorder %s26, 0
      %p129 = por %p127, %p128
      %p130 = scmp.ne.s32.totalorder %s118, %s119
      %p131 = scmp.eq.s32.totalorder %s27, 1
      %p132 = por %p130, %p131
      %p134 = scmp.ne.s32.totalorder %s119, %s133
      %p135 = scmp.eq.s32.totalorder %s27, 0
      %p136 = por %p134, %p135
      %s138 = sadd.s32 %s137, 1
      %p141 = scmp.eq.s32.totalorder %s21, 1
      %p142 = scmp.ne.s32.totalorder %s137, %s139
      %p143 = scmp.eq.s32.totalorder %s21, 0
      %p144 = por %p142, %p143
      %p145 = scmp.ne.s32.totalorder %s137, %s139
      %p146 = scmp.eq.s32.totalorder %s26, 1
      %p147 = por %p145, %p146
      %p148 = scmp.ne.s32.totalorder %s139, %s140
      %p149 = scmp.eq.s32.totalorder %s26, 0
      %p150 = por %p148, %p149
      %p151 = scmp.ne.s32.totalorder %s139, %s140
      %p152 = scmp.eq.s32.totalorder %s27, 1
      %p153 = por %p151, %p152
      %p155 = scmp.ne.s32.totalorder %s140, %s154
      %p156 = scmp.eq.s32.totalorder %s27, 0
      %p157 = por %p155, %p156
      %s159 = sadd.s32 %s158, 1
      %p162 = scmp.eq.s32.totalorder %s21, 1
      %p163 = scmp.ne.s32.totalorder %s158, %s160
      %p164 = scmp.eq.s32.totalorder %s21, 0
      %p165 = por %p163, %p164
      %p166 = scmp.ne.s32.totalorder %s158, %s160
      %p167 = scmp.eq.s32.totalorder %s26, 1
      %p168 = por %p166, %p167
      %p169 = scmp.ne.s32.totalorder %s160, %s161
      %p170 = scmp.eq.s32.totalorder %s26, 0
      %p171 = por %p169, %p170
      %p172 = scmp.ne.s32.totalorder %s160, %s161
      %p173 = scmp.eq.s32.totalorder %s27, 1
      %p174 = por %p172, %p173
      %p176 = scmp.ne.s32.totalorder %s161, %s175
      %p177 = scmp.eq.s32.totalorder %s27, 0
      %p178 = por %p176, %p177
      %s180 = sadd.s32 %s179, 1
      %p183 = scmp.eq.s32.totalorder %s21, 1
      %p184 = scmp.ne.s32.totalorder %s179, %s181
      %p185 = scmp.eq.s32.totalorder %s21, 0
      %p186 = por %p184, %p185
      %p187 = scmp.ne.s32.totalorder %s179, %s181
      %p188 = scmp.eq.s32.totalorder %s26, 1
      %p189 = por %p187, %p188
      %p190 = scmp.ne.s32.totalorder %s181, %s182
      %p191 = scmp.eq.s32.totalorder %s26, 0
      %p192 = por %p190, %p191
      %p193 = scmp.ne.s32.totalorder %s181, %s182
      %p194 = scmp.eq.s32.totalorder %s27, 1
      %p195 = por %p193, %p194
      %p197 = scmp.ne.s32.totalorder %s182, %s196
      %p198 = scmp.eq.s32.totalorder %s27, 0
      %p199 = por %p197, %p198
      %s201 = sadd.s32 %s200, 1
      %p204 = scmp.eq.s32.totalorder %s21, 1
      %p205 = scmp.ne.s32.totalorder %s200, %s202
      %p206 = scmp.eq.s32.totalorder %s21, 0
      %p207 = por %p205, %p206
      %p208 = scmp.ne.s32.totalorder %s200, %s202
      %p209 = scmp.eq.s32.totalorder %s26, 1
      %p210 = por %p208, %p209
      %p211 = scmp.ne.s32.totalorder %s202, %s203
      %p212 = scmp.eq.s32.totalorder %s26, 0
      %p213 = por %p211, %p212
      %p214 = scmp.ne.s32.totalorder %s202, %s203
      %p215 = scmp.eq.s32.totalorder %s27, 1
      %p216 = por %p214, %p215
      %p218 = scmp.ne.s32.totalorder %s203, %s217
      %p219 = scmp.eq.s32.totalorder %s27, 0
      %p220 = por %p218, %p219
      %s222 = sadd.s32 %s221, 1
      %p225 = scmp.eq.s32.totalorder %s21, 1
      %p226 = scmp.ne.s32.totalorder %s221, %s223
      %p227 = scmp.eq.s32.totalorder %s21, 0
      %p228 = por %p226, %p227
      %p229 = scmp.ne.s32.totalorder %s221, %s223
      %p230 = scmp.eq.s32.totalorder %s26, 1
      %p231 = por %p229, %p230
      %p232 = scmp.ne.s32.totalorder %s223, %s224
      %p233 = scmp.eq.s32.totalorder %s26, 0
      %p234 = por %p232, %p233
      %p235 = scmp.ne.s32.totalorder %s223, %s224
      %p236 = scmp.eq.s32.totalorder %s27, 1
      %p237 = por %p235, %p236
      %p239 = scmp.ne.s32.totalorder %s224, %s238
      %p240 = scmp.eq.s32.totalorder %s27, 0
      %p241 = por %p239, %p240
      %s243 = sadd.s32 %s242, 1
      %p246 = scmp.eq.s32.totalorder %s21, 1
      %p247 = scmp.ne.s32.totalorder %s242, %s244
      %p248 = scmp.eq.s32.totalorder %s21, 0
      %p249 = por %p247, %p248
      %p250 = scmp.ne.s32.totalorder %s242, %s244
      %p251 = scmp.eq.s32.totalorder %s26, 1
      %p252 = por %p250, %p251
      %p253 = scmp.ne.s32.totalorder %s244, %s245
      %p254 = scmp.eq.s32.totalorder %s26, 0
      %p255 = por %p253, %p254
      %p256 = scmp.ne.s32.totalorder %s244, %s245
      %p257 = scmp.eq.s32.totalorder %s27, 1
      %p258 = por %p256, %p257
      %p260 = scmp.ne.s32.totalorder %s245, %s259
      %p261 = scmp.eq.s32.totalorder %s27, 0
      %p262 = por %p260, %p261
      %s264 = sadd.s32 %s263, 1
      %p267 = scmp.eq.s32.totalorder %s21, 1
      %p268 = scmp.ne.s32.totalorder %s263, %s265
      %p269 = scmp.eq.s32.totalorder %s21, 0
      %p270 = por %p268, %p269
      %p271 = scmp.ne.s32.totalorder %s263, %s265
      %p272 = scmp.eq.s32.totalorder %s26, 1
      %p273 = por %p271, %p272
      %p274 = scmp.ne.s32.totalorder %s265, %s266
      %p275 = scmp.eq.s32.totalorder %s26, 0
      %p276 = por %p274, %p275
      %p277 = scmp.ne.s32.totalorder %s265, %s266
      %p278 = scmp.eq.s32.totalorder %s27, 1
      %p279 = por %p277, %p278
      %p281 = scmp.ne.s32.totalorder %s266, %s280
      %p282 = scmp.eq.s32.totalorder %s27, 0
      %p283 = por %p281, %p282
      %s285 = sadd.s32 %s284, 1
      %p288 = scmp.eq.s32.totalorder %s21, 1
      %p289 = scmp.ne.s32.totalorder %s284, %s286
      %p290 = scmp.eq.s32.totalorder %s21, 0
      %p291 = por %p289, %p290
      %p292 = scmp.ne.s32.totalorder %s284, %s286
      %p293 = scmp.eq.s32.totalorder %s26, 1
      %p294 = por %p292, %p293
      %p295 = scmp.ne.s32.totalorder %s286, %s287
      %p296 = scmp.eq.s32.totalorder %s26, 0
      %p297 = por %p295, %p296
      %p298 = scmp.ne.s32.totalorder %s286, %s287
      %p299 = scmp.eq.s32.totalorder %s27, 1
      %p300 = por %p298, %p299
      %p302 = scmp.ne.s32.totalorder %s287, %s301
      %p303 = scmp.eq.s32.totalorder %s27, 0
      %p304 = por %p302, %p303
      %s305 = ssub.s32 %s28, %s40
      %p306 = scmp.eq.s32.totalorder %s305, 0
      %s308 = sadd.s32 %s307, 1
      %s309 = scalar_select %p306, %s307, %s308
      %p312 = pneg %p306
      %p313 = scmp.eq.s32.totalorder %s21, 1
      %p314 = por %p312, %p313
      %p315 = scmp.ne.s32.totalorder %s307, %s310
      %p316 = scmp.eq.s32.totalorder %s21, 0
      %p317 = por %p315, %p316
      %p318 = scmp.ne.s32.totalorder %s307, %s310
      %p319 = scmp.eq.s32.totalorder %s26, 1
      %p320 = por %p318, %p319
      %p321 = scmp.ne.s32.totalorder %s310, %s311
      %p322 = scmp.eq.s32.totalorder %s26, 0
      %p323 = por %p321, %p322
      %p324 = scmp.ne.s32.totalorder %s310, %s311
      %p325 = scmp.eq.s32.totalorder %s27, 1
      %p326 = por %p324, %p325
      %p328 = scmp.ne.s32.totalorder %s311, %s327
      %p329 = scmp.eq.s32.totalorder %s27, 0
      %p330 = por %p328, %p329
      %p331 = scmp.le.s32.totalorder 1, %s21
      %p332 = scmp.lt.s32.totalorder %s21, 3
      %p333 = pnand %p331, %p332
      %p334 = pneg %p333
      // Predicated region
      $region9: #{_lambda_.7} parent=5 // pred_check
        _
      $region10: #{_lambda_.7} parent=5 // pred_check_branch
        %336 = sbr.rel (%p333) target = $region12
      $region11: #{_lambda_.7} parent=5 // pred_region
        %s337 = ssub.s32 %s21, 1
        // Predicated region
        $region13: #{_lambda_.7} parent=11 // pred_check
          %p338 = pneg %p108
        $region14: #{_lambda_.7} parent=11 // pred_check_branch
          %340 = sbr.rel (%p338) target = $region16
        $region15: #{_lambda_.7} parent=11 // pred_region
          _
        $region16: #{_lambda_.7} parent=11 // pred_fallthru
          _
        // Predicated region
        $region17: #{_lambda_.7} parent=11 // pred_check
          %p341 = pneg %p129
        $region18: #{_lambda_.7} parent=11 // pred_check_branch
          %343 = sbr.rel (%p341) target = $region20
        $region19: #{_lambda_.7} parent=11 // pred_region
          _
        $region20: #{_lambda_.7} parent=11 // pred_fallthru
          _
        // Predicated region
        $region21: #{_lambda_.7} parent=11 // pred_check
          %p344 = pneg %p150
        $region22: #{_lambda_.7} parent=11 // pred_check_branch
          %346 = sbr.rel (%p344) target = $region24
        $region23: #{_lambda_.7} parent=11 // pred_region
          _
        $region24: #{_lambda_.7} parent=11 // pred_fallthru
          _
        // Predicated region
        $region25: #{_lambda_.7} parent=11 // pred_check
          %p347 = pneg %p171
        $region26: #{_lambda_.7} parent=11 // pred_check_branch
          %349 = sbr.rel (%p347) target = $region28
        $region27: #{_lambda_.7} parent=11 // pred_region
          _
        $region28: #{_lambda_.7} parent=11 // pred_fallthru
          _
        // Predicated region
        $region29: #{_lambda_.7} parent=11 // pred_check
          %p350 = pneg %p192
        $region30: #{_lambda_.7} parent=11 // pred_check_branch
          %352 = sbr.rel (%p350) target = $region32
        $region31: #{_lambda_.7} parent=11 // pred_region
          _
        $region32: #{_lambda_.7} parent=11 // pred_fallthru
          _
        // Predicated region
        $region33: #{_lambda_.7} parent=11 // pred_check
          %p353 = pneg %p213
        $region34: #{_lambda_.7} parent=11 // pred_check_branch
          %355 = sbr.rel (%p353) target = $region36
        $region35: #{_lambda_.7} parent=11 // pred_region
          _
        $region36: #{_lambda_.7} parent=11 // pred_fallthru
          _
        // Predicated region
        $region37: #{_lambda_.7} parent=11 // pred_check
          %p356 = pneg %p234
        $region38: #{_lambda_.7} parent=11 // pred_check_branch
          %358 = sbr.rel (%p356) target = $region40
        $region39: #{_lambda_.7} parent=11 // pred_region
          _
        $region40: #{_lambda_.7} parent=11 // pred_fallthru
          _
        // Predicated region
        $region41: #{_lambda_.7} parent=11 // pred_check
          %p359 = pneg %p255
        $region42: #{_lambda_.7} parent=11 // pred_check_branch
          %361 = sbr.rel (%p359) target = $region44
        $region43: #{_lambda_.7} parent=11 // pred_region
          _
        $region44: #{_lambda_.7} parent=11 // pred_fallthru
          _
        // Predicated region
        $region45: #{_lambda_.7} parent=11 // pred_check
          %p362 = pneg %p276
        $region46: #{_lambda_.7} parent=11 // pred_check_branch
          %364 = sbr.rel (%p362) target = $region48
        $region47: #{_lambda_.7} parent=11 // pred_region
          _
        $region48: #{_lambda_.7} parent=11 // pred_fallthru
          _
        // Predicated region
        $region49: #{_lambda_.7} parent=11 // pred_check
          %p365 = pneg %p297
        $region50: #{_lambda_.7} parent=11 // pred_check_branch
          %367 = sbr.rel (%p365) target = $region52
        $region51: #{_lambda_.7} parent=11 // pred_region
          _
        $region52: #{_lambda_.7} parent=11 // pred_fallthru
          _
      $region12: #{_lambda_.7} parent=5 // pred_fallthru
        _
      %p368 = scmp.lt.s32.totalorder %s21, 2
      // Predicated region
      $region53: #{_lambda_.7} parent=5 // pred_check
        %p369 = pneg %p368
      $region54: #{_lambda_.7} parent=5 // pred_check_branch
        %371 = sbr.rel (%p369) target = $region56
      $region55: #{_lambda_.7} parent=5 // pred_region
        // Predicated region
        $region57: #{_lambda_.7} parent=55 // pred_check
          %p372 = pneg %p55
        $region58: #{_lambda_.7} parent=55 // pred_check_branch
          %374 = sbr.rel (%p372) target = $region60
        $region59: #{_lambda_.7} parent=55 // pred_region
          %s375 = smul.u32 8, %s29
          %p376 = scmp.lt.s32.totalorder %s28, 1
          %s377 = scalar_select %p376, %s28, 1
          %p378 = scmp.lt.s32.totalorder %s375, 7
          %s379 = scalar_select %p378, %s375, 7
          %s380 = smul.addr %s377, 8
          %s381 = sadd.s32 %s379, %s380
          %s382 = smul.addr %s381, 4
          %s383 = scalar_lea.vmem %s0, %s382
          %s384 = smul.u32 8, %s29
        $region60: #{_lambda_.7} parent=55 // pred_fallthru
          _
        // Predicated region
        $region61: #{_lambda_.7} parent=55 // pred_check
          %p385 = pneg %p81
        $region62: #{_lambda_.7} parent=55 // pred_check_branch
          %387 = sbr.rel (%p385) target = $region64
        $region63: #{_lambda_.7} parent=55 // pred_region
          %p388 = scmp.lt.s32.totalorder %s28, 1
          %s389 = scalar_select %p388, %s28, 1
          %s390 = scalar_lea.vmem %s1, %s389
        $region64: #{_lambda_.7} parent=55 // pred_fallthru
          _
      $region56: #{_lambda_.7} parent=5 // pred_fallthru
        _
      %p391 = scmp.le.s32.totalorder 1, %s21
      %p392 = scmp.lt.s32.totalorder %s21, 3
      %p393 = pnand %p391, %p392
      %p394 = pneg %p393
      // Predicated region
      $region65: #{_lambda_.7} parent=5 // pred_check
        _
      $region66: #{_lambda_.7} parent=5 // pred_check_branch
        %396 = sbr.rel (%p393) target = $region68
      $region67: #{_lambda_.7} parent=5 // pred_region
        %s397 = ssub.s32 %s21, 1
        %s398 = smul.u32 8, %s31
        %p399 = scmp.lt.s32.totalorder %s30, 1
        %s400 = scalar_select %p399, %s30, 1
        %p401 = scmp.lt.s32.totalorder %s398, 7
        %s402 = scalar_select %p401, %s398, 7
        %s403 = smul.addr %s400, 8
        %s404 = sadd.s32 %s402, %s403
        %s405 = smul.addr %s404, 4
        %s406 = scalar_lea.vmem %s0, %s405
        %p407 = pneg %p61
        %p408 = pneg %p58
        %p409 = scmp.lt.s32.totalorder %s30, 1
        %s410 = scalar_select %p409, %s30, 1
        %s411 = scalar_lea.vmem %s1, %s410
        %p412 = pneg %p87
        %p413 = pneg %p84
        %p414 = pneg %p108
        %p415 = pneg %p105
        %p416 = pneg %p129
        %p417 = pneg %p126
        %p418 = pneg %p150
        %p419 = pneg %p147
        %p420 = pneg %p171
        %p421 = pneg %p168
        %p422 = pneg %p192
        %p423 = pneg %p189
        %p424 = pneg %p213
        %p425 = pneg %p210
        %p426 = pneg %p234
        %p427 = pneg %p231
        %p428 = pneg %p255
        %p429 = pneg %p252
        %p430 = pneg %p276
        %p431 = pneg %p273
        %p432 = pneg %p297
        %p433 = pneg %p294
        %p434 = pneg %p323
        %p435 = pneg %p320
        %s436 = sand.u32 %s310, 1
        %s437 = scalar_lea.sflag [#allocation5], %s436
        %s438 = sand.u32 %s310, 1
        %s439 = scalar_lea.vmem [#allocation4], %s438
        %s440 = smul.u32 8, %s31
        %p441 = scmp.lt.s32.totalorder %s30, 1
        %s442 = scalar_select %p441, %s30, 1
        %p443 = scmp.lt.s32.totalorder %s440, 7
        %s444 = scalar_select %p443, %s440, 7
        %s445 = smul.addr %s442, 8
        %s446 = sadd.s32 %s444, %s445
        %s447 = smul.addr %s446, 4
        %s448 = scalar_lea.vmem %s0, %s447
        %s449 = smul.u32 8, %s31
        %p450 = scmp.lt.s32.totalorder %s30, 1
        %s451 = scalar_select %p450, %s30, 1
        %s452 = scalar_lea.vmem %s1, %s451
        %p454 = scmp.eq.s32.totalorder %s31, 0
        // Predicated region
        $region69: #{_lambda_.7} parent=67 // pred_check
          %p455 = pneg %p454
        $region70: #{_lambda_.7} parent=67 // pred_check_branch
          %457 = sbr.rel (%p455) target = $region72
        $region71: #{_lambda_.7} parent=67 // pred_region
          %v458 = vld [vmem:[%s452] sm:$0x1]
          %v459 = vmul.f32 %v458, 0.015625
          %v460 = vld [vmem:[%s2] sm:$0xff]
          %v461 = vld [vmem:[%s2 + $0x8] sm:$0xff]
          %v462 = vld [vmem:[%s2 + $0x10] sm:$0xff]
          %v463 = vld [vmem:[%s2 + $0x18] sm:$0xff]
          %v464 = vld [vmem:[%s2 + $0x20] sm:$0xff]
          %v465 = vld [vmem:[%s2 + $0x28] sm:$0xff]
          %v466 = vld [vmem:[%s2 + $0x30] sm:$0xff]
          %v467 = vld [vmem:[%s2 + $0x38] sm:$0xff]
          %v468 = vld [vmem:[%s2 + $0x40] sm:$0xff]
          %v469 = vld [vmem:[%s2 + $0x48] sm:$0xff]
          %v470 = vld [vmem:[%s2 + $0x50] sm:$0xff]
          %v471 = vld [vmem:[%s2 + $0x58] sm:$0xff]
          %v472 = vld [vmem:[%s2 + $0x60] sm:$0xff]
          %v473 = vld [vmem:[%s2 + $0x68] sm:$0xff]
          %v474 = vld [vmem:[%s2 + $0x70] sm:$0xff]
          %v475 = vld [vmem:[%s2 + $0x78] sm:$0xff]
          %v476 = vld [vmem:[%s3] sm:$0x1]
          %477 = vmatprep.subr.mxu0 0.0
          %478 = vmatpush1.msra.mxu0 %v460
          %479 = vmatprep.subr.mxu0 0.0
          %480 = vmatpush1.msra.mxu0 %v461
          %481 = vmatprep.subr.mxu0 0.0
          %482 = vmatpush1.msra.mxu0 %v462
          %483 = vmatprep.subr.mxu0 0.0
          %484 = vmatpush1.msra.mxu0 %v463
          %485 = vmatprep.subr.mxu0 0.0
          %486 = vmatpush1.msra.mxu0 %v464
          %487 = vmatprep.subr.mxu0 0.0
          %488 = vmatpush1.msra.mxu0 %v465
          %489 = vmatprep.subr.mxu0 0.0
          %490 = vmatpush1.msra.mxu0 %v466
          %491 = vmatprep.subr.mxu0 0.0
          %492 = vmatpush1.msra.mxu0 %v467
          %493 = vmatprep.subr.mxu0 0.0
          %494 = vmatpush1.msra.mxu0 %v468
          %495 = vmatprep.subr.mxu0 0.0
          %496 = vmatpush1.msra.mxu0 %v469
          %497 = vmatprep.subr.mxu0 0.0
          %498 = vmatpush1.msra.mxu0 %v470
          %499 = vmatprep.subr.mxu0 0.0
          %500 = vmatpush1.msra.mxu0 %v471
          %501 = vmatprep.subr.mxu0 0.0
          %502 = vmatpush1.msra.mxu0 %v472
          %503 = vmatprep.subr.mxu0 0.0
          %504 = vmatpush1.msra.mxu0 %v473
          %505 = vmatprep.subr.mxu0 0.0
          %506 = vmatpush1.msra.mxu0 %v474
          %507 = vmatprep.subr.mxu0 0.0
          %508 = vmatpush1.msra.mxu0 %v475
          %509 = vmatprep.subr.mxu0 0.0
          %510 = vmatpush1.msra.mxu0 0.0
          %511 = vmatprep.subr.mxu0 0.0
          %512 = vmatpush1.msra.mxu0 0.0
          %513 = vmatprep.subr.mxu0 0.0
          %514 = vmatpush1.msra.mxu0 0.0
          %515 = vmatprep.subr.mxu0 0.0
          %516 = vmatpush1.msra.mxu0 0.0
          %517 = vmatprep.subr.mxu0 0.0
          %518 = vmatpush1.msra.mxu0 0.0
          %519 = vmatprep.subr.mxu0 0.0
          %520 = vmatpush1.msra.mxu0 0.0
          %521 = vmatprep.subr.mxu0 0.0
          %522 = vmatpush1.msra.mxu0 0.0
          %523 = vmatprep.subr.mxu0 0.0
          %524 = vmatpush1.msra.mxu0 0.0
          %525 = vmatprep.subr.mxu0 0.0
          %526 = vmatpush1.msra.mxu0 0.0
          %527 = vmatprep.subr.mxu0 0.0
          %528 = vmatpush1.msra.mxu0 0.0
          %529 = vmatprep.subr.mxu0 0.0
          %530 = vmatpush1.msra.mxu0 0.0
          %531 = vmatprep.subr.mxu0 0.0
          %532 = vmatpush1.msra.mxu0 0.0
          %533 = vmatprep.subr.mxu0 0.0
          %534 = vmatpush1.msra.mxu0 0.0
          %535 = vmatprep.subr.mxu0 0.0
          %536 = vmatpush1.msra.mxu0 0.0
          %537 = vmatprep.subr.mxu0 0.0
          %538 = vmatpush1.msra.mxu0 0.0
          %539 = vmatprep.subr.mxu0 0.0
          %540 = vmatpush1.msra.mxu0 0.0
          %541 = vmatprep.mubr.f32.mxu0 0.0
          %542 = vmatmul.mubr.f32.gmra.mrb[0].mxu0 %v459
          %v543 = vpop.f32.mrb[0].mxu0
          %v544 = vadd.f32 %v476, %v543
          %v545 = vpop.f32.mrb[0].mxu0
          %546 = vdwg.mxu0
          %v547 = vxor.u32 %v544, 2147483648
          %v548 = vmul.f32 %v547, 1.442695
          %v549 = vpow.pop %v548
          %v550 = vadd.f32 %v549, 1.0
          %v551 = vrcp.pop %v550
          %v552 = vmul.f32 1.0, %v551
          %v553 = vmul.f32 %v544, %v552
          %v554 = vld [vmem:[%s4] sm:$0xff]
          %v555 = vld [vmem:[%s5] sm:$0x1]
          %vm556 = vcmask 64512
          %v558 = vsel %vm556, %v553, 0
          %560 = vmatprep.subr.mxu0 0.0
          %561 = vmatpush1.msra.mxu0 %v554
          %562 = vmatprep.subr.mxu0 0.0
          %563 = vmatpush1.msra.mxu0 0.0
          %564 = vmatprep.subr.mxu0 0.0
          %565 = vmatpush1.msra.mxu0 0.0
          %566 = vmatprep.subr.mxu0 0.0
          %567 = vmatpush1.msra.mxu0 0.0
          %568 = vmatprep.subr.mxu0 0.0
          %569 = vmatpush1.msra.mxu0 0.0
          %570 = vmatprep.subr.mxu0 0.0
          %571 = vmatpush1.msra.mxu0 0.0
          %572 = vmatprep.subr.mxu0 0.0
          %573 = vmatpush1.msra.mxu0 0.0
          %574 = vmatprep.subr.mxu0 0.0
          %575 = vmatpush1.msra.mxu0 0.0
          %576 = vmatprep.subr.mxu0 0.0
          %577 = vmatpush1.msra.mxu0 0.0
          %578 = vmatprep.subr.mxu0 0.0
          %579 = vmatpush1.msra.mxu0 0.0
          %580 = vmatprep.subr.mxu0 0.0
          %581 = vmatpush1.msra.mxu0 0.0
          %582 = vmatprep.subr.mxu0 0.0
          %583 = vmatpush1.msra.mxu0 0.0
          %584 = vmatprep.subr.mxu0 0.0
          %585 = vmatpush1.msra.mxu0 0.0
          %586 = vmatprep.subr.mxu0 0.0
          %587 = vmatpush1.msra.mxu0 0.0
          %588 = vmatprep.subr.mxu0 0.0
          %589 = vmatpush1.msra.mxu0 0.0
          %590 = vmatprep.subr.mxu0 0.0
          %591 = vmatpush1.msra.mxu0 0.0
          %592 = vmatprep.subr.mxu0 0.0
          %593 = vmatpush1.msra.mxu0 0.0
          %594 = vmatprep.subr.mxu0 0.0
          %595 = vmatpush1.msra.mxu0 0.0
          %596 = vmatprep.subr.mxu0 0.0
          %597 = vmatpush1.msra.mxu0 0.0
          %598 = vmatprep.subr.mxu0 0.0
          %599 = vmatpush1.msra.mxu0 0.0
          %600 = vmatprep.subr.mxu0 0.0
          %601 = vmatpush1.msra.mxu0 0.0
          %602 = vmatprep.subr.mxu0 0.0
          %603 = vmatpush1.msra.mxu0 0.0
          %604 = vmatprep.subr.mxu0 0.0
          %605 = vmatpush1.msra.mxu0 0.0
          %606 = vmatprep.subr.mxu0 0.0
          %607 = vmatpush1.msra.mxu0 0.0
          %608 = vmatprep.subr.mxu0 0.0
          %609 = vmatpush1.msra.mxu0 0.0
          %610 = vmatprep.subr.mxu0 0.0
          %611 = vmatpush1.msra.mxu0 0.0
          %612 = vmatprep.subr.mxu0 0.0
          %613 = vmatpush1.msra.mxu0 0.0
          %614 = vmatprep.subr.mxu0 0.0
          %615 = vmatpush1.msra.mxu0 0.0
          %616 = vmatprep.subr.mxu0 0.0
          %617 = vmatpush1.msra.mxu0 0.0
          %618 = vmatprep.subr.mxu0 0.0
          %619 = vmatpush1.msra.mxu0 0.0
          %620 = vmatprep.subr.mxu0 0.0
          %621 = vmatpush1.msra.mxu0 0.0
          %622 = vmatprep.subr.mxu0 0.0
          %623 = vmatpush1.msra.mxu0 0.0
          %624 = vmatprep.mubr.f32.mxu0 0.0
          %625 = vmatmul.mubr.f32.gmra.mrb[0].mxu0 %v558
          %v626 = vpop.f32.mrb[0].mxu0
          %v627 = vadd.f32 %v555, %v626
          %v628 = vpop.f32.mrb[0].mxu0
          %629 = vdwg.mxu0
          %v630 = vxor.u32 %v627, 2147483648
          %v631 = vmul.f32 %v630, 1.442695
          %v632 = vpow.pop %v631
          %v633 = vadd.f32 %v632, 1.0
          %v634 = vrcp.pop %v633
          %v635 = vmul.f32 1.0, %v634
          %636 = vst [vmem:[#allocation2] sm:$0x1] %v635
          %637 = vst [vmem:[#allocation3] sm:$0x1] 0.0
        $region72: #{_lambda_.7} parent=67 // pred_fallthru
          _
        %v638 = vld [vmem:[%s448] sm:$0xf]
        %v639 = vld [vmem:[%s448 + $0x4] sm:$0xf]
        %v640 = vld [vmem:[%s448 + $0x8] sm:$0xf]
        %v641 = vld [vmem:[%s448 + $0xc] sm:$0xf]
        %v642 = vld [vmem:[%s448 + $0x10] sm:$0xf]
        %v643 = vld [vmem:[%s448 + $0x14] sm:$0xf]
        %v644 = vld [vmem:[%s448 + $0x18] sm:$0xf]
        %v645 = vld [vmem:[%s448 + $0x1c] sm:$0xf]
        %v646 = vld [vmem:[#allocation2] sm:$0x1]
        %v647 = vpack.c.bf16 %v646, %v646
        %v649 = vpack.i.b16 %v647, %v647
        %v651 = vlaneseq
        %v652 = vshrl.u32 %v651, 7
        %v653 = vsub.s32 0, %v652
        %v654 = vrot.slane %v649, %v653
        %v656 = vunpack.c.l.b16 %v654
        %v657 = vpack.c.b16 %v656, %v656
        %v659 = vmul.bf16 %v638, %v657
        %v660 = vmul.bf16 %v639, %v657
        %v661 = vmul.bf16 %v640, %v657
        %v662 = vmul.bf16 %v641, %v657
        %v663 = vmul.bf16 %v642, %v657
        %v664 = vmul.bf16 %v643, %v657
        %v665 = vmul.bf16 %v644, %v657
        %v666 = vmul.bf16 %v645, %v657
        %v667 = vld [vmem:[%s6] sm:$0xf]
        %v668 = vld [vmem:[%s6 + $0x4] sm:$0xf]
        %v669 = vld [vmem:[%s6 + $0x8] sm:$0xf]
        %v670 = vld [vmem:[%s6 + $0xc] sm:$0xf]
        %v671 = vld [vmem:[%s6 + $0x10] sm:$0xf]
        %v672 = vld [vmem:[%s6 + $0x14] sm:$0xf]
        %v673 = vld [vmem:[%s6 + $0x18] sm:$0xf]
        %v674 = vld [vmem:[%s6 + $0x1c] sm:$0xf]
        %v675 = vld [vmem:[%s6 + $0x20] sm:$0xf]
        %v676 = vld [vmem:[%s6 + $0x24] sm:$0xf]
        %v677 = vld [vmem:[%s6 + $0x28] sm:$0xf]
        %v678 = vld [vmem:[%s6 + $0x2c] sm:$0xf]
        %v679 = vld [vmem:[%s6 + $0x30] sm:$0xf]
        %v680 = vld [vmem:[%s6 + $0x34] sm:$0xf]
        %v681 = vld [vmem:[%s6 + $0x38] sm:$0xf]
        %v682 = vld [vmem:[%s6 + $0x3c] sm:$0xf]
        %v683 = vld [vmem:[%s7] sm:$0x1]
        %v685 = vlaneseq
        %v686 = vshrl.u32 %v685, 7
        %v687 = vsub.s32 0, %v686
        %v688 = vrot.slane %v683, %v687
        %v698 = vunpack.c.l.b16 %v659
        %v699 = vunpack.c.l.b16 %v660
        %v700 = vunpack.c.l.b16 %v661
        %v701 = vunpack.c.l.b16 %v662
        %v702 = vunpack.c.l.b16 %v663
        %v703 = vunpack.c.l.b16 %v664
        %v704 = vunpack.c.l.b16 %v665
        %v705 = vunpack.c.l.b16 %v666
        %v706 = vpack.c.b16 %v699, %v698
        %v707 = vpack.c.b16 %v701, %v700
        %v708 = vpack.c.b16 %v703, %v702
        %v709 = vpack.c.b16 %v705, %v704
        %v730 = vunpack.c.l.b16 %v667
        %v731 = vunpack.c.l.b16 %v668
        %v732 = vunpack.c.l.b16 %v669
        %v733 = vunpack.c.l.b16 %v670
        %v734 = vunpack.c.l.b16 %v671
        %v735 = vunpack.c.l.b16 %v672
        %v736 = vunpack.c.l.b16 %v673
        %v737 = vunpack.c.l.b16 %v674
        %v738 = vunpack.c.l.b16 %v675
        %v739 = vunpack.c.l.b16 %v676
        %v740 = vunpack.c.l.b16 %v677
        %v741 = vunpack.c.l.b16 %v678
        %v742 = vunpack.c.l.b16 %v679
        %v743 = vunpack.c.l.b16 %v680
        %v744 = vunpack.c.l.b16 %v681
        %v745 = vunpack.c.l.b16 %v682
        %v746 = vpack.c.b16 %v731, %v730
        %v747 = vpack.c.b16 %v733, %v732
        %v748 = vpack.c.b16 %v735, %v734
        %v749 = vpack.c.b16 %v737, %v736
        %v750 = vpack.c.b16 %v739, %v738
        %v751 = vpack.c.b16 %v741, %v740
        %v752 = vpack.c.b16 %v743, %v742
        %v753 = vpack.c.b16 %v745, %v744
        %762 = vmatprep.subr.bf16.mxu0 0
        %763 = vmatpush1.bf16.msra.mxu0 %v746
        %764 = vmatprep.subr.bf16.mxu0 0
        %765 = vmatpush1.bf16.msra.mxu0 %v747
        %766 = vmatprep.subr.bf16.mxu0 0
        %767 = vmatpush1.bf16.msra.mxu0 %v748
        %768 = vmatprep.subr.bf16.mxu0 0
        %769 = vmatpush1.bf16.msra.mxu0 %v749
        %770 = vmatprep.subr.bf16.mxu0 0
        %771 = vmatpush1.bf16.msra.mxu0 %v750
        %772 = vmatprep.subr.bf16.mxu0 0
        %773 = vmatpush1.bf16.msra.mxu0 %v751
        %774 = vmatprep.subr.bf16.mxu0 0
        %775 = vmatpush1.bf16.msra.mxu0 %v752
        %776 = vmatprep.subr.bf16.mxu0 0
        %777 = vmatpush1.bf16.msra.mxu0 %v753
        %778 = vmatprep.subr.bf16.mxu0 0
        %779 = vmatpush1.bf16.msra.mxu0 0
        %780 = vmatprep.subr.bf16.mxu0 0
        %781 = vmatpush1.bf16.msra.mxu0 0
        %782 = vmatprep.subr.bf16.mxu0 0
        %783 = vmatpush1.bf16.msra.mxu0 0
        %784 = vmatprep.subr.bf16.mxu0 0
        %785 = vmatpush1.bf16.msra.mxu0 0
        %786 = vmatprep.subr.bf16.mxu0 0
        %787 = vmatpush1.bf16.msra.mxu0 0
        %788 = vmatprep.subr.bf16.mxu0 0
        %789 = vmatpush1.bf16.msra.mxu0 0
        %790 = vmatprep.subr.bf16.mxu0 0
        %791 = vmatpush1.bf16.msra.mxu0 0
        %792 = vmatprep.subr.bf16.mxu0 0
        %793 = vmatpush1.bf16.msra.mxu0 0
        %794 = vmatprep.mubr.bf16.mxu0 0
        %795 = vmatmul.mubr.bf16.gmra.mrb[0].mxu0 %v706
        %v796 = vpop.f32.mrb[0].mxu0
        %v797 = vadd.f32 %v688, %v796
        %v798 = vpop.f32.mrb[0].mxu0
        %v799 = vpop.f32.mrb[0].mxu0
        %v800 = vadd.f32 %v688, %v799
        %v801 = vpop.f32.mrb[0].mxu0
        %802 = vmatprep.mubr.bf16.mxu0 0
        %803 = vmatmul.mubr.bf16.gmra.mrb[0].mxu0 %v707
        %v804 = vpop.f32.mrb[0].mxu0
        %v805 = vadd.f32 %v688, %v804
        %v806 = vpop.f32.mrb[0].mxu0
        %v807 = vpop.f32.mrb[0].mxu0
        %v808 = vadd.f32 %v688, %v807
        %v809 = vpop.f32.mrb[0].mxu0
        %810 = vmatprep.mubr.bf16.mxu0 0
        %811 = vmatmul.mubr.bf16.gmra.mrb[0].mxu0 %v708
        %v812 = vpop.f32.mrb[0].mxu0
        %v813 = vadd.f32 %v688, %v812
        %v814 = vpop.f32.mrb[0].mxu0
        %v815 = vpop.f32.mrb[0].mxu0
        %v816 = vadd.f32 %v688, %v815
        %v817 = vpop.f32.mrb[0].mxu0
        %818 = vmatprep.mubr.bf16.mxu0 0
        %819 = vmatmul.mubr.bf16.gmra.mrb[0].mxu0 %v709
        %v820 = vpop.f32.mrb[0].mxu0
        %v821 = vadd.f32 %v688, %v820
        %v822 = vpop.f32.mrb[0].mxu0
        %v823 = vpop.f32.mrb[0].mxu0
        %v824 = vadd.f32 %v688, %v823
        %v825 = vpop.f32.mrb[0].mxu0
        %826 = vdwg.mxu0
        %v827 = vxor.u32 %v797, 2147483648
        %v828 = vxor.u32 %v800, 2147483648
        %v829 = vxor.u32 %v805, 2147483648
        %v830 = vxor.u32 %v808, 2147483648
        %v831 = vxor.u32 %v813, 2147483648
        %v832 = vxor.u32 %v816, 2147483648
        %v833 = vxor.u32 %v821, 2147483648
        %v834 = vxor.u32 %v824, 2147483648
        %v835 = vmul.f32 %v827, 1.442695
        %v836 = vpow.pop %v835
        %v837 = vmul.f32 %v828, 1.442695
        %v838 = vpow.pop %v837
        %v839 = vmul.f32 %v829, 1.442695
        %v840 = vpow.pop %v839
        %v841 = vmul.f32 %v830, 1.442695
        %v842 = vpow.pop %v841
        %v843 = vmul.f32 %v831, 1.442695
        %v844 = vpow.pop %v843
        %v845 = vmul.f32 %v832, 1.442695
        %v846 = vpow.pop %v845
        %v847 = vmul.f32 %v833, 1.442695
        %v848 = vpow.pop %v847
        %v849 = vmul.f32 %v834, 1.442695
        %v850 = vpow.pop %v849
        %v851 = vadd.f32 %v836, 1.0
        %v852 = vadd.f32 %v838, 1.0
        %v853 = vadd.f32 %v840, 1.0
        %v854 = vadd.f32 %v842, 1.0
        %v855 = vadd.f32 %v844, 1.0
        %v856 = vadd.f32 %v846, 1.0
        %v857 = vadd.f32 %v848, 1.0
        %v858 = vadd.f32 %v850, 1.0
        %v859 = vrcp.pop %v851
        %v860 = vmul.f32 1.0, %v859
        %v861 = vrcp.pop %v852
        %v862 = vmul.f32 1.0, %v861
        %v863 = vrcp.pop %v853
        %v864 = vmul.f32 1.0, %v863
        %v865 = vrcp.pop %v854
        %v866 = vmul.f32 1.0, %v865
        %v867 = vrcp.pop %v855
        %v868 = vmul.f32 1.0, %v867
        %v869 = vrcp.pop %v856
        %v870 = vmul.f32 1.0, %v869
        %v871 = vrcp.pop %v857
        %v872 = vmul.f32 1.0, %v871
        %v873 = vrcp.pop %v858
        %v874 = vmul.f32 1.0, %v873
        %v875 = vmul.f32 %v797, %v860
        %v876 = vmul.f32 %v800, %v862
        %v877 = vmul.f32 %v805, %v864
        %v878 = vmul.f32 %v808, %v866
        %v879 = vmul.f32 %v813, %v868
        %v880 = vmul.f32 %v816, %v870
        %v881 = vmul.f32 %v821, %v872
        %v882 = vmul.f32 %v824, %v874
        %v883 = vld [vmem:[#allocation3] sm:$0x1]
        %v884 = vadd.f32 %v875, %v876
        %v885 = vadd.f32 %v884, %v877
        %v886 = vadd.f32 %v885, %v878
        %v887 = vadd.f32 %v886, %v879
        %v888 = vadd.f32 %v887, %v880
        %v889 = vadd.f32 %v888, %v881
        %v890 = vadd.f32 %v889, %v882
        %v891 = vrot.slane %v890, 4
        %v892 = vadd.f32 %v890, %v891
        %v893 = vrot.slane %v892, 2
        %v894 = vadd.f32 %v892, %v893
        %v895 = vrot.slane %v894, 1
        %v896 = vadd.f32 %v894, %v895
        %v897 = vadd.f32 %v883, %v896
        %898 = vst [vmem:[#allocation3] sm:$0x1] %v897
        // Predicated region
        $region73: #{_lambda_.7} parent=67 // pred_check
          %p899 = pneg %p454
        $region74: #{_lambda_.7} parent=67 // pred_check_branch
          %901 = sbr.rel (%p899) target = $region76
        $region75: #{_lambda_.7} parent=67 // pred_region
          %v902 = vld [vmem:[#allocation3] sm:$0x1]
          %v903 = vmul.f32 %v902, 0.015625
          %v904 = vpack.c.bf16 %v903, %v903
          %v905 = vld [vmem:[%s8] sm:$0xff]
          %v906 = vld [vmem:[%s8 + $0x8] sm:$0xff]
          %v907 = vld [vmem:[%s8 + $0x10] sm:$0xff]
          %v908 = vld [vmem:[%s8 + $0x18] sm:$0xff]
          %v909 = vld [vmem:[%s8 + $0x20] sm:$0xff]
          %v910 = vld [vmem:[%s8 + $0x28] sm:$0xff]
          %v911 = vld [vmem:[%s8 + $0x30] sm:$0xff]
          %v912 = vld [vmem:[%s8 + $0x38] sm:$0xff]
          %v913 = vld [vmem:[%s8 + $0x40] sm:$0xff]
          %v914 = vld [vmem:[%s8 + $0x48] sm:$0xff]
          %v915 = vld [vmem:[%s8 + $0x50] sm:$0xff]
          %v916 = vld [vmem:[%s8 + $0x58] sm:$0xff]
          %v917 = vld [vmem:[%s8 + $0x60] sm:$0xff]
          %v918 = vld [vmem:[%s8 + $0x68] sm:$0xff]
          %v919 = vld [vmem:[%s8 + $0x70] sm:$0xff]
          %v920 = vld [vmem:[%s8 + $0x78] sm:$0xff]
          %v921 = vld [vmem:[%s8 + $0x80] sm:$0xff]
          %v922 = vld [vmem:[%s8 + $0x88] sm:$0xff]
          %v923 = vld [vmem:[%s8 + $0x90] sm:$0xff]
          %v924 = vld [vmem:[%s8 + $0x98] sm:$0xff]
          %v925 = vld [vmem:[%s8 + $0xa0] sm:$0xff]
          %v926 = vld [vmem:[%s8 + $0xa8] sm:$0xff]
          %v927 = vld [vmem:[%s8 + $0xb0] sm:$0xff]
          %v928 = vld [vmem:[%s8 + $0xb8] sm:$0xff]
          %v929 = vld [vmem:[%s8 + $0xc0] sm:$0xff]
          %v930 = vld [vmem:[%s8 + $0xc8] sm:$0xff]
          %v931 = vld [vmem:[%s8 + $0xd0] sm:$0xff]
          %v932 = vld [vmem:[%s8 + $0xd8] sm:$0xff]
          %v933 = vld [vmem:[%s8 + $0xe0] sm:$0xff]
          %v934 = vld [vmem:[%s8 + $0xe8] sm:$0xff]
          %v935 = vld [vmem:[%s8 + $0xf0] sm:$0xff]
          %v936 = vld [vmem:[%s8 + $0xf8] sm:$0xff]
          %v937 = vld [vmem:[%s9] sm:$0xf]
          %v970 = vunpack.c.l.b16 %v905
          %v971 = vunpack.c.h.b16 %v905
          %v972 = vunpack.c.l.b16 %v906
          %v973 = vunpack.c.h.b16 %v906
          %v974 = vunpack.c.l.b16 %v907
          %v975 = vunpack.c.h.b16 %v907
          %v976 = vunpack.c.l.b16 %v908
          %v977 = vunpack.c.h.b16 %v908
          %v978 = vunpack.c.l.b16 %v909
          %v979 = vunpack.c.h.b16 %v909
          %v980 = vunpack.c.l.b16 %v910
          %v981 = vunpack.c.h.b16 %v910
          %v982 = vunpack.c.l.b16 %v911
          %v983 = vunpack.c.h.b16 %v911
          %v984 = vunpack.c.l.b16 %v912
          %v985 = vunpack.c.h.b16 %v912
          %v986 = vunpack.c.l.b16 %v913
          %v987 = vunpack.c.h.b16 %v913
          %v988 = vunpack.c.l.b16 %v914
          %v989 = vunpack.c.h.b16 %v914
          %v990 = vunpack.c.l.b16 %v915
          %v991 = vunpack.c.h.b16 %v915
          %v992 = vunpack.c.l.b16 %v916
          %v993 = vunpack.c.h.b16 %v916
          %v994 = vunpack.c.l.b16 %v917
          %v995 = vunpack.c.h.b16 %v917
          %v996 = vunpack.c.l.b16 %v918
          %v997 = vunpack.c.h.b16 %v918
          %v998 = vunpack.c.l.b16 %v919
          %v999 = vunpack.c.h.b16 %v919
          %v1000 = vunpack.c.l.b16 %v920
          %v1001 = vunpack.c.h.b16 %v920
          %v1002 = vunpack.c.l.b16 %v921
          %v1003 = vunpack.c.h.b16 %v921
          %v1004 = vunpack.c.l.b16 %v922
          %v1005 = vunpack.c.h.b16 %v922
          %v1006 = vunpack.c.l.b16 %v923
          %v1007 = vunpack.c.h.b16 %v923
          %v1008 = vunpack.c.l.b16 %v924
          %v1009 = vunpack.c.h.b16 %v924
          %v1010 = vunpack.c.l.b16 %v925
          %v1011 = vunpack.c.h.b16 %v925
          %v1012 = vunpack.c.l.b16 %v926
          %v1013 = vunpack.c.h.b16 %v926
          %v1014 = vunpack.c.l.b16 %v927
          %v1015 = vunpack.c.h.b16 %v927
          %v1016 = vunpack.c.l.b16 %v928
          %v1017 = vunpack.c.h.b16 %v928
          %v1018 = vunpack.c.l.b16 %v929
          %v1019 = vunpack.c.h.b16 %v929
          %v1020 = vunpack.c.l.b16 %v930
          %v1021 = vunpack.c.h.b16 %v930
          %v1022 = vunpack.c.l.b16 %v931
          %v1023 = vunpack.c.h.b16 %v931
          %v1024 = vunpack.c.l.b16 %v932
          %v1025 = vunpack.c.h.b16 %v932
          %v1026 = vunpack.c.l.b16 %v933
          %v1027 = vunpack.c.h.b16 %v933
          %v1028 = vunpack.c.l.b16 %v934
          %v1029 = vunpack.c.h.b16 %v934
          %v1030 = vunpack.c.l.b16 %v935
          %v1031 = vunpack.c.h.b16 %v935
          %v1032 = vunpack.c.l.b16 %v936
          %v1033 = vunpack.c.h.b16 %v936
          %v1034 = vpack.c.b16 %v974, %v970
          %v1035 = vpack.c.b16 %v975, %v971
          %v1036 = vpack.c.b16 %v976, %v972
          %v1037 = vpack.c.b16 %v977, %v973
          %v1038 = vpack.c.b16 %v982, %v978
          %v1039 = vpack.c.b16 %v983, %v979
          %v1040 = vpack.c.b16 %v984, %v980
          %v1041 = vpack.c.b16 %v985, %v981
          %v1042 = vpack.c.b16 %v990, %v986
          %v1043 = vpack.c.b16 %v991, %v987
          %v1044 = vpack.c.b16 %v992, %v988
          %v1045 = vpack.c.b16 %v993, %v989
          %v1046 = vpack.c.b16 %v998, %v994
          %v1047 = vpack.c.b16 %v999, %v995
          %v1048 = vpack.c.b16 %v1000, %v996
          %v1049 = vpack.c.b16 %v1001, %v997
          %v1050 = vpack.c.b16 %v1006, %v1002
          %v1051 = vpack.c.b16 %v1007, %v1003
          %v1052 = vpack.c.b16 %v1008, %v1004
          %v1053 = vpack.c.b16 %v1009, %v1005
          %v1054 = vpack.c.b16 %v1014, %v1010
          %v1055 = vpack.c.b16 %v1015, %v1011
          %v1056 = vpack.c.b16 %v1016, %v1012
          %v1057 = vpack.c.b16 %v1017, %v1013
          %v1058 = vpack.c.b16 %v1022, %v1018
          %v1059 = vpack.c.b16 %v1023, %v1019
          %v1060 = vpack.c.b16 %v1024, %v1020
          %v1061 = vpack.c.b16 %v1025, %v1021
          %v1062 = vpack.c.b16 %v1030, %v1026
          %v1063 = vpack.c.b16 %v1031, %v1027
          %v1064 = vpack.c.b16 %v1032, %v1028
          %v1065 = vpack.c.b16 %v1033, %v1029
          %v1099 = vlaneseq
          %v1100 = vshrl.u32 %v1099, 7
          %v1101 = vsub.s32 0, %v1100
          %v1102 = vrot.slane %v937, %v1101
          %v1103 = vlaneseq
          %v1104 = vshrl.u32 %v1103, 7
          %v1105 = vsub.s32 1, %v1104
          %v1106 = vrot.slane %v937, %v1105
          %v1107 = vlaneseq
          %v1108 = vshrl.u32 %v1107, 7
          %v1109 = vsub.s32 2, %v1108
          %v1110 = vrot.slane %v937, %v1109
          %v1111 = vlaneseq
          %v1112 = vshrl.u32 %v1111, 7
          %v1113 = vsub.s32 3, %v1112
          %v1114 = vrot.slane %v937, %v1113
          %1119 = vmatprep.subr.bf16.mxu0 %v1035
          %1120 = vmatpush1.bf16.msra.mxu0 %v1034
          %1121 = vmatprep.subr.bf16.mxu0 %v1039
          %1122 = vmatpush1.bf16.msra.mxu0 %v1038
          %1123 = vmatprep.subr.bf16.mxu0 %v1043
          %1124 = vmatpush1.bf16.msra.mxu0 %v1042
          %1125 = vmatprep.subr.bf16.mxu0 %v1047
          %1126 = vmatpush1.bf16.msra.mxu0 %v1046
          %1127 = vmatprep.subr.bf16.mxu0 %v1051
          %1128 = vmatpush1.bf16.msra.mxu0 %v1050
          %1129 = vmatprep.subr.bf16.mxu0 %v1055
          %1130 = vmatpush1.bf16.msra.mxu0 %v1054
          %1131 = vmatprep.subr.bf16.mxu0 %v1059
          %1132 = vmatpush1.bf16.msra.mxu0 %v1058
          %1133 = vmatprep.subr.bf16.mxu0 %v1063
          %1134 = vmatpush1.bf16.msra.mxu0 %v1062
          %1135 = vmatprep.subr.bf16.mxu0 0
          %1136 = vmatpush1.bf16.msra.mxu0 0
          %1137 = vmatprep.subr.bf16.mxu0 0
          %1138 = vmatpush1.bf16.msra.mxu0 0
          %1139 = vmatprep.subr.bf16.mxu0 0
          %1140 = vmatpush1.bf16.msra.mxu0 0
          %1141 = vmatprep.subr.bf16.mxu0 0
          %1142 = vmatpush1.bf16.msra.mxu0 0
          %1143 = vmatprep.subr.bf16.mxu0 0
          %1144 = vmatpush1.bf16.msra.mxu0 0
          %1145 = vmatprep.subr.bf16.mxu0 0
          %1146 = vmatpush1.bf16.msra.mxu0 0
          %1147 = vmatprep.subr.bf16.mxu0 0
          %1148 = vmatpush1.bf16.msra.mxu0 0
          %1149 = vmatprep.subr.bf16.mxu0 0
          %1150 = vmatpush1.bf16.msra.mxu0 0
          %1151 = vmatprep.mubr.bf16.mxu0 0
          %1152 = vmatmul.mubr.bf16.gmra.mrb[0].mxu0 %v904
          %v1153 = vpop.f32.mrb[0].mxu0
          %v1154 = vadd.f32 %v1102, %v1153
          %v1155 = vpop.f32.mrb[0].mxu0
          %v1156 = vadd.f32 %v1106, %v1155
          %v1157 = vpop.f32.mrb[0].mxu0
          %v1158 = vpop.f32.mrb[0].mxu0
          %1159 = vdwg.mxu0
          %1160 = vmatprep.subr.bf16.mxu0 %v1037
          %1161 = vmatpush1.bf16.msra.mxu0 %v1036
          %1162 = vmatprep.subr.bf16.mxu0 %v1041
          %1163 = vmatpush1.bf16.msra.mxu0 %v1040
          %1164 = vmatprep.subr.bf16.mxu0 %v1045
          %1165 = vmatpush1.bf16.msra.mxu0 %v1044
          %1166 = vmatprep.subr.bf16.mxu0 %v1049
          %1167 = vmatpush1.bf16.msra.mxu0 %v1048
          %1168 = vmatprep.subr.bf16.mxu0 %v1053
          %1169 = vmatpush1.bf16.msra.mxu0 %v1052
          %1170 = vmatprep.subr.bf16.mxu0 %v1057
          %1171 = vmatpush1.bf16.msra.mxu0 %v1056
          %1172 = vmatprep.subr.bf16.mxu0 %v1061
          %1173 = vmatpush1.bf16.msra.mxu0 %v1060
          %1174 = vmatprep.subr.bf16.mxu0 %v1065
          %1175 = vmatpush1.bf16.msra.mxu0 %v1064
          %1176 = vmatprep.subr.bf16.mxu0 0
          %1177 = vmatpush1.bf16.msra.mxu0 0
          %1178 = vmatprep.subr.bf16.mxu0 0
          %1179 = vmatpush1.bf16.msra.mxu0 0
          %1180 = vmatprep.subr.bf16.mxu0 0
          %1181 = vmatpush1.bf16.msra.mxu0 0
          %1182 = vmatprep.subr.bf16.mxu0 0
          %1183 = vmatpush1.bf16.msra.mxu0 0
          %1184 = vmatprep.subr.bf16.mxu0 0
          %1185 = vmatpush1.bf16.msra.mxu0 0
          %1186 = vmatprep.subr.bf16.mxu0 0
          %1187 = vmatpush1.bf16.msra.mxu0 0
          %1188 = vmatprep.subr.bf16.mxu0 0
          %1189 = vmatpush1.bf16.msra.mxu0 0
          %1190 = vmatprep.subr.bf16.mxu0 0
          %1191 = vmatpush1.bf16.msra.mxu0 0
          %1192 = vmatprep.mubr.bf16.mxu0 0
          %1193 = vmatmul.mubr.bf16.gmra.mrb[0].mxu0 %v904
          %v1194 = vpop.f32.mrb[0].mxu0
          %v1195 = vadd.f32 %v1110, %v1194
          %v1196 = vpop.f32.mrb[0].mxu0
          %v1197 = vadd.f32 %v1114, %v1196
          %v1198 = vpop.f32.mrb[0].mxu0
          %v1199 = vpop.f32.mrb[0].mxu0
          %1200 = vdwg.mxu0
          %v1201 = vmax.f32 %v1154, 0.0
          %v1202 = vmax.f32 %v1156, 0.0
          %v1203 = vmax.f32 %v1195, 0.0
          %v1204 = vmax.f32 %v1197, 0.0
          %v1205 = vpack.c.bf16 %v1201, %v1201
          %v1206 = vpack.c.bf16 %v1202, %v1202
          %v1207 = vpack.c.bf16 %v1203, %v1203
          %v1208 = vpack.c.bf16 %v1204, %v1204
          %v1209 = vld [vmem:[%s10] sm:$0xf]
          %v1210 = vld [vmem:[%s10 + $0x4] sm:$0xf]
          %v1211 = vld [vmem:[%s10 + $0x8] sm:$0xf]
          %v1212 = vld [vmem:[%s10 + $0xc] sm:$0xf]
          %v1213 = vld [vmem:[%s10 + $0x10] sm:$0xf]
          %v1214 = vld [vmem:[%s10 + $0x14] sm:$0xf]
          %v1215 = vld [vmem:[%s10 + $0x18] sm:$0xf]
          %v1216 = vld [vmem:[%s10 + $0x1c] sm:$0xf]
          %v1217 = vld [vmem:[%s10 + $0x20] sm:$0xf]
          %v1218 = vld [vmem:[%s10 + $0x24] sm:$0xf]
          %v1219 = vld [vmem:[%s10 + $0x28] sm:$0xf]
          %v1220 = vld [vmem:[%s10 + $0x2c] sm:$0xf]
          %v1221 = vld [vmem:[%s10 + $0x30] sm:$0xf]
          %v1222 = vld [vmem:[%s10 + $0x34] sm:$0xf]
          %v1223 = vld [vmem:[%s10 + $0x38] sm:$0xf]
          %v1224 = vld [vmem:[%s10 + $0x3c] sm:$0xf]
          %v1225 = vld [vmem:[%s10 + $0x40] sm:$0xf]
          %v1226 = vld [vmem:[%s10 + $0x44] sm:$0xf]
          %v1227 = vld [vmem:[%s10 + $0x48] sm:$0xf]
          %v1228 = vld [vmem:[%s10 + $0x4c] sm:$0xf]
          %v1229 = vld [vmem:[%s10 + $0x50] sm:$0xf]
          %v1230 = vld [vmem:[%s10 + $0x54] sm:$0xf]
          %v1231 = vld [vmem:[%s10 + $0x58] sm:$0xf]
          %v1232 = vld [vmem:[%s10 + $0x5c] sm:$0xf]
          %v1233 = vld [vmem:[%s10 + $0x60] sm:$0xf]
          %v1234 = vld [vmem:[%s10 + $0x64] sm:$0xf]
          %v1235 = vld [vmem:[%s10 + $0x68] sm:$0xf]
          %v1236 = vld [vmem:[%s10 + $0x6c] sm:$0xf]
          %v1237 = vld [vmem:[%s10 + $0x70] sm:$0xf]
          %v1238 = vld [vmem:[%s10 + $0x74] sm:$0xf]
          %v1239 = vld [vmem:[%s10 + $0x78] sm:$0xf]
          %v1240 = vld [vmem:[%s10 + $0x7c] sm:$0xf]
          %v1241 = vld [vmem:[%s10 + $0x80] sm:$0xf]
          %v1242 = vld [vmem:[%s10 + $0x84] sm:$0xf]
          %v1243 = vld [vmem:[%s10 + $0x88] sm:$0xf]
          %v1244 = vld [vmem:[%s10 + $0x8c] sm:$0xf]
          %v1245 = vld [vmem:[%s10 + $0x90] sm:$0xf]
          %v1246 = vld [vmem:[%s10 + $0x94] sm:$0xf]
          %v1247 = vld [vmem:[%s10 + $0x98] sm:$0xf]
          %v1248 = vld [vmem:[%s10 + $0x9c] sm:$0xf]
          %v1249 = vld [vmem:[%s10 + $0xa0] sm:$0xf]
          %v1250 = vld [vmem:[%s10 + $0xa4] sm:$0xf]
          %v1251 = vld [vmem:[%s10 + $0xa8] sm:$0xf]
          %v1252 = vld [vmem:[%s10 + $0xac] sm:$0xf]
          %v1253 = vld [vmem:[%s10 + $0xb0] sm:$0xf]
          %v1254 = vld [vmem:[%s10 + $0xb4] sm:$0xf]
          %v1255 = vld [vmem:[%s10 + $0xb8] sm:$0xf]
          %v1256 = vld [vmem:[%s10 + $0xbc] sm:$0xf]
          %v1257 = vld [vmem:[%s10 + $0xc0] sm:$0xf]
          %v1258 = vld [vmem:[%s10 + $0xc4] sm:$0xf]
          %v1259 = vld [vmem:[%s10 + $0xc8] sm:$0xf]
          %v1260 = vld [vmem:[%s10 + $0xcc] sm:$0xf]
          %v1261 = vld [vmem:[%s10 + $0xd0] sm:$0xf]
          %v1262 = vld [vmem:[%s10 + $0xd4] sm:$0xf]
          %v1263 = vld [vmem:[%s10 + $0xd8] sm:$0xf]
          %v1264 = vld [vmem:[%s10 + $0xdc] sm:$0xf]
          %v1265 = vld [vmem:[%s10 + $0xe0] sm:$0xf]
          %v1266 = vld [vmem:[%s10 + $0xe4] sm:$0xf]
          %v1267 = vld [vmem:[%s10 + $0xe8] sm:$0xf]
          %v1268 = vld [vmem:[%s10 + $0xec] sm:$0xf]
          %v1269 = vld [vmem:[%s10 + $0xf0] sm:$0xf]
          %v1270 = vld [vmem:[%s10 + $0xf4] sm:$0xf]
          %v1271 = vld [vmem:[%s10 + $0xf8] sm:$0xf]
          %v1272 = vld [vmem:[%s10 + $0xfc] sm:$0xf]
          %v1273 = vld [vmem:[%s11] sm:$0x1]
          %v1338 = vunpack.c.l.b16 %v1209
          %v1339 = vunpack.c.l.b16 %v1210
          %v1340 = vunpack.c.l.b16 %v1211
          %v1341 = vunpack.c.l.b16 %v1212
          %v1342 = vunpack.c.l.b16 %v1213
          %v1343 = vunpack.c.l.b16 %v1214
          %v1344 = vunpack.c.l.b16 %v1215
          %v1345 = vunpack.c.l.b16 %v1216
          %v1346 = vunpack.c.l.b16 %v1217
          %v1347 = vunpack.c.l.b16 %v1218
          %v1348 = vunpack.c.l.b16 %v1219
          %v1349 = vunpack.c.l.b16 %v1220
          %v1350 = vunpack.c.l.b16 %v1221
          %v1351 = vunpack.c.l.b16 %v1222
          %v1352 = vunpack.c.l.b16 %v1223
          %v1353 = vunpack.c.l.b16 %v1224
          %v1354 = vunpack.c.l.b16 %v1225
          %v1355 = vunpack.c.l.b16 %v1226
          %v1356 = vunpack.c.l.b16 %v1227
          %v1357 = vunpack.c.l.b16 %v1228
          %v1358 = vunpack.c.l.b16 %v1229
          %v1359 = vunpack.c.l.b16 %v1230
          %v1360 = vunpack.c.l.b16 %v1231
          %v1361 = vunpack.c.l.b16 %v1232
          %v1362 = vunpack.c.l.b16 %v1233
          %v1363 = vunpack.c.l.b16 %v1234
          %v1364 = vunpack.c.l.b16 %v1235
          %v1365 = vunpack.c.l.b16 %v1236
          %v1366 = vunpack.c.l.b16 %v1237
          %v1367 = vunpack.c.l.b16 %v1238
          %v1368 = vunpack.c.l.b16 %v1239
          %v1369 = vunpack.c.l.b16 %v1240
          %v1370 = vunpack.c.l.b16 %v1241
          %v1371 = vunpack.c.l.b16 %v1242
          %v1372 = vunpack.c.l.b16 %v1243
          %v1373 = vunpack.c.l.b16 %v1244
          %v1374 = vunpack.c.l.b16 %v1245
          %v1375 = vunpack.c.l.b16 %v1246
          %v1376 = vunpack.c.l.b16 %v1247
          %v1377 = vunpack.c.l.b16 %v1248
          %v1378 = vunpack.c.l.b16 %v1249
          %v1379 = vunpack.c.l.b16 %v1250
          %v1380 = vunpack.c.l.b16 %v1251
          %v1381 = vunpack.c.l.b16 %v1252
          %v1382 = vunpack.c.l.b16 %v1253
          %v1383 = vunpack.c.l.b16 %v1254
          %v1384 = vunpack.c.l.b16 %v1255
          %v1385 = vunpack.c.l.b16 %v1256
          %v1386 = vunpack.c.l.b16 %v1257
          %v1387 = vunpack.c.l.b16 %v1258
          %v1388 = vunpack.c.l.b16 %v1259
          %v1389 = vunpack.c.l.b16 %v1260
          %v1390 = vunpack.c.l.b16 %v1261
          %v1391 = vunpack.c.l.b16 %v1262
          %v1392 = vunpack.c.l.b16 %v1263
          %v1393 = vunpack.c.l.b16 %v1264
          %v1394 = vunpack.c.l.b16 %v1265
          %v1395 = vunpack.c.l.b16 %v1266
          %v1396 = vunpack.c.l.b16 %v1267
          %v1397 = vunpack.c.l.b16 %v1268
          %v1398 = vunpack.c.l.b16 %v1269
          %v1399 = vunpack.c.l.b16 %v1270
          %v1400 = vunpack.c.l.b16 %v1271
          %v1401 = vunpack.c.l.b16 %v1272
          %v1402 = vpack.c.b16 %v1339, %v1338
          %v1403 = vpack.c.b16 %v1341, %v1340
          %v1404 = vpack.c.b16 %v1343, %v1342
          %v1405 = vpack.c.b16 %v1345, %v1344
          %v1406 = vpack.c.b16 %v1347, %v1346
          %v1407 = vpack.c.b16 %v1349, %v1348
          %v1408 = vpack.c.b16 %v1351, %v1350
          %v1409 = vpack.c.b16 %v1353, %v1352
          %v1410 = vpack.c.b16 %v1355, %v1354
          %v1411 = vpack.c.b16 %v1357, %v1356
          %v1412 = vpack.c.b16 %v1359, %v1358
          %v1413 = vpack.c.b16 %v1361, %v1360
          %v1414 = vpack.c.b16 %v1363, %v1362
          %v1415 = vpack.c.b16 %v1365, %v1364
          %v1416 = vpack.c.b16 %v1367, %v1366
          %v1417 = vpack.c.b16 %v1369, %v1368
          %v1418 = vpack.c.b16 %v1371, %v1370
          %v1419 = vpack.c.b16 %v1373, %v1372
          %v1420 = vpack.c.b16 %v1375, %v1374
          %v1421 = vpack.c.b16 %v1377, %v1376
          %v1422 = vpack.c.b16 %v1379, %v1378
          %v1423 = vpack.c.b16 %v1381, %v1380
          %v1424 = vpack.c.b16 %v1383, %v1382
          %v1425 = vpack.c.b16 %v1385, %v1384
          %v1426 = vpack.c.b16 %v1387, %v1386
          %v1427 = vpack.c.b16 %v1389, %v1388
          %v1428 = vpack.c.b16 %v1391, %v1390
          %v1429 = vpack.c.b16 %v1393, %v1392
          %v1430 = vpack.c.b16 %v1395, %v1394
          %v1431 = vpack.c.b16 %v1397, %v1396
          %v1432 = vpack.c.b16 %v1399, %v1398
          %v1433 = vpack.c.b16 %v1401, %v1400
          %1466 = vmatprep.subr.bf16.mxu0 0
          %1467 = vmatpush1.bf16.msra.mxu0 %v1402
          %1468 = vmatprep.subr.bf16.mxu0 0
          %1469 = vmatpush1.bf16.msra.mxu0 %v1403
          %1470 = vmatprep.subr.bf16.mxu0 0
          %1471 = vmatpush1.bf16.msra.mxu0 %v1404
          %1472 = vmatprep.subr.bf16.mxu0 0
          %1473 = vmatpush1.bf16.msra.mxu0 %v1405
          %1474 = vmatprep.subr.bf16.mxu0 0
          %1475 = vmatpush1.bf16.msra.mxu0 %v1406
          %1476 = vmatprep.subr.bf16.mxu0 0
          %1477 = vmatpush1.bf16.msra.mxu0 %v1407
          %1478 = vmatprep.subr.bf16.mxu0 0
          %1479 = vmatpush1.bf16.msra.mxu0 %v1408
          %1480 = vmatprep.subr.bf16.mxu0 0
          %1481 = vmatpush1.bf16.msra.mxu0 %v1409
          %1482 = vmatprep.subr.bf16.mxu0 0
          %1483 = vmatpush1.bf16.msra.mxu0 %v1410
          %1484 = vmatprep.subr.bf16.mxu0 0
          %1485 = vmatpush1.bf16.msra.mxu0 %v1411
          %1486 = vmatprep.subr.bf16.mxu0 0
          %1487 = vmatpush1.bf16.msra.mxu0 %v1412
          %1488 = vmatprep.subr.bf16.mxu0 0
          %1489 = vmatpush1.bf16.msra.mxu0 %v1413
          %1490 = vmatprep.subr.bf16.mxu0 0
          %1491 = vmatpush1.bf16.msra.mxu0 %v1414
          %1492 = vmatprep.subr.bf16.mxu0 0
          %1493 = vmatpush1.bf16.msra.mxu0 %v1415
          %1494 = vmatprep.subr.bf16.mxu0 0
          %1495 = vmatpush1.bf16.msra.mxu0 %v1416
          %1496 = vmatprep.subr.bf16.mxu0 0
          %1497 = vmatpush1.bf16.msra.mxu0 %v1417
          %1498 = vmatprep.mubr.bf16.mxu0 %v1206
          %1499 = vmatmul.mubr.bf16.gmra.mrb[0].mxu0 %v1205
          %v1500 = vpop.f32.mrb[0].mxu0
          %v1501 = vadd.f32 %v1273, %v1500
          %v1502 = vpop.f32.mrb[0].mxu0
          %v1503 = vpop.f32.mrb[0].mxu0
          %v1504 = vpop.f32.mrb[0].mxu0
          %1505 = vdwg.mxu0
          %1506 = vmatprep.subr.bf16.mxu0 0
          %1507 = vmatpush1.bf16.msra.mxu0 %v1418
          %1508 = vmatprep.subr.bf16.mxu0 0
          %1509 = vmatpush1.bf16.msra.mxu0 %v1419
          %1510 = vmatprep.subr.bf16.mxu0 0
          %1511 = vmatpush1.bf16.msra.mxu0 %v1420
          %1512 = vmatprep.subr.bf16.mxu0 0
          %1513 = vmatpush1.bf16.msra.mxu0 %v1421
          %1514 = vmatprep.subr.bf16.mxu0 0
          %1515 = vmatpush1.bf16.msra.mxu0 %v1422
          %1516 = vmatprep.subr.bf16.mxu0 0
          %1517 = vmatpush1.bf16.msra.mxu0 %v1423
          %1518 = vmatprep.subr.bf16.mxu0 0
          %1519 = vmatpush1.bf16.msra.mxu0 %v1424
          %1520 = vmatprep.subr.bf16.mxu0 0
          %1521 = vmatpush1.bf16.msra.mxu0 %v1425
          %1522 = vmatprep.subr.bf16.mxu0 0
          %1523 = vmatpush1.bf16.msra.mxu0 %v1426
          %1524 = vmatprep.subr.bf16.mxu0 0
          %1525 = vmatpush1.bf16.msra.mxu0 %v1427
          %1526 = vmatprep.subr.bf16.mxu0 0
          %1527 = vmatpush1.bf16.msra.mxu0 %v1428
          %1528 = vmatprep.subr.bf16.mxu0 0
          %1529 = vmatpush1.bf16.msra.mxu0 %v1429
          %1530 = vmatprep.subr.bf16.mxu0 0
          %1531 = vmatpush1.bf16.msra.mxu0 %v1430
          %1532 = vmatprep.subr.bf16.mxu0 0
          %1533 = vmatpush1.bf16.msra.mxu0 %v1431
          %1534 = vmatprep.subr.bf16.mxu0 0
          %1535 = vmatpush1.bf16.msra.mxu0 %v1432
          %1536 = vmatprep.subr.bf16.mxu0 0
          %1537 = vmatpush1.bf16.msra.mxu0 %v1433
          %1538 = vmatprep.mubr.bf16.mxu0 %v1208
          %1539 = vmatmul.mubr.bf16.gmra.mrb[0].mxu0 %v1207
          %v1540 = vpop.f32.mrb[0].mxu0
          %v1541 = vadd.f32 %v1501, %v1540
          %v1542 = vpop.f32.mrb[0].mxu0
          %v1543 = vpop.f32.mrb[0].mxu0
          %v1544 = vpop.f32.mrb[0].mxu0
          %1545 = vdwg.mxu0
          %1546 = vst [vmem:[%s439] sm:$0x1] %v1541
        $region76: #{_lambda_.7} parent=67 // pred_fallthru
          _
        %s1547 = sand.u32 %s310, 1
        %s1548 = scalar_lea.sflag [#allocation5], %s1547
        %s1549 = sand.u32 %s310, 1
        %s1550 = scalar_lea.vmem [#allocation4], %s1549
        // Predicated region
        $region77: #{_lambda_.7} parent=67 // pred_check
          %p1551 = pneg %p320
        $region78: #{_lambda_.7} parent=67 // pred_check_branch
          %1553 = sbr.rel (%p1551) target = $region80
        $region79: #{_lambda_.7} parent=67 // pred_region
          %s1555 = ssub.s32 16, 16
          %1556 = vsyncadd %s1548, %s1555
          %s1557 = smul.addr %s30, 16
          %s1558 = scalar_lea.hbm %s12, %s1557
          %s1560 = sshll.u32 %s1550, 4
          %s1561 = int_to_ptr.vmem [resolvable:$true] %s1560
          %1563 = dma.vmem_to_hbm [thread:$0]  %s1561, 16, %s1558, %s1548
        $region80: #{_lambda_.7} parent=67 // pred_fallthru
          _
      $region68: #{_lambda_.7} parent=5 // pred_fallthru
        _
      %p1564 = scmp.le.s32.totalorder 2, %s21
      // Predicated region
      $region81: #{_lambda_.7} parent=5 // pred_check
        %p1565 = pneg %p1564
      $region82: #{_lambda_.7} parent=5 // pred_check_branch
        %1567 = sbr.rel (%p1565) target = $region84
      $region83: #{_lambda_.7} parent=5 // pred_region
        %s1568 = ssub.s32 %s21, 2
        // Predicated region
        $region85: #{_lambda_.7} parent=83 // pred_check
          %p1569 = pneg %p326
        $region86: #{_lambda_.7} parent=83 // pred_check_branch
          %1571 = sbr.rel (%p1569) target = $region88
        $region87: #{_lambda_.7} parent=83 // pred_region
          %s1572 = sand.u32 %s311, 1
          %s1573 = scalar_lea.sflag [#allocation5], %s1572
          %s1574 = sand.u32 %s311, 1
          %s1575 = scalar_lea.vmem [#allocation4], %s1574
          %1576 = dma.done %s1573, 16
        $region88: #{_lambda_.7} parent=83 // pred_fallthru
          _
      $region84: #{_lambda_.7} parent=5 // pred_fallthru
        _
    $region6: #{_lambda_.7} parent=1 // loop_footer
      %s25 = sadd.s32 1, %s21
    $region7: #{_lambda_.7} parent=1 // loop_footer_branch
      %20 = sbr.rel target = $region3
    $region8: #{_lambda_.7} parent=1 // loop_exit
      _
    %1577 = vsyncpa [#allocation5], 1
    %s1578 = scalar_lea.sflag [#allocation5], 1
    %1579 = vsyncpa %s1578, 1

</llo_original>
